<compile_context>
chip_gen: v7x
topology: tpu7x:2x2x1
jax: 0.10.0
libtpu: 0.0.40
codegen_flags: <defaults>
</compile_context>

<pallas_src>
import functools

import jax
import jax.numpy as jnp
import numpy as np
from jax.experimental import pallas as pl
from jax.experimental.pallas import tpu as pltpu


def _resblock_kernel(*refs, coarsen, shortcut, Nb, H, W, Hd, Wd, Cin, Cn, Cout,
                     mx_dtype):
    it = iter(refs)
    x_ref = next(it)
    w1_ref, s1_ref, o1_ref = next(it), next(it), next(it)
    w2_ref, s2_ref, o2_ref = next(it), next(it), next(it)
    w3_ref, s3_ref, o3_ref = next(it), next(it), next(it)
    if shortcut:
        ws_ref, ss_ref, os_ref = next(it), next(it), next(it)
    out_ref = next(it)

    Sd = Hd * Wd

    xv = x_ref[...].astype(jnp.float32)                 # (Nb, H, W, Cin), f32 math

    if coarsen:
        # bilinear 0.5x == 2x2 average pool (even H, W asserted in wrapper).
        # H pairs: pure major-axis regrouping (free), W pairs: lane-preserving
        # sublane-pair split.  3 VPU adds + 1 scale, no matmul, no big constant.
        xr = xv.reshape(Nb * Hd, 2, W, Cin)             # regroup majors only
        xh = xr[:, 0] + xr[:, 1]                        # pool along H -> (Nb*Hd, W, Cin)
        xs = xh.reshape(Nb * Hd * Wd, 2, Cin)           # lane dim intact
        xd = 0.25 * (xs[:, 0, :] + xs[:, 1, :])         # pool along W -> (Nb*Sd, Cin)
    else:
        xd = xv.reshape(Nb * Sd, Cin)
    xd_mx = xd.astype(mx_dtype)

    # conv1 (1x1) [downsample already applied; avg-pool commutes with 1x1 conv+bias]
    # -> bn1 -> relu
    h = jnp.dot(xd_mx, w1_ref[...], preferred_element_type=jnp.float32)
    h = jnp.maximum(h * s1_ref[...] + o1_ref[...], 0.0)              # (Nb*Sd, Cn)

    # conv2 (3x3, padding=1) as in-register im2col + a single MXU matmul.
    # Taps are zero-filled shifts built from static slices + concatenate: the H
    # shift only touches a major dim (free); the W shift is a sublane concat.
    h4 = h.reshape(Nb, Hd, Wd, Cn)
    zrow = jnp.zeros((Nb, 1, Wd, Cn), jnp.float32)
    zcol = jnp.zeros((Nb, Hd, 1, Cn), jnp.float32)
    taps = []
    for dy in (-1, 0, 1):                # kernel row i = dy + 1
        if dy == -1:
            hy = jnp.concatenate([zrow, h4[:, :-1, :, :]], axis=1)
        elif dy == 1:
            hy = jnp.concatenate([h4[:, 1:, :, :], zrow], axis=1)
        else:
            hy = h4
        for dx in (-1, 0, 1):            # kernel col j = dx + 1
            if dx == -1:
                t = jnp.concatenate([zcol, hy[:, :, :-1, :]], axis=2)
            elif dx == 1:
                t = jnp.concatenate([hy[:, :, 1:, :], zcol], axis=2)
            else:
                t = hy
            taps.append(t)
    cols = jnp.concatenate(taps, axis=-1).reshape(Nb * Sd, 9 * Cn)   # im2col rows
    h = jnp.dot(cols.astype(mx_dtype), w2_ref[...],
                preferred_element_type=jnp.float32)
    h = jnp.maximum(h * s2_ref[...] + o2_ref[...], 0.0)              # (Nb*Sd, Cn)

    # conv3 (1x1) -> bn3
    y1 = jnp.dot(h.astype(mx_dtype), w3_ref[...],
                 preferred_element_type=jnp.float32)
    y1 = y1 * s3_ref[...] + o3_ref[...]                              # (Nb*Sd, Cout)

    # shortcut branch: 1x1 conv [+down, already applied] -> bn, or identity.
    if shortcut:
        y2 = jnp.dot(xd_mx, ws_ref[...], preferred_element_type=jnp.float32)
        y2 = y2 * ss_ref[...] + os_ref[...]
    else:
        y2 = xd   # identity: Cin == Cout and no coarsen (asserted in wrapper)

    out = jnp.maximum(y1 + y2, 0.0)
    out_ref[...] = out.reshape(Nb, Hd, Wd, Cout).astype(out_ref.dtype)


def prepack_params(params, *, shortcut, eps=1e-5, compute_dtype=jnp.bfloat16):
    """One-time repack (hoisted out of the per-call wrapper):
    conv bias + eval-mode BatchNorm folded into f32 per-channel scale/offset,
    1x1 weights transposed to (Cin, Cout) and cast to bf16, and the 3x3 weight
    stacked tap-major into an im2col weight of shape (9*Cn, Cn) in bf16."""
    def fold(bias, g, b, m, v):
        s = g / jnp.sqrt(v + eps)
        return (s.reshape(1, -1).astype(jnp.float32),
                ((bias - m) * s + b).reshape(1, -1).astype(jnp.float32))

    pk = {}
    pk['w1'] = params['w1'][:, :, 0, 0].T.astype(compute_dtype)
    pk['s1'], pk['o1'] = fold(params['b1'], params['g1'], params['be1'],
                              params['m1'], params['v1'])
    pk['w2'] = jnp.concatenate(
        [params['w2'][:, :, i, j].T for i in range(3) for j in range(3)],
        axis=0).astype(compute_dtype)                   # (9*Cn, Cn), tap-major
    pk['s2'], pk['o2'] = fold(params['b2'], params['g2'], params['be2'],
                              params['m2'], params['v2'])
    pk['w3'] = params['w3'][:, :, 0, 0].T.astype(compute_dtype)
    pk['s3'], pk['o3'] = fold(params['b3'], params['g3'], params['be3'],
                              params['m3'], params['v3'])
    if shortcut:
        pk['ws'] = params['ws'][:, :, 0, 0].T.astype(compute_dtype)
        pk['ss'], pk['os'] = fold(params['bs'], params['gs'], params['bes'],
                                  params['ms'], params['vs'])
    return pk


def resblock_forward(x_nchw, packed, *, in_chan, neck_chan, out_chan, coarsen,
                     batch_block=1, compute_dtype=jnp.bfloat16,
                     out_dtype=jnp.float32):
    diff_chan = in_chan != out_chan
    shortcut = diff_chan or coarsen
    N, C, H, W = x_nchw.shape
    assert C == in_chan
    if coarsen:
        # bilinear(0.5x, align_corners=False, recompute_scale_factor=True) equals
        # a 2x2 average pool only for even spatial sizes.
        assert H % 2 == 0 and W % 2 == 0, "coarsen requires even H and W"
    if not shortcut:
        # identity branch precondition (guaranteed by the module's flag logic)
        assert in_chan == out_chan and not coarsen
    assert N % batch_block == 0
    Nb = batch_block
    Hd, Wd = (H // 2, W // 2) if coarsen else (H, W)

    # NCHW -> NHWC; move activations in bf16 (halves HBM<->VMEM DMA bytes).
    x = jnp.transpose(x_nchw, (0, 2, 3, 1)).astype(compute_dtype)

    names = ['w1', 's1', 'o1', 'w2', 's2', 'o2', 'w3', 's3', 'o3']
    if shortcut:
        names += ['ws', 'ss', 'os']
    weights = [packed[k] for k in names]

    def _full_spec(a):
        nd = a.ndim
        return pl.BlockSpec(a.shape, lambda n, _nd=nd: (0,) * _nd)

    in_specs = ([pl.BlockSpec((Nb, H, W, in_chan), lambda n: (n, 0, 0, 0))]
                + [_full_spec(w) for w in weights])

    kernel = functools.partial(
        _resblock_kernel, coarsen=coarsen, shortcut=shortcut,
        Nb=Nb, H=H, W=W, Hd=Hd, Wd=Wd, Cin=in_chan, Cn=neck_chan, Cout=out_chan,
        mx_dtype=compute_dtype)

    out = pl.pallas_call(
        kernel,
        out_shape=jax.ShapeDtypeStruct((N, Hd, Wd, out_chan), out_dtype),
        grid_spec=pltpu.PrefetchScalarGridSpec(
            num_scalar_prefetch=0,
            grid=(N // Nb,),
            in_specs=in_specs,
            out_specs=pl.BlockSpec((Nb, Hd, Wd, out_chan),
                                   lambda n: (n, 0, 0, 0)),
        ),
        compiler_params=pltpu.CompilerParams(
            # batch steps are independent -> shard across TensorCores on v7x.
            dimension_semantics=("parallel",)),
    )(x, *weights)

    return jnp.transpose(out, (0, 3, 1, 2))   # back to NCHW


# ---------- deterministic parameter construction ----------
def init_params(key, in_chan, neck_chan, out_chan, shortcut):
    ks = jax.random.split(key, 16)

    def conv_w(k, o, i, kh, kw):
        bound = 1.0 / np.sqrt(i * kh * kw)
        return jax.random.uniform(k, (o, i, kh, kw), jnp.float32, -bound, bound)

    def conv_b(k, o, fan_in):
        bound = 1.0 / np.sqrt(fan_in)
        return jax.random.uniform(k, (o,), jnp.float32, -bound, bound)

    def bn(k, c, tag):
        k1, k2, k3, k4 = jax.random.split(k, 4)
        return {f'g{tag}': jax.random.uniform(k1, (c,), jnp.float32, 0.5, 1.5),
                f'be{tag}': 0.1 * jax.random.normal(k2, (c,), jnp.float32),
                f'm{tag}': 0.1 * jax.random.normal(k3, (c,), jnp.float32),
                f'v{tag}': jax.random.uniform(k4, (c,), jnp.float32, 0.5, 1.5)}

    p = {}
    p['w1'] = conv_w(ks[0], neck_chan, in_chan, 1, 1)
    p['b1'] = conv_b(ks[1], neck_chan, in_chan)
    p['w2'] = conv_w(ks[2], neck_chan, neck_chan, 3, 3)
    p['b2'] = conv_b(ks[3], neck_chan, neck_chan * 9)
    p['w3'] = conv_w(ks[4], out_chan, neck_chan, 1, 1)
    p['b3'] = conv_b(ks[5], out_chan, neck_chan)
    p.update(bn(ks[6], neck_chan, '1'))
    p.update(bn(ks[7], neck_chan, '2'))
    p.update(bn(ks[8], out_chan, '3'))
    if shortcut:
        p['ws'] = conv_w(ks[9], out_chan, in_chan, 1, 1)
        p['bs'] = conv_b(ks[10], out_chan, in_chan)
        p.update(bn(ks[11], out_chan, 's'))
    return p


# ---------- pure-JAX reference (NCHW, eval-mode BN, f32) ----------
def resblock_reference(x, p, *, coarsen, shortcut):
    eps = 1e-5

    def conv1x1(v, w, b):
        return jnp.einsum('nchw,oc->nohw', v, w[:, :, 0, 0]) + b[None, :, None, None]

    def bn(v, g, b, m, var):
        return ((v - m[None, :, None, None]) / jnp.sqrt(var[None, :, None, None] + eps)
                * g[None, :, None, None] + b[None, :, None, None])

    def down(v):
        n, c, h, w = v.shape
        return v.reshape(n, c, h // 2, 2, w // 2, 2).mean(axis=(3, 5))

    def conv3x3(v, w, b):
        out = jax.lax.conv_general_dilated(
            v, w, window_strides=(1, 1), padding=((1, 1), (1, 1)),
            dimension_numbers=('NCHW', 'OIHW', 'NCHW'))
        return out + b[None, :, None, None]

    h = conv1x1(x, p['w1'], p['b1'])
    if coarsen:
        h = down(h)
    h = jax.nn.relu(bn(h, p['g1'], p['be1'], p['m1'], p['v1']))
    h = conv3x3(h, p['w2'], p['b2'])
    h = jax.nn.relu(bn(h, p['g2'], p['be2'], p['m2'], p['v2']))
    h = conv1x1(h, p['w3'], p['b3'])
    h = bn(h, p['g3'], p['be3'], p['m3'], p['v3'])
    if shortcut:
        s = conv1x1(x, p['ws'], p['bs'])
        if coarsen:
            s = down(s)
        s = bn(s, p['gs'], p['bes'], p['ms'], p['vs'])
    else:
        s = x
    return jax.nn.relu(h + s)


if __name__ == "__main__":
    in_chan, neck_chan, out_chan = 4, 8, 16
    coarsen = True
    shortcut = (in_chan != out_chan) or coarsen

    key = jax.random.PRNGKey(0)
    kx, kp = jax.random.split(key)
    x = jax.random.normal(kx, (2, in_chan, 16, 16), jnp.float32)   # NCHW, like PyTorch

    params = init_params(kp, in_chan, neck_chan, out_chan, shortcut)
    packed = prepack_params(params, shortcut=shortcut)             # one-time prepack

    out = resblock_forward(x, packed, in_chan=in_chan, neck_chan=neck_chan,
                           out_chan=out_chan, coarsen=coarsen, batch_block=2)
    out = jax.block_until_ready(out)

    ref = resblock_reference(x, params, coarsen=coarsen, shortcut=shortcut)
    # bf16 activations/weights with f32 accumulation -> slightly looser tolerance.
    np.testing.assert_allclose(np.asarray(out), np.asarray(ref), rtol=3e-2, atol=3e-2)

    print("KERNEL_OK")
</pallas_src>

<mosaic_0001>
module attributes {stable_mosaic.version = 11 : i64} {
  func.func @_resblock_kernel(%arg0: i32, %arg1: memref<2x16x16x4xbf16, #tpu.memory_space<vmem>>, %arg2: memref<4x8xbf16, #tpu.memory_space<vmem>>, %arg3: memref<1x8xf32, #tpu.memory_space<vmem>>, %arg4: memref<1x8xf32, #tpu.memory_space<vmem>>, %arg5: memref<72x8xbf16, #tpu.memory_space<vmem>>, %arg6: memref<1x8xf32, #tpu.memory_space<vmem>>, %arg7: memref<1x8xf32, #tpu.memory_space<vmem>>, %arg8: memref<8x16xbf16, #tpu.memory_space<vmem>>, %arg9: memref<1x16xf32, #tpu.memory_space<vmem>>, %arg10: memref<1x16xf32, #tpu.memory_space<vmem>>, %arg11: memref<4x16xbf16, #tpu.memory_space<vmem>>, %arg12: memref<1x16xf32, #tpu.memory_space<vmem>>, %arg13: memref<1x16xf32, #tpu.memory_space<vmem>>, %arg14: memref<2x8x8x16xf32, #tpu.memory_space<vmem>>) attributes {dimension_semantics = [#tpu.dimension_semantics<parallel>], iteration_bounds = array<i64: 1>, scalar_prefetch = 0 : i64, scratch_operands = 0 : i64, tpu.core_type = #tpu.core_type<tc>, window_params = [{transform_indices = @transform_0, window_bounds = array<i64: 2, 16, 16, 4>}, {pipeline_mode = #tpu.pipeline_mode<synchronous>, transform_indices = @transform_1, window_bounds = array<i64: 4, 8>}, {pipeline_mode = #tpu.pipeline_mode<synchronous>, transform_indices = @transform_2, window_bounds = array<i64: 1, 8>}, {pipeline_mode = #tpu.pipeline_mode<synchronous>, transform_indices = @transform_3, window_bounds = array<i64: 1, 8>}, {pipeline_mode = #tpu.pipeline_mode<synchronous>, transform_indices = @transform_4, window_bounds = array<i64: 72, 8>}, {pipeline_mode = #tpu.pipeline_mode<synchronous>, transform_indices = @transform_5, window_bounds = array<i64: 1, 8>}, {pipeline_mode = #tpu.pipeline_mode<synchronous>, transform_indices = @transform_6, window_bounds = array<i64: 1, 8>}, {pipeline_mode = #tpu.pipeline_mode<synchronous>, transform_indices = @transform_7, window_bounds = array<i64: 8, 16>}, {pipeline_mode = #tpu.pipeline_mode<synchronous>, transform_indices = @transform_8, window_bounds = array<i64: 1, 16>}, {pipeline_mode = #tpu.pipeline_mode<synchronous>, transform_indices = @transform_9, window_bounds = array<i64: 1, 16>}, {pipeline_mode = #tpu.pipeline_mode<synchronous>, transform_indices = @transform_10, window_bounds = array<i64: 4, 16>}, {pipeline_mode = #tpu.pipeline_mode<synchronous>, transform_indices = @transform_11, window_bounds = array<i64: 1, 16>}, {pipeline_mode = #tpu.pipeline_mode<synchronous>, transform_indices = @transform_12, window_bounds = array<i64: 1, 16>}, {transform_indices = @transform_13, window_bounds = array<i64: 2, 8, 8, 16>}]} {
    %c0 = arith.constant 0 : index
    %c0_0 = arith.constant 0 : index
    %c0_1 = arith.constant 0 : index
    %c0_2 = arith.constant 0 : index
    %0 = vector.load %arg1[%c0, %c0_0, %c0_1, %c0_2] : memref<2x16x16x4xbf16, #tpu.memory_space<vmem>>, vector<2x16x16x4xbf16>
    %1 = arith.extf %0 : vector<2x16x16x4xbf16> to vector<2x16x16x4xf32>
    %2 = vector.shape_cast %1 : vector<2x16x16x4xf32> to vector<16x2x16x4xf32>
    %3 = vector.extract_strided_slice %2 {offsets = [0, 0, 0, 0], sizes = [16, 1, 16, 4], strides = [1, 1, 1, 1]} : vector<16x2x16x4xf32> to vector<16x1x16x4xf32>
    %4 = vector.shape_cast %3 : vector<16x1x16x4xf32> to vector<16x16x4xf32>
    %5 = vector.extract_strided_slice %2 {offsets = [0, 1, 0, 0], sizes = [16, 1, 16, 4], strides = [1, 1, 1, 1]} : vector<16x2x16x4xf32> to vector<16x1x16x4xf32>
    %6 = vector.shape_cast %5 : vector<16x1x16x4xf32> to vector<16x16x4xf32>
    %7 = arith.addf %4, %6 : vector<16x16x4xf32>
    %8 = vector.shape_cast %7 : vector<16x16x4xf32> to vector<128x2x4xf32>
    %9 = vector.extract_strided_slice %8 {offsets = [0, 0, 0], sizes = [128, 1, 4], strides = [1, 1, 1]} : vector<128x2x4xf32> to vector<128x1x4xf32>
    %10 = vector.shape_cast %9 : vector<128x1x4xf32> to vector<128x4xf32>
    %11 = vector.extract_strided_slice %8 {offsets = [0, 1, 0], sizes = [128, 1, 4], strides = [1, 1, 1]} : vector<128x2x4xf32> to vector<128x1x4xf32>
    %12 = vector.shape_cast %11 : vector<128x1x4xf32> to vector<128x4xf32>
    %13 = arith.addf %10, %12 : vector<128x4xf32>
    %cst = arith.constant 2.500000e-01 : f32
    %14 = vector.broadcast %cst : f32 to vector<128x4xf32>
    %15 = arith.mulf %14, %13 : vector<128x4xf32>
    %16 = arith.truncf %15 : vector<128x4xf32> to vector<128x4xbf16>
    %c0_3 = arith.constant 0 : index
    %c0_4 = arith.constant 0 : index
    %17 = vector.load %arg2[%c0_3, %c0_4] : memref<4x8xbf16, #tpu.memory_space<vmem>>, vector<4x8xbf16>
    %cst_5 = arith.constant dense<0.000000e+00> : vector<128x8xf32>
    %18 = tpu.matmul %16, %17, %cst_5 {dimension_numbers = #tpu.dot_dimension_numbers<[1], [0], [0], [1], [0, 0, 1, 1], [], []>} : vector<128x4xbf16>, vector<4x8xbf16>, vector<128x8xf32> -> vector<128x8xf32>
    %c0_6 = arith.constant 0 : index
    %c0_7 = arith.constant 0 : index
    %19 = vector.load %arg3[%c0_6, %c0_7] : memref<1x8xf32, #tpu.memory_space<vmem>>, vector<1x8xf32>
    %20 = vector.broadcast %19 : vector<1x8xf32> to vector<128x8xf32>
    %21 = arith.mulf %18, %20 : vector<128x8xf32>
    %c0_8 = arith.constant 0 : index
    %c0_9 = arith.constant 0 : index
    %22 = vector.load %arg4[%c0_8, %c0_9] : memref<1x8xf32, #tpu.memory_space<vmem>>, vector<1x8xf32>
    %23 = vector.broadcast %22 : vector<1x8xf32> to vector<128x8xf32>
    %24 = arith.addf %21, %23 : vector<128x8xf32>
    %cst_10 = arith.constant 0.000000e+00 : f32
    %25 = vector.broadcast %cst_10 : f32 to vector<128x8xf32>
    %26 = arith.maximumf %24, %25 : vector<128x8xf32>
    %27 = vector.shape_cast %26 : vector<128x8xf32> to vector<2x8x8x8xf32>
    %cst_11 = arith.constant 0.000000e+00 : f32
    %28 = vector.broadcast %cst_11 : f32 to vector<2x1x8x8xf32>
    %cst_12 = arith.constant 0.000000e+00 : f32
    %29 = vector.broadcast %cst_12 : f32 to vector<2x8x1x8xf32>
    %30 = vector.extract_strided_slice %27 {offsets = [0, 0, 0, 0], sizes = [2, 7, 8, 8], strides = [1, 1, 1, 1]} : vector<2x8x8x8xf32> to vector<2x7x8x8xf32>
    %31 = tpu.concatenate %28, %30 in 1 : vector<2x1x8x8xf32>, vector<2x7x8x8xf32> -> vector<2x8x8x8xf32>
    %32 = vector.extract_strided_slice %31 {offsets = [0, 0, 0, 0], sizes = [2, 8, 7, 8], strides = [1, 1, 1, 1]} : vector<2x8x8x8xf32> to vector<2x8x7x8xf32>
    %33 = tpu.concatenate %29, %32 in 2 : vector<2x8x1x8xf32>, vector<2x8x7x8xf32> -> vector<2x8x8x8xf32>
    %34 = vector.extract_strided_slice %31 {offsets = [0, 0, 1, 0], sizes = [2, 8, 7, 8], strides = [1, 1, 1, 1]} : vector<2x8x8x8xf32> to vector<2x8x7x8xf32>
    %35 = tpu.concatenate %34, %29 in 2 : vector<2x8x7x8xf32>, vector<2x8x1x8xf32> -> vector<2x8x8x8xf32>
    %36 = vector.extract_strided_slice %27 {offsets = [0, 0, 0, 0], sizes = [2, 8, 7, 8], strides = [1, 1, 1, 1]} : vector<2x8x8x8xf32> to vector<2x8x7x8xf32>
    %37 = tpu.concatenate %29, %36 in 2 : vector<2x8x1x8xf32>, vector<2x8x7x8xf32> -> vector<2x8x8x8xf32>
    %38 = vector.extract_strided_slice %27 {offsets = [0, 0, 1, 0], sizes = [2, 8, 7, 8], strides = [1, 1, 1, 1]} : vector<2x8x8x8xf32> to vector<2x8x7x8xf32>
    %39 = tpu.concatenate %38, %29 in 2 : vector<2x8x7x8xf32>, vector<2x8x1x8xf32> -> vector<2x8x8x8xf32>
    %40 = vector.extract_strided_slice %27 {offsets = [0, 1, 0, 0], sizes = [2, 7, 8, 8], strides = [1, 1, 1, 1]} : vector<2x8x8x8xf32> to vector<2x7x8x8xf32>
    %41 = tpu.concatenate %40, %28 in 1 : vector<2x7x8x8xf32>, vector<2x1x8x8xf32> -> vector<2x8x8x8xf32>
    %42 = vector.extract_strided_slice %41 {offsets = [0, 0, 0, 0], sizes = [2, 8, 7, 8], strides = [1, 1, 1, 1]} : vector<2x8x8x8xf32> to vector<2x8x7x8xf32>
    %43 = tpu.concatenate %29, %42 in 2 : vector<2x8x1x8xf32>, vector<2x8x7x8xf32> -> vector<2x8x8x8xf32>
    %44 = vector.extract_strided_slice %41 {offsets = [0, 0, 1, 0], sizes = [2, 8, 7, 8], strides = [1, 1, 1, 1]} : vector<2x8x8x8xf32> to vector<2x8x7x8xf32>
    %45 = tpu.concatenate %44, %29 in 2 : vector<2x8x7x8xf32>, vector<2x8x1x8xf32> -> vector<2x8x8x8xf32>
    %46 = tpu.concatenate %33, %31, %35, %37, %27, %39, %43, %41, %45 in 3 : vector<2x8x8x8xf32>, vector<2x8x8x8xf32>, vector<2x8x8x8xf32>, vector<2x8x8x8xf32>, vector<2x8x8x8xf32>, vector<2x8x8x8xf32>, vector<2x8x8x8xf32>, vector<2x8x8x8xf32>, vector<2x8x8x8xf32> -> vector<2x8x8x72xf32>
    %47 = vector.shape_cast %46 : vector<2x8x8x72xf32> to vector<128x72xf32>
    %48 = arith.truncf %47 : vector<128x72xf32> to vector<128x72xbf16>
    %c0_13 = arith.constant 0 : index
    %c0_14 = arith.constant 0 : index
    %49 = vector.load %arg5[%c0_13, %c0_14] : memref<72x8xbf16, #tpu.memory_space<vmem>>, vector<72x8xbf16>
    %cst_15 = arith.constant dense<0.000000e+00> : vector<128x8xf32>
    %50 = tpu.matmul %48, %49, %cst_15 {dimension_numbers = #tpu.dot_dimension_numbers<[1], [0], [0], [1], [0, 0, 1, 1], [], []>} : vector<128x72xbf16>, vector<72x8xbf16>, vector<128x8xf32> -> vector<128x8xf32>
    %c0_16 = arith.constant 0 : index
    %c0_17 = arith.constant 0 : index
    %51 = vector.load %arg6[%c0_16, %c0_17] : memref<1x8xf32, #tpu.memory_space<vmem>>, vector<1x8xf32>
    %52 = vector.broadcast %51 : vector<1x8xf32> to vector<128x8xf32>
    %53 = arith.mulf %50, %52 : vector<128x8xf32>
    %c0_18 = arith.constant 0 : index
    %c0_19 = arith.constant 0 : index
    %54 = vector.load %arg7[%c0_18, %c0_19] : memref<1x8xf32, #tpu.memory_space<vmem>>, vector<1x8xf32>
    %55 = vector.broadcast %54 : vector<1x8xf32> to vector<128x8xf32>
    %56 = arith.addf %53, %55 : vector<128x8xf32>
    %cst_20 = arith.constant 0.000000e+00 : f32
    %57 = vector.broadcast %cst_20 : f32 to vector<128x8xf32>
    %58 = arith.maximumf %56, %57 : vector<128x8xf32>
    %59 = arith.truncf %58 : vector<128x8xf32> to vector<128x8xbf16>
    %c0_21 = arith.constant 0 : index
    %c0_22 = arith.constant 0 : index
    %60 = vector.load %arg8[%c0_21, %c0_22] : memref<8x16xbf16, #tpu.memory_space<vmem>>, vector<8x16xbf16>
    %cst_23 = arith.constant dense<0.000000e+00> : vector<128x16xf32>
    %61 = tpu.matmul %59, %60, %cst_23 {dimension_numbers = #tpu.dot_dimension_numbers<[1], [0], [0], [1], [0, 0, 1, 1], [], []>} : vector<128x8xbf16>, vector<8x16xbf16>, vector<128x16xf32> -> vector<128x16xf32>
    %c0_24 = arith.constant 0 : index
    %c0_25 = arith.constant 0 : index
    %62 = vector.load %arg9[%c0_24, %c0_25] : memref<1x16xf32, #tpu.memory_space<vmem>>, vector<1x16xf32>
    %63 = vector.broadcast %62 : vector<1x16xf32> to vector<128x16xf32>
    %64 = arith.mulf %61, %63 : vector<128x16xf32>
    %c0_26 = arith.constant 0 : index
    %c0_27 = arith.constant 0 : index
    %65 = vector.load %arg10[%c0_26, %c0_27] : memref<1x16xf32, #tpu.memory_space<vmem>>, vector<1x16xf32>
    %66 = vector.broadcast %65 : vector<1x16xf32> to vector<128x16xf32>
    %67 = arith.addf %64, %66 : vector<128x16xf32>
    %c0_28 = arith.constant 0 : index
    %c0_29 = arith.constant 0 : index
    %68 = vector.load %arg11[%c0_28, %c0_29] : memref<4x16xbf16, #tpu.memory_space<vmem>>, vector<4x16xbf16>
    %cst_30 = arith.constant dense<0.000000e+00> : vector<128x16xf32>
    %69 = tpu.matmul %16, %68, %cst_30 {dimension_numbers = #tpu.dot_dimension_numbers<[1], [0], [0], [1], [0, 0, 1, 1], [], []>} : vector<128x4xbf16>, vector<4x16xbf16>, vector<128x16xf32> -> vector<128x16xf32>
    %c0_31 = arith.constant 0 : index
    %c0_32 = arith.constant 0 : index
    %70 = vector.load %arg12[%c0_31, %c0_32] : memref<1x16xf32, #tpu.memory_space<vmem>>, vector<1x16xf32>
    %71 = vector.broadcast %70 : vector<1x16xf32> to vector<128x16xf32>
    %72 = arith.mulf %69, %71 : vector<128x16xf32>
    %c0_33 = arith.constant 0 : index
    %c0_34 = arith.constant 0 : index
    %73 = vector.load %arg13[%c0_33, %c0_34] : memref<1x16xf32, #tpu.memory_space<vmem>>, vector<1x16xf32>
    %74 = vector.broadcast %73 : vector<1x16xf32> to vector<128x16xf32>
    %75 = arith.addf %72, %74 : vector<128x16xf32>
    %76 = arith.addf %67, %75 : vector<128x16xf32>
    %cst_35 = arith.constant 0.000000e+00 : f32
    %77 = vector.broadcast %cst_35 : f32 to vector<128x16xf32>
    %78 = arith.maximumf %76, %77 : vector<128x16xf32>
    %79 = vector.shape_cast %78 : vector<128x16xf32> to vector<2x8x8x16xf32>
    %c0_36 = arith.constant 0 : index
    %c0_37 = arith.constant 0 : index
    %c0_38 = arith.constant 0 : index
    %c0_39 = arith.constant 0 : index
    %80 = vector.load %arg14[%c0_36, %c0_37, %c0_38, %c0_39] : memref<2x8x8x16xf32, #tpu.memory_space<vmem>>, vector<2x8x8x16xf32>
    tpu.vector_store %arg14[%c0_36, %c0_37, %c0_38, %c0_39], %79 {strides = array<i32>} : memref<2x8x8x16xf32, #tpu.memory_space<vmem>>, vector<2x8x8x16xf32>,
    return
  }
  func.func @transform_0(%arg0: i32) -> (i32, i32, i32, i32) {
    %c0_i32 = arith.constant 0 : i32
    %c0_i32_0 = arith.constant 0 : i32
    %c0_i32_1 = arith.constant 0 : i32
    %c0_i32_2 = arith.constant 0 : i32
    return %arg0, %c0_i32, %c0_i32_0, %c0_i32_1 : i32, i32, i32, i32
  }
  func.func @transform_1(%arg0: i32) -> (i32, i32) {
    %c0_i32 = arith.constant 0 : i32
    %c0_i32_0 = arith.constant 0 : i32
    %c0_i32_1 = arith.constant 0 : i32
    return %c0_i32, %c0_i32_0 : i32, i32
  }
  func.func @transform_2(%arg0: i32) -> (i32, i32) {
    %c0_i32 = arith.constant 0 : i32
    %c0_i32_0 = arith.constant 0 : i32
    %c0_i32_1 = arith.constant 0 : i32
    return %c0_i32, %c0_i32_0 : i32, i32
  }
  func.func @transform_3(%arg0: i32) -> (i32, i32) {
    %c0_i32 = arith.constant 0 : i32
    %c0_i32_0 = arith.constant 0 : i32
    %c0_i32_1 = arith.constant 0 : i32
    return %c0_i32, %c0_i32_0 : i32, i32
  }
  func.func @transform_4(%arg0: i32) -> (i32, i32) {
    %c0_i32 = arith.constant 0 : i32
    %c0_i32_0 = arith.constant 0 : i32
    %c0_i32_1 = arith.constant 0 : i32
    return %c0_i32, %c0_i32_0 : i32, i32
  }
  func.func @transform_5(%arg0: i32) -> (i32, i32) {
    %c0_i32 = arith.constant 0 : i32
    %c0_i32_0 = arith.constant 0 : i32
    %c0_i32_1 = arith.constant 0 : i32
    return %c0_i32, %c0_i32_0 : i32, i32
  }
  func.func @transform_6(%arg0: i32) -> (i32, i32) {
    %c0_i32 = arith.constant 0 : i32
    %c0_i32_0 = arith.constant 0 : i32
    %c0_i32_1 = arith.constant 0 : i32
    return %c0_i32, %c0_i32_0 : i32, i32
  }
  func.func @transform_7(%arg0: i32) -> (i32, i32) {
    %c0_i32 = arith.constant 0 : i32
    %c0_i32_0 = arith.constant 0 : i32
    %c0_i32_1 = arith.constant 0 : i32
    return %c0_i32, %c0_i32_0 : i32, i32
  }
  func.func @transform_8(%arg0: i32) -> (i32, i32) {
    %c0_i32 = arith.constant 0 : i32
    %c0_i32_0 = arith.constant 0 : i32
    %c0_i32_1 = arith.constant 0 : i32
    return %c0_i32, %c0_i32_0 : i32, i32
  }
  func.func @transform_9(%arg0: i32) -> (i32, i32) {
    %c0_i32 = arith.constant 0 : i32
    %c0_i32_0 = arith.constant 0 : i32
    %c0_i32_1 = arith.constant 0 : i32
    return %c0_i32, %c0_i32_0 : i32, i32
  }
  func.func @transform_10(%arg0: i32) -> (i32, i32) {
    %c0_i32 = arith.constant 0 : i32
    %c0_i32_0 = arith.constant 0 : i32
    %c0_i32_1 = arith.constant 0 : i32
    return %c0_i32, %c0_i32_0 : i32, i32
  }
  func.func @transform_11(%arg0: i32) -> (i32, i32) {
    %c0_i32 = arith.constant 0 : i32
    %c0_i32_0 = arith.constant 0 : i32
    %c0_i32_1 = arith.constant 0 : i32
    return %c0_i32, %c0_i32_0 : i32, i32
  }
  func.func @transform_12(%arg0: i32) -> (i32, i32) {
    %c0_i32 = arith.constant 0 : i32
    %c0_i32_0 = arith.constant 0 : i32
    %c0_i32_1 = arith.constant 0 : i32
    return %c0_i32, %c0_i32_0 : i32, i32
  }
  func.func @transform_13(%arg0: i32) -> (i32, i32, i32, i32) {
    %c0_i32 = arith.constant 0 : i32
    %c0_i32_0 = arith.constant 0 : i32
    %c0_i32_1 = arith.constant 0 : i32
    %c0_i32_2 = arith.constant 0 : i32
    return %arg0, %c0_i32, %c0_i32_0, %c0_i32_1 : i32, i32, i32, i32
  }
}

</mosaic_0001>

<llo_original>
// kernel: tpu_custom_call.1
$region0: #{tpu_custom_call.1}
  #allocation0 [shape = 'u32[]', space=smem, size = 0x4, offset = 0x4, fixed_abs, tag = 'smem constant byte address 0x4 - core index']
  #allocation1 [shape = 'u32[144,128]{1,0:T(1,128)}', space=vmem, size = 0x12000, scoped, tag = 'internal scratch']
  %s0 = inlined_call_operand.vmem [shape: bf16[2,16,16,4], index: 0, kind: input, shape index: {}]
  %s1 = inlined_call_operand.vmem [shape: bf16[4,8], index: 1, kind: input, shape index: {}]
  %s2 = inlined_call_operand.vmem [shape: f32[1,8], index: 2, kind: input, shape index: {}]
  %s3 = inlined_call_operand.vmem [shape: f32[1,8], index: 3, kind: input, shape index: {}]
  %s4 = inlined_call_operand.vmem [shape: bf16[72,8], index: 4, kind: input, shape index: {}]
  %s5 = inlined_call_operand.vmem [shape: f32[1,8], index: 5, kind: input, shape index: {}]
  %s6 = inlined_call_operand.vmem [shape: f32[1,8], index: 6, kind: input, shape index: {}]
  %s7 = inlined_call_operand.vmem [shape: bf16[8,16], index: 7, kind: input, shape index: {}]
  %s8 = inlined_call_operand.vmem [shape: f32[1,16], index: 8, kind: input, shape index: {}]
  %s9 = inlined_call_operand.vmem [shape: f32[1,16], index: 9, kind: input, shape index: {}]
  %s10 = inlined_call_operand.vmem [shape: bf16[4,16], index: 10, kind: input, shape index: {}]
  %s11 = inlined_call_operand.vmem [shape: f32[1,16], index: 11, kind: input, shape index: {}]
  %s12 = inlined_call_operand.vmem [shape: f32[1,16], index: 12, kind: input, shape index: {}]
  %s13 = inlined_call_operand.hbm [shape: f32[2,8,8,16], index: 13, kind: output, shape index: {}]
  %s14 = sld [smem:[#allocation0]]
  $region62: #{tpu_custom_call.1} parent=0
    _
  %s16 = ssub.s32 1, %s14
  %s17 = scalar_select 0, %s16, %s14
  $region1: #{tpu_custom_call.1} parent=0
    #allocation2 [shape = 'u8[65536]{0}', space=vmem, size = 0x10000, scoped, tag = 'output window, operand 0, single buffered']
    #allocation3 [shape = 's32[1]{0}', space=sflag, size = 0x4, scoped, tag = 'scoped memory for tpu_custom_call.1']
    %18 = vsyncpa [#allocation3], 0
    // Predicated region
    $region2: #{tpu_custom_call.1} parent=1 // pred_check
      _
    $region3: #{tpu_custom_call.1} parent=1 // pred_check_branch
      %20 = sbr.rel (0) target = $region5
    $region4: #{tpu_custom_call.1} parent=1 // pred_region
      _
    $region5: #{tpu_custom_call.1} parent=1 // pred_fallthru
      _
    // Predicated region
    $region6: #{tpu_custom_call.1} parent=1 // pred_check
      _
    $region7: #{tpu_custom_call.1} parent=1 // pred_check_branch
      %22 = sbr.rel (0) target = $region9
    $region8: #{tpu_custom_call.1} parent=1 // pred_region
      _
    $region9: #{tpu_custom_call.1} parent=1 // pred_fallthru
      _
    // Predicated region
    $region10: #{tpu_custom_call.1} parent=1 // pred_check
      _
    $region11: #{tpu_custom_call.1} parent=1 // pred_check_branch
      %24 = sbr.rel (0) target = $region13
    $region12: #{tpu_custom_call.1} parent=1 // pred_region
      _
    $region13: #{tpu_custom_call.1} parent=1 // pred_fallthru
      _
    // Predicated region
    $region14: #{tpu_custom_call.1} parent=1 // pred_check
      _
    $region15: #{tpu_custom_call.1} parent=1 // pred_check_branch
      %26 = sbr.rel (0) target = $region17
    $region16: #{tpu_custom_call.1} parent=1 // pred_region
      _
    $region17: #{tpu_custom_call.1} parent=1 // pred_fallthru
      _
    // Predicated region
    $region18: #{tpu_custom_call.1} parent=1 // pred_check
      _
    $region19: #{tpu_custom_call.1} parent=1 // pred_check_branch
      %28 = sbr.rel (0) target = $region21
    $region20: #{tpu_custom_call.1} parent=1 // pred_region
      _
    $region21: #{tpu_custom_call.1} parent=1 // pred_fallthru
      _
    // Predicated region
    $region22: #{tpu_custom_call.1} parent=1 // pred_check
      _
    $region23: #{tpu_custom_call.1} parent=1 // pred_check_branch
      %30 = sbr.rel (0) target = $region25
    $region24: #{tpu_custom_call.1} parent=1 // pred_region
      _
    $region25: #{tpu_custom_call.1} parent=1 // pred_fallthru
      _
    // Predicated region
    $region26: #{tpu_custom_call.1} parent=1 // pred_check
      _
    $region27: #{tpu_custom_call.1} parent=1 // pred_check_branch
      %32 = sbr.rel (0) target = $region29
    $region28: #{tpu_custom_call.1} parent=1 // pred_region
      _
    $region29: #{tpu_custom_call.1} parent=1 // pred_fallthru
      _
    // Predicated region
    $region30: #{tpu_custom_call.1} parent=1 // pred_check
      _
    $region31: #{tpu_custom_call.1} parent=1 // pred_check_branch
      %34 = sbr.rel (0) target = $region33
    $region32: #{tpu_custom_call.1} parent=1 // pred_region
      _
    $region33: #{tpu_custom_call.1} parent=1 // pred_fallthru
      _
    // Predicated region
    $region34: #{tpu_custom_call.1} parent=1 // pred_check
      _
    $region35: #{tpu_custom_call.1} parent=1 // pred_check_branch
      %36 = sbr.rel (0) target = $region37
    $region36: #{tpu_custom_call.1} parent=1 // pred_region
      _
    $region37: #{tpu_custom_call.1} parent=1 // pred_fallthru
      _
    // Predicated region
    $region38: #{tpu_custom_call.1} parent=1 // pred_check
      _
    $region39: #{tpu_custom_call.1} parent=1 // pred_check_branch
      %38 = sbr.rel (0) target = $region41
    $region40: #{tpu_custom_call.1} parent=1 // pred_region
      _
    $region41: #{tpu_custom_call.1} parent=1 // pred_fallthru
      _
    // Predicated region
    $region42: #{tpu_custom_call.1} parent=1 // pred_check
      _
    $region43: #{tpu_custom_call.1} parent=1 // pred_check_branch
      %40 = sbr.rel (0) target = $region45
    $region44: #{tpu_custom_call.1} parent=1 // pred_region
      _
    $region45: #{tpu_custom_call.1} parent=1 // pred_fallthru
      _
    // Predicated region
    $region46: #{tpu_custom_call.1} parent=1 // pred_check
      _
    $region47: #{tpu_custom_call.1} parent=1 // pred_check_branch
      %42 = sbr.rel (0) target = $region49
    $region48: #{tpu_custom_call.1} parent=1 // pred_region
      _
    $region49: #{tpu_custom_call.1} parent=1 // pred_fallthru
      _
    // Predicated region
    $region50: #{tpu_custom_call.1} parent=1 // pred_check
      _
    $region51: #{tpu_custom_call.1} parent=1 // pred_check_branch
      %44 = sbr.rel (0) target = $region53
    $region52: #{tpu_custom_call.1} parent=1 // pred_region
      _
    $region53: #{tpu_custom_call.1} parent=1 // pred_fallthru
      _
    %v46 = vld [vmem:[%s0] sm:$0xf]
    %v47 = vld [vmem:[%s0 + $0x4] sm:$0xf]
    %v48 = vld [vmem:[%s0 + $0x8] sm:$0xf]
    %v49 = vld [vmem:[%s0 + $0xc] sm:$0xf]
    %v50 = vld [vmem:[%s0 + $0x10] sm:$0xf]
    %v51 = vld [vmem:[%s0 + $0x14] sm:$0xf]
    %v52 = vld [vmem:[%s0 + $0x18] sm:$0xf]
    %v53 = vld [vmem:[%s0 + $0x1c] sm:$0xf]
    %v54 = vld [vmem:[%s0 + $0x20] sm:$0xf]
    %v55 = vld [vmem:[%s0 + $0x24] sm:$0xf]
    %v56 = vld [vmem:[%s0 + $0x28] sm:$0xf]
    %v57 = vld [vmem:[%s0 + $0x2c] sm:$0xf]
    %v58 = vld [vmem:[%s0 + $0x30] sm:$0xf]
    %v59 = vld [vmem:[%s0 + $0x34] sm:$0xf]
    %v60 = vld [vmem:[%s0 + $0x38] sm:$0xf]
    %v61 = vld [vmem:[%s0 + $0x3c] sm:$0xf]
    %v62 = vld [vmem:[%s0 + $0x40] sm:$0xf]
    %v63 = vld [vmem:[%s0 + $0x44] sm:$0xf]
    %v64 = vld [vmem:[%s0 + $0x48] sm:$0xf]
    %v65 = vld [vmem:[%s0 + $0x4c] sm:$0xf]
    %v66 = vld [vmem:[%s0 + $0x50] sm:$0xf]
    %v67 = vld [vmem:[%s0 + $0x54] sm:$0xf]
    %v68 = vld [vmem:[%s0 + $0x58] sm:$0xf]
    %v69 = vld [vmem:[%s0 + $0x5c] sm:$0xf]
    %v70 = vld [vmem:[%s0 + $0x60] sm:$0xf]
    %v71 = vld [vmem:[%s0 + $0x64] sm:$0xf]
    %v72 = vld [vmem:[%s0 + $0x68] sm:$0xf]
    %v73 = vld [vmem:[%s0 + $0x6c] sm:$0xf]
    %v74 = vld [vmem:[%s0 + $0x70] sm:$0xf]
    %v75 = vld [vmem:[%s0 + $0x74] sm:$0xf]
    %v76 = vld [vmem:[%s0 + $0x78] sm:$0xf]
    %v77 = vld [vmem:[%s0 + $0x7c] sm:$0xf]
    %v78 = vld [vmem:[%s0 + $0x80] sm:$0xf]
    %v79 = vld [vmem:[%s0 + $0x84] sm:$0xf]
    %v80 = vld [vmem:[%s0 + $0x88] sm:$0xf]
    %v81 = vld [vmem:[%s0 + $0x8c] sm:$0xf]
    %v82 = vld [vmem:[%s0 + $0x90] sm:$0xf]
    %v83 = vld [vmem:[%s0 + $0x94] sm:$0xf]
    %v84 = vld [vmem:[%s0 + $0x98] sm:$0xf]
    %v85 = vld [vmem:[%s0 + $0x9c] sm:$0xf]
    %v86 = vld [vmem:[%s0 + $0xa0] sm:$0xf]
    %v87 = vld [vmem:[%s0 + $0xa4] sm:$0xf]
    %v88 = vld [vmem:[%s0 + $0xa8] sm:$0xf]
    %v89 = vld [vmem:[%s0 + $0xac] sm:$0xf]
    %v90 = vld [vmem:[%s0 + $0xb0] sm:$0xf]
    %v91 = vld [vmem:[%s0 + $0xb4] sm:$0xf]
    %v92 = vld [vmem:[%s0 + $0xb8] sm:$0xf]
    %v93 = vld [vmem:[%s0 + $0xbc] sm:$0xf]
    %v94 = vld [vmem:[%s0 + $0xc0] sm:$0xf]
    %v95 = vld [vmem:[%s0 + $0xc4] sm:$0xf]
    %v96 = vld [vmem:[%s0 + $0xc8] sm:$0xf]
    %v97 = vld [vmem:[%s0 + $0xcc] sm:$0xf]
    %v98 = vld [vmem:[%s0 + $0xd0] sm:$0xf]
    %v99 = vld [vmem:[%s0 + $0xd4] sm:$0xf]
    %v100 = vld [vmem:[%s0 + $0xd8] sm:$0xf]
    %v101 = vld [vmem:[%s0 + $0xdc] sm:$0xf]
    %v102 = vld [vmem:[%s0 + $0xe0] sm:$0xf]
    %v103 = vld [vmem:[%s0 + $0xe4] sm:$0xf]
    %v104 = vld [vmem:[%s0 + $0xe8] sm:$0xf]
    %v105 = vld [vmem:[%s0 + $0xec] sm:$0xf]
    %v106 = vld [vmem:[%s0 + $0xf0] sm:$0xf]
    %v107 = vld [vmem:[%s0 + $0xf4] sm:$0xf]
    %v108 = vld [vmem:[%s0 + $0xf8] sm:$0xf]
    %v109 = vld [vmem:[%s0 + $0xfc] sm:$0xf]
    %v110 = vunpack.c.l.bf16 %v46
    %v111 = vunpack.c.l.bf16 %v47
    %v112 = vunpack.c.l.bf16 %v48
    %v113 = vunpack.c.l.bf16 %v49
    %v114 = vunpack.c.l.bf16 %v50
    %v115 = vunpack.c.l.bf16 %v51
    %v116 = vunpack.c.l.bf16 %v52
    %v117 = vunpack.c.l.bf16 %v53
    %v118 = vunpack.c.l.bf16 %v54
    %v119 = vunpack.c.l.bf16 %v55
    %v120 = vunpack.c.l.bf16 %v56
    %v121 = vunpack.c.l.bf16 %v57
    %v122 = vunpack.c.l.bf16 %v58
    %v123 = vunpack.c.l.bf16 %v59
    %v124 = vunpack.c.l.bf16 %v60
    %v125 = vunpack.c.l.bf16 %v61
    %v126 = vunpack.c.l.bf16 %v62
    %v127 = vunpack.c.l.bf16 %v63
    %v128 = vunpack.c.l.bf16 %v64
    %v129 = vunpack.c.l.bf16 %v65
    %v130 = vunpack.c.l.bf16 %v66
    %v131 = vunpack.c.l.bf16 %v67
    %v132 = vunpack.c.l.bf16 %v68
    %v133 = vunpack.c.l.bf16 %v69
    %v134 = vunpack.c.l.bf16 %v70
    %v135 = vunpack.c.l.bf16 %v71
    %v136 = vunpack.c.l.bf16 %v72
    %v137 = vunpack.c.l.bf16 %v73
    %v138 = vunpack.c.l.bf16 %v74
    %v139 = vunpack.c.l.bf16 %v75
    %v140 = vunpack.c.l.bf16 %v76
    %v141 = vunpack.c.l.bf16 %v77
    %v142 = vunpack.c.l.bf16 %v78
    %v143 = vunpack.c.l.bf16 %v79
    %v144 = vunpack.c.l.bf16 %v80
    %v145 = vunpack.c.l.bf16 %v81
    %v146 = vunpack.c.l.bf16 %v82
    %v147 = vunpack.c.l.bf16 %v83
    %v148 = vunpack.c.l.bf16 %v84
    %v149 = vunpack.c.l.bf16 %v85
    %v150 = vunpack.c.l.bf16 %v86
    %v151 = vunpack.c.l.bf16 %v87
    %v152 = vunpack.c.l.bf16 %v88
    %v153 = vunpack.c.l.bf16 %v89
    %v154 = vunpack.c.l.bf16 %v90
    %v155 = vunpack.c.l.bf16 %v91
    %v156 = vunpack.c.l.bf16 %v92
    %v157 = vunpack.c.l.bf16 %v93
    %v158 = vunpack.c.l.bf16 %v94
    %v159 = vunpack.c.l.bf16 %v95
    %v160 = vunpack.c.l.bf16 %v96
    %v161 = vunpack.c.l.bf16 %v97
    %v162 = vunpack.c.l.bf16 %v98
    %v163 = vunpack.c.l.bf16 %v99
    %v164 = vunpack.c.l.bf16 %v100
    %v165 = vunpack.c.l.bf16 %v101
    %v166 = vunpack.c.l.bf16 %v102
    %v167 = vunpack.c.l.bf16 %v103
    %v168 = vunpack.c.l.bf16 %v104
    %v169 = vunpack.c.l.bf16 %v105
    %v170 = vunpack.c.l.bf16 %v106
    %v171 = vunpack.c.l.bf16 %v107
    %v172 = vunpack.c.l.bf16 %v108
    %v173 = vunpack.c.l.bf16 %v109
    %v174 = vadd.f32 %v110, %v112
    %v175 = vadd.f32 %v111, %v113
    %v176 = vadd.f32 %v114, %v116
    %v177 = vadd.f32 %v115, %v117
    %v178 = vadd.f32 %v118, %v120
    %v179 = vadd.f32 %v119, %v121
    %v180 = vadd.f32 %v122, %v124
    %v181 = vadd.f32 %v123, %v125
    %v182 = vadd.f32 %v126, %v128
    %v183 = vadd.f32 %v127, %v129
    %v184 = vadd.f32 %v130, %v132
    %v185 = vadd.f32 %v131, %v133
    %v186 = vadd.f32 %v134, %v136
    %v187 = vadd.f32 %v135, %v137
    %v188 = vadd.f32 %v138, %v140
    %v189 = vadd.f32 %v139, %v141
    %v190 = vadd.f32 %v142, %v144
    %v191 = vadd.f32 %v143, %v145
    %v192 = vadd.f32 %v146, %v148
    %v193 = vadd.f32 %v147, %v149
    %v194 = vadd.f32 %v150, %v152
    %v195 = vadd.f32 %v151, %v153
    %v196 = vadd.f32 %v154, %v156
    %v197 = vadd.f32 %v155, %v157
    %v198 = vadd.f32 %v158, %v160
    %v199 = vadd.f32 %v159, %v161
    %v200 = vadd.f32 %v162, %v164
    %v201 = vadd.f32 %v163, %v165
    %v202 = vadd.f32 %v166, %v168
    %v203 = vadd.f32 %v167, %v169
    %v204 = vadd.f32 %v170, %v172
    %v205 = vadd.f32 %v171, %v173
    %v238 = vcombine.high %v174, %v174
    %v240 = vunpack.c.l.s4 1983009808
    %v241 = vunpack.c.0.s8 %v240
    %v242 = vlaneseq
    %v243 = vshrl.u32 %v242, 7
    %v244 = vsub.s32 %v241, %v243
    %v245 = vrot.slane %v174, %v244
    %v247 = vunpack.c.l.s4 1983009808
    %v248 = vunpack.c.0.s8 %v247
    %v249 = vlaneseq
    %v250 = vshrl.u32 %v249, 7
    %v251 = vsub.s32 %v248, %v250
    %v252 = vrot.slane %v238, %v251
    %v253 = vcombine.high %v245, %v245
    %v254 = vcombine.high %v252, %v252
    %v255 = vcombine.high %v175, %v175
    %v257 = vunpack.c.l.s4 1983009808
    %v258 = vunpack.c.0.s8 %v257
    %v259 = vlaneseq
    %v260 = vshrl.u32 %v259, 7
    %v261 = vsub.s32 %v258, %v260
    %v262 = vrot.slane %v175, %v261
    %v264 = vunpack.c.l.s4 1983009808
    %v265 = vunpack.c.0.s8 %v264
    %v266 = vlaneseq
    %v267 = vshrl.u32 %v266, 7
    %v268 = vsub.s32 %v265, %v267
    %v269 = vrot.slane %v255, %v268
    %v270 = vcombine.high %v262, %v262
    %v271 = vcombine.high %v269, %v269
    %v272 = vcombine.high %v176, %v176
    %v274 = vunpack.c.l.s4 1983009808
    %v275 = vunpack.c.0.s8 %v274
    %v276 = vlaneseq
    %v277 = vshrl.u32 %v276, 7
    %v278 = vsub.s32 %v275, %v277
    %v279 = vrot.slane %v176, %v278
    %v281 = vunpack.c.l.s4 1983009808
    %v282 = vunpack.c.0.s8 %v281
    %v283 = vlaneseq
    %v284 = vshrl.u32 %v283, 7
    %v285 = vsub.s32 %v282, %v284
    %v286 = vrot.slane %v272, %v285
    %v287 = vcombine.high %v279, %v279
    %v288 = vcombine.high %v286, %v286
    %v289 = vcombine.high %v177, %v177
    %v291 = vunpack.c.l.s4 1983009808
    %v292 = vunpack.c.0.s8 %v291
    %v293 = vlaneseq
    %v294 = vshrl.u32 %v293, 7
    %v295 = vsub.s32 %v292, %v294
    %v296 = vrot.slane %v177, %v295
    %v298 = vunpack.c.l.s4 1983009808
    %v299 = vunpack.c.0.s8 %v298
    %v300 = vlaneseq
    %v301 = vshrl.u32 %v300, 7
    %v302 = vsub.s32 %v299, %v301
    %v303 = vrot.slane %v289, %v302
    %v304 = vcombine.high %v296, %v296
    %v305 = vcombine.high %v303, %v303
    %v306 = vcombine.high %v178, %v178
    %v308 = vunpack.c.l.s4 1983009808
    %v309 = vunpack.c.0.s8 %v308
    %v310 = vlaneseq
    %v311 = vshrl.u32 %v310, 7
    %v312 = vsub.s32 %v309, %v311
    %v313 = vrot.slane %v178, %v312
    %v315 = vunpack.c.l.s4 1983009808
    %v316 = vunpack.c.0.s8 %v315
    %v317 = vlaneseq
    %v318 = vshrl.u32 %v317, 7
    %v319 = vsub.s32 %v316, %v318
    %v320 = vrot.slane %v306, %v319
    %v321 = vcombine.high %v313, %v313
    %v322 = vcombine.high %v320, %v320
    %v323 = vcombine.high %v179, %v179
    %v325 = vunpack.c.l.s4 1983009808
    %v326 = vunpack.c.0.s8 %v325
    %v327 = vlaneseq
    %v328 = vshrl.u32 %v327, 7
    %v329 = vsub.s32 %v326, %v328
    %v330 = vrot.slane %v179, %v329
    %v332 = vunpack.c.l.s4 1983009808
    %v333 = vunpack.c.0.s8 %v332
    %v334 = vlaneseq
    %v335 = vshrl.u32 %v334, 7
    %v336 = vsub.s32 %v333, %v335
    %v337 = vrot.slane %v323, %v336
    %v338 = vcombine.high %v330, %v330
    %v339 = vcombine.high %v337, %v337
    %v340 = vcombine.high %v180, %v180
    %v342 = vunpack.c.l.s4 1983009808
    %v343 = vunpack.c.0.s8 %v342
    %v344 = vlaneseq
    %v345 = vshrl.u32 %v344, 7
    %v346 = vsub.s32 %v343, %v345
    %v347 = vrot.slane %v180, %v346
    %v349 = vunpack.c.l.s4 1983009808
    %v350 = vunpack.c.0.s8 %v349
    %v351 = vlaneseq
    %v352 = vshrl.u32 %v351, 7
    %v353 = vsub.s32 %v350, %v352
    %v354 = vrot.slane %v340, %v353
    %v355 = vcombine.high %v347, %v347
    %v356 = vcombine.high %v354, %v354
    %v357 = vcombine.high %v181, %v181
    %v359 = vunpack.c.l.s4 1983009808
    %v360 = vunpack.c.0.s8 %v359
    %v361 = vlaneseq
    %v362 = vshrl.u32 %v361, 7
    %v363 = vsub.s32 %v360, %v362
    %v364 = vrot.slane %v181, %v363
    %v366 = vunpack.c.l.s4 1983009808
    %v367 = vunpack.c.0.s8 %v366
    %v368 = vlaneseq
    %v369 = vshrl.u32 %v368, 7
    %v370 = vsub.s32 %v367, %v369
    %v371 = vrot.slane %v357, %v370
    %v372 = vcombine.high %v364, %v364
    %v373 = vcombine.high %v371, %v371
    %v374 = vcombine.high %v182, %v182
    %v376 = vunpack.c.l.s4 1983009808
    %v377 = vunpack.c.0.s8 %v376
    %v378 = vlaneseq
    %v379 = vshrl.u32 %v378, 7
    %v380 = vsub.s32 %v377, %v379
    %v381 = vrot.slane %v182, %v380
    %v383 = vunpack.c.l.s4 1983009808
    %v384 = vunpack.c.0.s8 %v383
    %v385 = vlaneseq
    %v386 = vshrl.u32 %v385, 7
    %v387 = vsub.s32 %v384, %v386
    %v388 = vrot.slane %v374, %v387
    %v389 = vcombine.high %v381, %v381
    %v390 = vcombine.high %v388, %v388
    %v391 = vcombine.high %v183, %v183
    %v393 = vunpack.c.l.s4 1983009808
    %v394 = vunpack.c.0.s8 %v393
    %v395 = vlaneseq
    %v396 = vshrl.u32 %v395, 7
    %v397 = vsub.s32 %v394, %v396
    %v398 = vrot.slane %v183, %v397
    %v400 = vunpack.c.l.s4 1983009808
    %v401 = vunpack.c.0.s8 %v400
    %v402 = vlaneseq
    %v403 = vshrl.u32 %v402, 7
    %v404 = vsub.s32 %v401, %v403
    %v405 = vrot.slane %v391, %v404
    %v406 = vcombine.high %v398, %v398
    %v407 = vcombine.high %v405, %v405
    %v408 = vcombine.high %v184, %v184
    %v410 = vunpack.c.l.s4 1983009808
    %v411 = vunpack.c.0.s8 %v410
    %v412 = vlaneseq
    %v413 = vshrl.u32 %v412, 7
    %v414 = vsub.s32 %v411, %v413
    %v415 = vrot.slane %v184, %v414
    %v417 = vunpack.c.l.s4 1983009808
    %v418 = vunpack.c.0.s8 %v417
    %v419 = vlaneseq
    %v420 = vshrl.u32 %v419, 7
    %v421 = vsub.s32 %v418, %v420
    %v422 = vrot.slane %v408, %v421
    %v423 = vcombine.high %v415, %v415
    %v424 = vcombine.high %v422, %v422
    %v425 = vcombine.high %v185, %v185
    %v427 = vunpack.c.l.s4 1983009808
    %v428 = vunpack.c.0.s8 %v427
    %v429 = vlaneseq
    %v430 = vshrl.u32 %v429, 7
    %v431 = vsub.s32 %v428, %v430
    %v432 = vrot.slane %v185, %v431
    %v434 = vunpack.c.l.s4 1983009808
    %v435 = vunpack.c.0.s8 %v434
    %v436 = vlaneseq
    %v437 = vshrl.u32 %v436, 7
    %v438 = vsub.s32 %v435, %v437
    %v439 = vrot.slane %v425, %v438
    %v440 = vcombine.high %v432, %v432
    %v441 = vcombine.high %v439, %v439
    %v442 = vcombine.high %v186, %v186
    %v444 = vunpack.c.l.s4 1983009808
    %v445 = vunpack.c.0.s8 %v444
    %v446 = vlaneseq
    %v447 = vshrl.u32 %v446, 7
    %v448 = vsub.s32 %v445, %v447
    %v449 = vrot.slane %v186, %v448
    %v451 = vunpack.c.l.s4 1983009808
    %v452 = vunpack.c.0.s8 %v451
    %v453 = vlaneseq
    %v454 = vshrl.u32 %v453, 7
    %v455 = vsub.s32 %v452, %v454
    %v456 = vrot.slane %v442, %v455
    %v457 = vcombine.high %v449, %v449
    %v458 = vcombine.high %v456, %v456
    %v459 = vcombine.high %v187, %v187
    %v461 = vunpack.c.l.s4 1983009808
    %v462 = vunpack.c.0.s8 %v461
    %v463 = vlaneseq
    %v464 = vshrl.u32 %v463, 7
    %v465 = vsub.s32 %v462, %v464
    %v466 = vrot.slane %v187, %v465
    %v468 = vunpack.c.l.s4 1983009808
    %v469 = vunpack.c.0.s8 %v468
    %v470 = vlaneseq
    %v471 = vshrl.u32 %v470, 7
    %v472 = vsub.s32 %v469, %v471
    %v473 = vrot.slane %v459, %v472
    %v474 = vcombine.high %v466, %v466
    %v475 = vcombine.high %v473, %v473
    %v476 = vcombine.high %v188, %v188
    %v478 = vunpack.c.l.s4 1983009808
    %v479 = vunpack.c.0.s8 %v478
    %v480 = vlaneseq
    %v481 = vshrl.u32 %v480, 7
    %v482 = vsub.s32 %v479, %v481
    %v483 = vrot.slane %v188, %v482
    %v485 = vunpack.c.l.s4 1983009808
    %v486 = vunpack.c.0.s8 %v485
    %v487 = vlaneseq
    %v488 = vshrl.u32 %v487, 7
    %v489 = vsub.s32 %v486, %v488
    %v490 = vrot.slane %v476, %v489
    %v491 = vcombine.high %v483, %v483
    %v492 = vcombine.high %v490, %v490
    %v493 = vcombine.high %v189, %v189
    %v495 = vunpack.c.l.s4 1983009808
    %v496 = vunpack.c.0.s8 %v495
    %v497 = vlaneseq
    %v498 = vshrl.u32 %v497, 7
    %v499 = vsub.s32 %v496, %v498
    %v500 = vrot.slane %v189, %v499
    %v502 = vunpack.c.l.s4 1983009808
    %v503 = vunpack.c.0.s8 %v502
    %v504 = vlaneseq
    %v505 = vshrl.u32 %v504, 7
    %v506 = vsub.s32 %v503, %v505
    %v507 = vrot.slane %v493, %v506
    %v508 = vcombine.high %v500, %v500
    %v509 = vcombine.high %v507, %v507
    %v510 = vcombine.high %v190, %v190
    %v512 = vunpack.c.l.s4 1983009808
    %v513 = vunpack.c.0.s8 %v512
    %v514 = vlaneseq
    %v515 = vshrl.u32 %v514, 7
    %v516 = vsub.s32 %v513, %v515
    %v517 = vrot.slane %v190, %v516
    %v519 = vunpack.c.l.s4 1983009808
    %v520 = vunpack.c.0.s8 %v519
    %v521 = vlaneseq
    %v522 = vshrl.u32 %v521, 7
    %v523 = vsub.s32 %v520, %v522
    %v524 = vrot.slane %v510, %v523
    %v525 = vcombine.high %v517, %v517
    %v526 = vcombine.high %v524, %v524
    %v527 = vcombine.high %v191, %v191
    %v529 = vunpack.c.l.s4 1983009808
    %v530 = vunpack.c.0.s8 %v529
    %v531 = vlaneseq
    %v532 = vshrl.u32 %v531, 7
    %v533 = vsub.s32 %v530, %v532
    %v534 = vrot.slane %v191, %v533
    %v536 = vunpack.c.l.s4 1983009808
    %v537 = vunpack.c.0.s8 %v536
    %v538 = vlaneseq
    %v539 = vshrl.u32 %v538, 7
    %v540 = vsub.s32 %v537, %v539
    %v541 = vrot.slane %v527, %v540
    %v542 = vcombine.high %v534, %v534
    %v543 = vcombine.high %v541, %v541
    %v544 = vcombine.high %v192, %v192
    %v546 = vunpack.c.l.s4 1983009808
    %v547 = vunpack.c.0.s8 %v546
    %v548 = vlaneseq
    %v549 = vshrl.u32 %v548, 7
    %v550 = vsub.s32 %v547, %v549
    %v551 = vrot.slane %v192, %v550
    %v553 = vunpack.c.l.s4 1983009808
    %v554 = vunpack.c.0.s8 %v553
    %v555 = vlaneseq
    %v556 = vshrl.u32 %v555, 7
    %v557 = vsub.s32 %v554, %v556
    %v558 = vrot.slane %v544, %v557
    %v559 = vcombine.high %v551, %v551
    %v560 = vcombine.high %v558, %v558
    %v561 = vcombine.high %v193, %v193
    %v563 = vunpack.c.l.s4 1983009808
    %v564 = vunpack.c.0.s8 %v563
    %v565 = vlaneseq
    %v566 = vshrl.u32 %v565, 7
    %v567 = vsub.s32 %v564, %v566
    %v568 = vrot.slane %v193, %v567
    %v570 = vunpack.c.l.s4 1983009808
    %v571 = vunpack.c.0.s8 %v570
    %v572 = vlaneseq
    %v573 = vshrl.u32 %v572, 7
    %v574 = vsub.s32 %v571, %v573
    %v575 = vrot.slane %v561, %v574
    %v576 = vcombine.high %v568, %v568
    %v577 = vcombine.high %v575, %v575
    %v578 = vcombine.high %v194, %v194
    %v580 = vunpack.c.l.s4 1983009808
    %v581 = vunpack.c.0.s8 %v580
    %v582 = vlaneseq
    %v583 = vshrl.u32 %v582, 7
    %v584 = vsub.s32 %v581, %v583
    %v585 = vrot.slane %v194, %v584
    %v587 = vunpack.c.l.s4 1983009808
    %v588 = vunpack.c.0.s8 %v587
    %v589 = vlaneseq
    %v590 = vshrl.u32 %v589, 7
    %v591 = vsub.s32 %v588, %v590
    %v592 = vrot.slane %v578, %v591
    %v593 = vcombine.high %v585, %v585
    %v594 = vcombine.high %v592, %v592
    %v595 = vcombine.high %v195, %v195
    %v597 = vunpack.c.l.s4 1983009808
    %v598 = vunpack.c.0.s8 %v597
    %v599 = vlaneseq
    %v600 = vshrl.u32 %v599, 7
    %v601 = vsub.s32 %v598, %v600
    %v602 = vrot.slane %v195, %v601
    %v604 = vunpack.c.l.s4 1983009808
    %v605 = vunpack.c.0.s8 %v604
    %v606 = vlaneseq
    %v607 = vshrl.u32 %v606, 7
    %v608 = vsub.s32 %v605, %v607
    %v609 = vrot.slane %v595, %v608
    %v610 = vcombine.high %v602, %v602
    %v611 = vcombine.high %v609, %v609
    %v612 = vcombine.high %v196, %v196
    %v614 = vunpack.c.l.s4 1983009808
    %v615 = vunpack.c.0.s8 %v614
    %v616 = vlaneseq
    %v617 = vshrl.u32 %v616, 7
    %v618 = vsub.s32 %v615, %v617
    %v619 = vrot.slane %v196, %v618
    %v621 = vunpack.c.l.s4 1983009808
    %v622 = vunpack.c.0.s8 %v621
    %v623 = vlaneseq
    %v624 = vshrl.u32 %v623, 7
    %v625 = vsub.s32 %v622, %v624
    %v626 = vrot.slane %v612, %v625
    %v627 = vcombine.high %v619, %v619
    %v628 = vcombine.high %v626, %v626
    %v629 = vcombine.high %v197, %v197
    %v631 = vunpack.c.l.s4 1983009808
    %v632 = vunpack.c.0.s8 %v631
    %v633 = vlaneseq
    %v634 = vshrl.u32 %v633, 7
    %v635 = vsub.s32 %v632, %v634
    %v636 = vrot.slane %v197, %v635
    %v638 = vunpack.c.l.s4 1983009808
    %v639 = vunpack.c.0.s8 %v638
    %v640 = vlaneseq
    %v641 = vshrl.u32 %v640, 7
    %v642 = vsub.s32 %v639, %v641
    %v643 = vrot.slane %v629, %v642
    %v644 = vcombine.high %v636, %v636
    %v645 = vcombine.high %v643, %v643
    %v646 = vcombine.high %v198, %v198
    %v648 = vunpack.c.l.s4 1983009808
    %v649 = vunpack.c.0.s8 %v648
    %v650 = vlaneseq
    %v651 = vshrl.u32 %v650, 7
    %v652 = vsub.s32 %v649, %v651
    %v653 = vrot.slane %v198, %v652
    %v655 = vunpack.c.l.s4 1983009808
    %v656 = vunpack.c.0.s8 %v655
    %v657 = vlaneseq
    %v658 = vshrl.u32 %v657, 7
    %v659 = vsub.s32 %v656, %v658
    %v660 = vrot.slane %v646, %v659
    %v661 = vcombine.high %v653, %v653
    %v662 = vcombine.high %v660, %v660
    %v663 = vcombine.high %v199, %v199
    %v665 = vunpack.c.l.s4 1983009808
    %v666 = vunpack.c.0.s8 %v665
    %v667 = vlaneseq
    %v668 = vshrl.u32 %v667, 7
    %v669 = vsub.s32 %v666, %v668
    %v670 = vrot.slane %v199, %v669
    %v672 = vunpack.c.l.s4 1983009808
    %v673 = vunpack.c.0.s8 %v672
    %v674 = vlaneseq
    %v675 = vshrl.u32 %v674, 7
    %v676 = vsub.s32 %v673, %v675
    %v677 = vrot.slane %v663, %v676
    %v678 = vcombine.high %v670, %v670
    %v679 = vcombine.high %v677, %v677
    %v680 = vcombine.high %v200, %v200
    %v682 = vunpack.c.l.s4 1983009808
    %v683 = vunpack.c.0.s8 %v682
    %v684 = vlaneseq
    %v685 = vshrl.u32 %v684, 7
    %v686 = vsub.s32 %v683, %v685
    %v687 = vrot.slane %v200, %v686
    %v689 = vunpack.c.l.s4 1983009808
    %v690 = vunpack.c.0.s8 %v689
    %v691 = vlaneseq
    %v692 = vshrl.u32 %v691, 7
    %v693 = vsub.s32 %v690, %v692
    %v694 = vrot.slane %v680, %v693
    %v695 = vcombine.high %v687, %v687
    %v696 = vcombine.high %v694, %v694
    %v697 = vcombine.high %v201, %v201
    %v699 = vunpack.c.l.s4 1983009808
    %v700 = vunpack.c.0.s8 %v699
    %v701 = vlaneseq
    %v702 = vshrl.u32 %v701, 7
    %v703 = vsub.s32 %v700, %v702
    %v704 = vrot.slane %v201, %v703
    %v706 = vunpack.c.l.s4 1983009808
    %v707 = vunpack.c.0.s8 %v706
    %v708 = vlaneseq
    %v709 = vshrl.u32 %v708, 7
    %v710 = vsub.s32 %v707, %v709
    %v711 = vrot.slane %v697, %v710
    %v712 = vcombine.high %v704, %v704
    %v713 = vcombine.high %v711, %v711
    %v714 = vcombine.high %v202, %v202
    %v716 = vunpack.c.l.s4 1983009808
    %v717 = vunpack.c.0.s8 %v716
    %v718 = vlaneseq
    %v719 = vshrl.u32 %v718, 7
    %v720 = vsub.s32 %v717, %v719
    %v721 = vrot.slane %v202, %v720
    %v723 = vunpack.c.l.s4 1983009808
    %v724 = vunpack.c.0.s8 %v723
    %v725 = vlaneseq
    %v726 = vshrl.u32 %v725, 7
    %v727 = vsub.s32 %v724, %v726
    %v728 = vrot.slane %v714, %v727
    %v729 = vcombine.high %v721, %v721
    %v730 = vcombine.high %v728, %v728
    %v731 = vcombine.high %v203, %v203
    %v733 = vunpack.c.l.s4 1983009808
    %v734 = vunpack.c.0.s8 %v733
    %v735 = vlaneseq
    %v736 = vshrl.u32 %v735, 7
    %v737 = vsub.s32 %v734, %v736
    %v738 = vrot.slane %v203, %v737
    %v740 = vunpack.c.l.s4 1983009808
    %v741 = vunpack.c.0.s8 %v740
    %v742 = vlaneseq
    %v743 = vshrl.u32 %v742, 7
    %v744 = vsub.s32 %v741, %v743
    %v745 = vrot.slane %v731, %v744
    %v746 = vcombine.high %v738, %v738
    %v747 = vcombine.high %v745, %v745
    %v748 = vcombine.high %v204, %v204
    %v750 = vunpack.c.l.s4 1983009808
    %v751 = vunpack.c.0.s8 %v750
    %v752 = vlaneseq
    %v753 = vshrl.u32 %v752, 7
    %v754 = vsub.s32 %v751, %v753
    %v755 = vrot.slane %v204, %v754
    %v757 = vunpack.c.l.s4 1983009808
    %v758 = vunpack.c.0.s8 %v757
    %v759 = vlaneseq
    %v760 = vshrl.u32 %v759, 7
    %v761 = vsub.s32 %v758, %v760
    %v762 = vrot.slane %v748, %v761
    %v763 = vcombine.high %v755, %v755
    %v764 = vcombine.high %v762, %v762
    %v765 = vcombine.high %v205, %v205
    %v767 = vunpack.c.l.s4 1983009808
    %v768 = vunpack.c.0.s8 %v767
    %v769 = vlaneseq
    %v770 = vshrl.u32 %v769, 7
    %v771 = vsub.s32 %v768, %v770
    %v772 = vrot.slane %v205, %v771
    %v774 = vunpack.c.l.s4 1983009808
    %v775 = vunpack.c.0.s8 %v774
    %v776 = vlaneseq
    %v777 = vshrl.u32 %v776, 7
    %v778 = vsub.s32 %v775, %v777
    %v779 = vrot.slane %v765, %v778
    %v780 = vcombine.high %v772, %v772
    %v781 = vcombine.high %v779, %v779
    %v910 = vrot.slane %v245, 7
    %v911 = vrot.slane %v910, 2
    %v912 = vrot.slane %v253, 7
    %v913 = vrot.slane %v912, 2
    %v914 = vrot.slane %v252, 7
    %v915 = vrot.slane %v914, 2
    %v916 = vrot.slane %v254, 7
    %v917 = vrot.slane %v916, 2
    %v918 = vrot.slane %v262, 7
    %v919 = vrot.slane %v918, 2
    %v920 = vrot.slane %v270, 7
    %v921 = vrot.slane %v920, 2
    %v922 = vrot.slane %v269, 7
    %v923 = vrot.slane %v922, 2
    %v924 = vrot.slane %v271, 7
    %v925 = vrot.slane %v924, 2
    %v926 = vrot.slane %v279, 7
    %v927 = vrot.slane %v926, 2
    %v928 = vrot.slane %v287, 7
    %v929 = vrot.slane %v928, 2
    %v930 = vrot.slane %v286, 7
    %v931 = vrot.slane %v930, 2
    %v932 = vrot.slane %v288, 7
    %v933 = vrot.slane %v932, 2
    %v934 = vrot.slane %v296, 7
    %v935 = vrot.slane %v934, 2
    %v936 = vrot.slane %v304, 7
    %v937 = vrot.slane %v936, 2
    %v938 = vrot.slane %v303, 7
    %v939 = vrot.slane %v938, 2
    %v940 = vrot.slane %v305, 7
    %v941 = vrot.slane %v940, 2
    %v942 = vrot.slane %v313, 7
    %v943 = vrot.slane %v942, 2
    %v944 = vrot.slane %v321, 7
    %v945 = vrot.slane %v944, 2
    %v946 = vrot.slane %v320, 7
    %v947 = vrot.slane %v946, 2
    %v948 = vrot.slane %v322, 7
    %v949 = vrot.slane %v948, 2
    %v950 = vrot.slane %v330, 7
    %v951 = vrot.slane %v950, 2
    %v952 = vrot.slane %v338, 7
    %v953 = vrot.slane %v952, 2
    %v954 = vrot.slane %v337, 7
    %v955 = vrot.slane %v954, 2
    %v956 = vrot.slane %v339, 7
    %v957 = vrot.slane %v956, 2
    %v958 = vrot.slane %v347, 7
    %v959 = vrot.slane %v958, 2
    %v960 = vrot.slane %v355, 7
    %v961 = vrot.slane %v960, 2
    %v962 = vrot.slane %v354, 7
    %v963 = vrot.slane %v962, 2
    %v964 = vrot.slane %v356, 7
    %v965 = vrot.slane %v964, 2
    %v966 = vrot.slane %v364, 7
    %v967 = vrot.slane %v966, 2
    %v968 = vrot.slane %v372, 7
    %v969 = vrot.slane %v968, 2
    %v970 = vrot.slane %v371, 7
    %v971 = vrot.slane %v970, 2
    %v972 = vrot.slane %v373, 7
    %v973 = vrot.slane %v972, 2
    %v974 = vrot.slane %v381, 7
    %v975 = vrot.slane %v974, 2
    %v976 = vrot.slane %v389, 7
    %v977 = vrot.slane %v976, 2
    %v978 = vrot.slane %v388, 7
    %v979 = vrot.slane %v978, 2
    %v980 = vrot.slane %v390, 7
    %v981 = vrot.slane %v980, 2
    %v982 = vrot.slane %v398, 7
    %v983 = vrot.slane %v982, 2
    %v984 = vrot.slane %v406, 7
    %v985 = vrot.slane %v984, 2
    %v986 = vrot.slane %v405, 7
    %v987 = vrot.slane %v986, 2
    %v988 = vrot.slane %v407, 7
    %v989 = vrot.slane %v988, 2
    %v990 = vrot.slane %v415, 7
    %v991 = vrot.slane %v990, 2
    %v992 = vrot.slane %v423, 7
    %v993 = vrot.slane %v992, 2
    %v994 = vrot.slane %v422, 7
    %v995 = vrot.slane %v994, 2
    %v996 = vrot.slane %v424, 7
    %v997 = vrot.slane %v996, 2
    %v998 = vrot.slane %v432, 7
    %v999 = vrot.slane %v998, 2
    %v1000 = vrot.slane %v440, 7
    %v1001 = vrot.slane %v1000, 2
    %v1002 = vrot.slane %v439, 7
    %v1003 = vrot.slane %v1002, 2
    %v1004 = vrot.slane %v441, 7
    %v1005 = vrot.slane %v1004, 2
    %v1006 = vrot.slane %v449, 7
    %v1007 = vrot.slane %v1006, 2
    %v1008 = vrot.slane %v457, 7
    %v1009 = vrot.slane %v1008, 2
    %v1010 = vrot.slane %v456, 7
    %v1011 = vrot.slane %v1010, 2
    %v1012 = vrot.slane %v458, 7
    %v1013 = vrot.slane %v1012, 2
    %v1014 = vrot.slane %v466, 7
    %v1015 = vrot.slane %v1014, 2
    %v1016 = vrot.slane %v474, 7
    %v1017 = vrot.slane %v1016, 2
    %v1018 = vrot.slane %v473, 7
    %v1019 = vrot.slane %v1018, 2
    %v1020 = vrot.slane %v475, 7
    %v1021 = vrot.slane %v1020, 2
    %v1022 = vrot.slane %v483, 7
    %v1023 = vrot.slane %v1022, 2
    %v1024 = vrot.slane %v491, 7
    %v1025 = vrot.slane %v1024, 2
    %v1026 = vrot.slane %v490, 7
    %v1027 = vrot.slane %v1026, 2
    %v1028 = vrot.slane %v492, 7
    %v1029 = vrot.slane %v1028, 2
    %v1030 = vrot.slane %v500, 7
    %v1031 = vrot.slane %v1030, 2
    %v1032 = vrot.slane %v508, 7
    %v1033 = vrot.slane %v1032, 2
    %v1034 = vrot.slane %v507, 7
    %v1035 = vrot.slane %v1034, 2
    %v1036 = vrot.slane %v509, 7
    %v1037 = vrot.slane %v1036, 2
    %v1038 = vrot.slane %v517, 7
    %v1039 = vrot.slane %v1038, 2
    %v1040 = vrot.slane %v525, 7
    %v1041 = vrot.slane %v1040, 2
    %v1042 = vrot.slane %v524, 7
    %v1043 = vrot.slane %v1042, 2
    %v1044 = vrot.slane %v526, 7
    %v1045 = vrot.slane %v1044, 2
    %v1046 = vrot.slane %v534, 7
    %v1047 = vrot.slane %v1046, 2
    %v1048 = vrot.slane %v542, 7
    %v1049 = vrot.slane %v1048, 2
    %v1050 = vrot.slane %v541, 7
    %v1051 = vrot.slane %v1050, 2
    %v1052 = vrot.slane %v543, 7
    %v1053 = vrot.slane %v1052, 2
    %v1054 = vrot.slane %v551, 7
    %v1055 = vrot.slane %v1054, 2
    %v1056 = vrot.slane %v559, 7
    %v1057 = vrot.slane %v1056, 2
    %v1058 = vrot.slane %v558, 7
    %v1059 = vrot.slane %v1058, 2
    %v1060 = vrot.slane %v560, 7
    %v1061 = vrot.slane %v1060, 2
    %v1062 = vrot.slane %v568, 7
    %v1063 = vrot.slane %v1062, 2
    %v1064 = vrot.slane %v576, 7
    %v1065 = vrot.slane %v1064, 2
    %v1066 = vrot.slane %v575, 7
    %v1067 = vrot.slane %v1066, 2
    %v1068 = vrot.slane %v577, 7
    %v1069 = vrot.slane %v1068, 2
    %v1070 = vrot.slane %v585, 7
    %v1071 = vrot.slane %v1070, 2
    %v1072 = vrot.slane %v593, 7
    %v1073 = vrot.slane %v1072, 2
    %v1074 = vrot.slane %v592, 7
    %v1075 = vrot.slane %v1074, 2
    %v1076 = vrot.slane %v594, 7
    %v1077 = vrot.slane %v1076, 2
    %v1078 = vrot.slane %v602, 7
    %v1079 = vrot.slane %v1078, 2
    %v1080 = vrot.slane %v610, 7
    %v1081 = vrot.slane %v1080, 2
    %v1082 = vrot.slane %v609, 7
    %v1083 = vrot.slane %v1082, 2
    %v1084 = vrot.slane %v611, 7
    %v1085 = vrot.slane %v1084, 2
    %v1086 = vrot.slane %v619, 7
    %v1087 = vrot.slane %v1086, 2
    %v1088 = vrot.slane %v627, 7
    %v1089 = vrot.slane %v1088, 2
    %v1090 = vrot.slane %v626, 7
    %v1091 = vrot.slane %v1090, 2
    %v1092 = vrot.slane %v628, 7
    %v1093 = vrot.slane %v1092, 2
    %v1094 = vrot.slane %v636, 7
    %v1095 = vrot.slane %v1094, 2
    %v1096 = vrot.slane %v644, 7
    %v1097 = vrot.slane %v1096, 2
    %v1098 = vrot.slane %v643, 7
    %v1099 = vrot.slane %v1098, 2
    %v1100 = vrot.slane %v645, 7
    %v1101 = vrot.slane %v1100, 2
    %v1102 = vrot.slane %v653, 7
    %v1103 = vrot.slane %v1102, 2
    %v1104 = vrot.slane %v661, 7
    %v1105 = vrot.slane %v1104, 2
    %v1106 = vrot.slane %v660, 7
    %v1107 = vrot.slane %v1106, 2
    %v1108 = vrot.slane %v662, 7
    %v1109 = vrot.slane %v1108, 2
    %v1110 = vrot.slane %v670, 7
    %v1111 = vrot.slane %v1110, 2
    %v1112 = vrot.slane %v678, 7
    %v1113 = vrot.slane %v1112, 2
    %v1114 = vrot.slane %v677, 7
    %v1115 = vrot.slane %v1114, 2
    %v1116 = vrot.slane %v679, 7
    %v1117 = vrot.slane %v1116, 2
    %v1118 = vrot.slane %v687, 7
    %v1119 = vrot.slane %v1118, 2
    %v1120 = vrot.slane %v695, 7
    %v1121 = vrot.slane %v1120, 2
    %v1122 = vrot.slane %v694, 7
    %v1123 = vrot.slane %v1122, 2
    %v1124 = vrot.slane %v696, 7
    %v1125 = vrot.slane %v1124, 2
    %v1126 = vrot.slane %v704, 7
    %v1127 = vrot.slane %v1126, 2
    %v1128 = vrot.slane %v712, 7
    %v1129 = vrot.slane %v1128, 2
    %v1130 = vrot.slane %v711, 7
    %v1131 = vrot.slane %v1130, 2
    %v1132 = vrot.slane %v713, 7
    %v1133 = vrot.slane %v1132, 2
    %v1134 = vrot.slane %v721, 7
    %v1135 = vrot.slane %v1134, 2
    %v1136 = vrot.slane %v729, 7
    %v1137 = vrot.slane %v1136, 2
    %v1138 = vrot.slane %v728, 7
    %v1139 = vrot.slane %v1138, 2
    %v1140 = vrot.slane %v730, 7
    %v1141 = vrot.slane %v1140, 2
    %v1142 = vrot.slane %v738, 7
    %v1143 = vrot.slane %v1142, 2
    %v1144 = vrot.slane %v746, 7
    %v1145 = vrot.slane %v1144, 2
    %v1146 = vrot.slane %v745, 7
    %v1147 = vrot.slane %v1146, 2
    %v1148 = vrot.slane %v747, 7
    %v1149 = vrot.slane %v1148, 2
    %v1150 = vrot.slane %v755, 7
    %v1151 = vrot.slane %v1150, 2
    %v1152 = vrot.slane %v763, 7
    %v1153 = vrot.slane %v1152, 2
    %v1154 = vrot.slane %v762, 7
    %v1155 = vrot.slane %v1154, 2
    %v1156 = vrot.slane %v764, 7
    %v1157 = vrot.slane %v1156, 2
    %v1158 = vrot.slane %v772, 7
    %v1159 = vrot.slane %v1158, 2
    %v1160 = vrot.slane %v780, 7
    %v1161 = vrot.slane %v1160, 2
    %v1162 = vrot.slane %v779, 7
    %v1163 = vrot.slane %v1162, 2
    %v1164 = vrot.slane %v781, 7
    %v1165 = vrot.slane %v1164, 2
    %v1294 = vadd.f32 %v245, %v911
    %v1295 = vadd.f32 %v253, %v913
    %v1296 = vadd.f32 %v252, %v915
    %v1297 = vadd.f32 %v254, %v917
    %v1298 = vadd.f32 %v262, %v919
    %v1299 = vadd.f32 %v270, %v921
    %v1300 = vadd.f32 %v269, %v923
    %v1301 = vadd.f32 %v271, %v925
    %v1302 = vadd.f32 %v279, %v927
    %v1303 = vadd.f32 %v287, %v929
    %v1304 = vadd.f32 %v286, %v931
    %v1305 = vadd.f32 %v288, %v933
    %v1306 = vadd.f32 %v296, %v935
    %v1307 = vadd.f32 %v304, %v937
    %v1308 = vadd.f32 %v303, %v939
    %v1309 = vadd.f32 %v305, %v941
    %v1310 = vadd.f32 %v313, %v943
    %v1311 = vadd.f32 %v321, %v945
    %v1312 = vadd.f32 %v320, %v947
    %v1313 = vadd.f32 %v322, %v949
    %v1314 = vadd.f32 %v330, %v951
    %v1315 = vadd.f32 %v338, %v953
    %v1316 = vadd.f32 %v337, %v955
    %v1317 = vadd.f32 %v339, %v957
    %v1318 = vadd.f32 %v347, %v959
    %v1319 = vadd.f32 %v355, %v961
    %v1320 = vadd.f32 %v354, %v963
    %v1321 = vadd.f32 %v356, %v965
    %v1322 = vadd.f32 %v364, %v967
    %v1323 = vadd.f32 %v372, %v969
    %v1324 = vadd.f32 %v371, %v971
    %v1325 = vadd.f32 %v373, %v973
    %v1326 = vadd.f32 %v381, %v975
    %v1327 = vadd.f32 %v389, %v977
    %v1328 = vadd.f32 %v388, %v979
    %v1329 = vadd.f32 %v390, %v981
    %v1330 = vadd.f32 %v398, %v983
    %v1331 = vadd.f32 %v406, %v985
    %v1332 = vadd.f32 %v405, %v987
    %v1333 = vadd.f32 %v407, %v989
    %v1334 = vadd.f32 %v415, %v991
    %v1335 = vadd.f32 %v423, %v993
    %v1336 = vadd.f32 %v422, %v995
    %v1337 = vadd.f32 %v424, %v997
    %v1338 = vadd.f32 %v432, %v999
    %v1339 = vadd.f32 %v440, %v1001
    %v1340 = vadd.f32 %v439, %v1003
    %v1341 = vadd.f32 %v441, %v1005
    %v1342 = vadd.f32 %v449, %v1007
    %v1343 = vadd.f32 %v457, %v1009
    %v1344 = vadd.f32 %v456, %v1011
    %v1345 = vadd.f32 %v458, %v1013
    %v1346 = vadd.f32 %v466, %v1015
    %v1347 = vadd.f32 %v474, %v1017
    %v1348 = vadd.f32 %v473, %v1019
    %v1349 = vadd.f32 %v475, %v1021
    %v1350 = vadd.f32 %v483, %v1023
    %v1351 = vadd.f32 %v491, %v1025
    %v1352 = vadd.f32 %v490, %v1027
    %v1353 = vadd.f32 %v492, %v1029
    %v1354 = vadd.f32 %v500, %v1031
    %v1355 = vadd.f32 %v508, %v1033
    %v1356 = vadd.f32 %v507, %v1035
    %v1357 = vadd.f32 %v509, %v1037
    %v1358 = vadd.f32 %v517, %v1039
    %v1359 = vadd.f32 %v525, %v1041
    %v1360 = vadd.f32 %v524, %v1043
    %v1361 = vadd.f32 %v526, %v1045
    %v1362 = vadd.f32 %v534, %v1047
    %v1363 = vadd.f32 %v542, %v1049
    %v1364 = vadd.f32 %v541, %v1051
    %v1365 = vadd.f32 %v543, %v1053
    %v1366 = vadd.f32 %v551, %v1055
    %v1367 = vadd.f32 %v559, %v1057
    %v1368 = vadd.f32 %v558, %v1059
    %v1369 = vadd.f32 %v560, %v1061
    %v1370 = vadd.f32 %v568, %v1063
    %v1371 = vadd.f32 %v576, %v1065
    %v1372 = vadd.f32 %v575, %v1067
    %v1373 = vadd.f32 %v577, %v1069
    %v1374 = vadd.f32 %v585, %v1071
    %v1375 = vadd.f32 %v593, %v1073
    %v1376 = vadd.f32 %v592, %v1075
    %v1377 = vadd.f32 %v594, %v1077
    %v1378 = vadd.f32 %v602, %v1079
    %v1379 = vadd.f32 %v610, %v1081
    %v1380 = vadd.f32 %v609, %v1083
    %v1381 = vadd.f32 %v611, %v1085
    %v1382 = vadd.f32 %v619, %v1087
    %v1383 = vadd.f32 %v627, %v1089
    %v1384 = vadd.f32 %v626, %v1091
    %v1385 = vadd.f32 %v628, %v1093
    %v1386 = vadd.f32 %v636, %v1095
    %v1387 = vadd.f32 %v644, %v1097
    %v1388 = vadd.f32 %v643, %v1099
    %v1389 = vadd.f32 %v645, %v1101
    %v1390 = vadd.f32 %v653, %v1103
    %v1391 = vadd.f32 %v661, %v1105
    %v1392 = vadd.f32 %v660, %v1107
    %v1393 = vadd.f32 %v662, %v1109
    %v1394 = vadd.f32 %v670, %v1111
    %v1395 = vadd.f32 %v678, %v1113
    %v1396 = vadd.f32 %v677, %v1115
    %v1397 = vadd.f32 %v679, %v1117
    %v1398 = vadd.f32 %v687, %v1119
    %v1399 = vadd.f32 %v695, %v1121
    %v1400 = vadd.f32 %v694, %v1123
    %v1401 = vadd.f32 %v696, %v1125
    %v1402 = vadd.f32 %v704, %v1127
    %v1403 = vadd.f32 %v712, %v1129
    %v1404 = vadd.f32 %v711, %v1131
    %v1405 = vadd.f32 %v713, %v1133
    %v1406 = vadd.f32 %v721, %v1135
    %v1407 = vadd.f32 %v729, %v1137
    %v1408 = vadd.f32 %v728, %v1139
    %v1409 = vadd.f32 %v730, %v1141
    %v1410 = vadd.f32 %v738, %v1143
    %v1411 = vadd.f32 %v746, %v1145
    %v1412 = vadd.f32 %v745, %v1147
    %v1413 = vadd.f32 %v747, %v1149
    %v1414 = vadd.f32 %v755, %v1151
    %v1415 = vadd.f32 %v763, %v1153
    %v1416 = vadd.f32 %v762, %v1155
    %v1417 = vadd.f32 %v764, %v1157
    %v1418 = vadd.f32 %v772, %v1159
    %v1419 = vadd.f32 %v780, %v1161
    %v1420 = vadd.f32 %v779, %v1163
    %v1421 = vadd.f32 %v781, %v1165
    %v1422 = vmul.f32 %v1294, 0.25
    %v1423 = vmul.f32 %v1295, 0.25
    %v1424 = vmul.f32 %v1296, 0.25
    %v1425 = vmul.f32 %v1297, 0.25
    %v1426 = vmul.f32 %v1298, 0.25
    %v1427 = vmul.f32 %v1299, 0.25
    %v1428 = vmul.f32 %v1300, 0.25
    %v1429 = vmul.f32 %v1301, 0.25
    %v1430 = vmul.f32 %v1302, 0.25
    %v1431 = vmul.f32 %v1303, 0.25
    %v1432 = vmul.f32 %v1304, 0.25
    %v1433 = vmul.f32 %v1305, 0.25
    %v1434 = vmul.f32 %v1306, 0.25
    %v1435 = vmul.f32 %v1307, 0.25
    %v1436 = vmul.f32 %v1308, 0.25
    %v1437 = vmul.f32 %v1309, 0.25
    %v1438 = vmul.f32 %v1310, 0.25
    %v1439 = vmul.f32 %v1311, 0.25
    %v1440 = vmul.f32 %v1312, 0.25
    %v1441 = vmul.f32 %v1313, 0.25
    %v1442 = vmul.f32 %v1314, 0.25
    %v1443 = vmul.f32 %v1315, 0.25
    %v1444 = vmul.f32 %v1316, 0.25
    %v1445 = vmul.f32 %v1317, 0.25
    %v1446 = vmul.f32 %v1318, 0.25
    %v1447 = vmul.f32 %v1319, 0.25
    %v1448 = vmul.f32 %v1320, 0.25
    %v1449 = vmul.f32 %v1321, 0.25
    %v1450 = vmul.f32 %v1322, 0.25
    %v1451 = vmul.f32 %v1323, 0.25
    %v1452 = vmul.f32 %v1324, 0.25
    %v1453 = vmul.f32 %v1325, 0.25
    %v1454 = vmul.f32 %v1326, 0.25
    %v1455 = vmul.f32 %v1327, 0.25
    %v1456 = vmul.f32 %v1328, 0.25
    %v1457 = vmul.f32 %v1329, 0.25
    %v1458 = vmul.f32 %v1330, 0.25
    %v1459 = vmul.f32 %v1331, 0.25
    %v1460 = vmul.f32 %v1332, 0.25
    %v1461 = vmul.f32 %v1333, 0.25
    %v1462 = vmul.f32 %v1334, 0.25
    %v1463 = vmul.f32 %v1335, 0.25
    %v1464 = vmul.f32 %v1336, 0.25
    %v1465 = vmul.f32 %v1337, 0.25
    %v1466 = vmul.f32 %v1338, 0.25
    %v1467 = vmul.f32 %v1339, 0.25
    %v1468 = vmul.f32 %v1340, 0.25
    %v1469 = vmul.f32 %v1341, 0.25
    %v1470 = vmul.f32 %v1342, 0.25
    %v1471 = vmul.f32 %v1343, 0.25
    %v1472 = vmul.f32 %v1344, 0.25
    %v1473 = vmul.f32 %v1345, 0.25
    %v1474 = vmul.f32 %v1346, 0.25
    %v1475 = vmul.f32 %v1347, 0.25
    %v1476 = vmul.f32 %v1348, 0.25
    %v1477 = vmul.f32 %v1349, 0.25
    %v1478 = vmul.f32 %v1350, 0.25
    %v1479 = vmul.f32 %v1351, 0.25
    %v1480 = vmul.f32 %v1352, 0.25
    %v1481 = vmul.f32 %v1353, 0.25
    %v1482 = vmul.f32 %v1354, 0.25
    %v1483 = vmul.f32 %v1355, 0.25
    %v1484 = vmul.f32 %v1356, 0.25
    %v1485 = vmul.f32 %v1357, 0.25
    %v1486 = vmul.f32 %v1358, 0.25
    %v1487 = vmul.f32 %v1359, 0.25
    %v1488 = vmul.f32 %v1360, 0.25
    %v1489 = vmul.f32 %v1361, 0.25
    %v1490 = vmul.f32 %v1362, 0.25
    %v1491 = vmul.f32 %v1363, 0.25
    %v1492 = vmul.f32 %v1364, 0.25
    %v1493 = vmul.f32 %v1365, 0.25
    %v1494 = vmul.f32 %v1366, 0.25
    %v1495 = vmul.f32 %v1367, 0.25
    %v1496 = vmul.f32 %v1368, 0.25
    %v1497 = vmul.f32 %v1369, 0.25
    %v1498 = vmul.f32 %v1370, 0.25
    %v1499 = vmul.f32 %v1371, 0.25
    %v1500 = vmul.f32 %v1372, 0.25
    %v1501 = vmul.f32 %v1373, 0.25
    %v1502 = vmul.f32 %v1374, 0.25
    %v1503 = vmul.f32 %v1375, 0.25
    %v1504 = vmul.f32 %v1376, 0.25
    %v1505 = vmul.f32 %v1377, 0.25
    %v1506 = vmul.f32 %v1378, 0.25
    %v1507 = vmul.f32 %v1379, 0.25
    %v1508 = vmul.f32 %v1380, 0.25
    %v1509 = vmul.f32 %v1381, 0.25
    %v1510 = vmul.f32 %v1382, 0.25
    %v1511 = vmul.f32 %v1383, 0.25
    %v1512 = vmul.f32 %v1384, 0.25
    %v1513 = vmul.f32 %v1385, 0.25
    %v1514 = vmul.f32 %v1386, 0.25
    %v1515 = vmul.f32 %v1387, 0.25
    %v1516 = vmul.f32 %v1388, 0.25
    %v1517 = vmul.f32 %v1389, 0.25
    %v1518 = vmul.f32 %v1390, 0.25
    %v1519 = vmul.f32 %v1391, 0.25
    %v1520 = vmul.f32 %v1392, 0.25
    %v1521 = vmul.f32 %v1393, 0.25
    %v1522 = vmul.f32 %v1394, 0.25
    %v1523 = vmul.f32 %v1395, 0.25
    %v1524 = vmul.f32 %v1396, 0.25
    %v1525 = vmul.f32 %v1397, 0.25
    %v1526 = vmul.f32 %v1398, 0.25
    %v1527 = vmul.f32 %v1399, 0.25
    %v1528 = vmul.f32 %v1400, 0.25
    %v1529 = vmul.f32 %v1401, 0.25
    %v1530 = vmul.f32 %v1402, 0.25
    %v1531 = vmul.f32 %v1403, 0.25
    %v1532 = vmul.f32 %v1404, 0.25
    %v1533 = vmul.f32 %v1405, 0.25
    %v1534 = vmul.f32 %v1406, 0.25
    %v1535 = vmul.f32 %v1407, 0.25
    %v1536 = vmul.f32 %v1408, 0.25
    %v1537 = vmul.f32 %v1409, 0.25
    %v1538 = vmul.f32 %v1410, 0.25
    %v1539 = vmul.f32 %v1411, 0.25
    %v1540 = vmul.f32 %v1412, 0.25
    %v1541 = vmul.f32 %v1413, 0.25
    %v1542 = vmul.f32 %v1414, 0.25
    %v1543 = vmul.f32 %v1415, 0.25
    %v1544 = vmul.f32 %v1416, 0.25
    %v1545 = vmul.f32 %v1417, 0.25
    %v1546 = vmul.f32 %v1418, 0.25
    %v1547 = vmul.f32 %v1419, 0.25
    %v1548 = vmul.f32 %v1420, 0.25
    %v1549 = vmul.f32 %v1421, 0.25
    %v1550 = vpack.c.bf16 %v1422, %v1422
    %v1551 = vpack.c.bf16 %v1423, %v1423
    %v1552 = vpack.c.bf16 %v1424, %v1424
    %v1553 = vpack.c.bf16 %v1425, %v1425
    %v1554 = vpack.c.bf16 %v1426, %v1426
    %v1555 = vpack.c.bf16 %v1427, %v1427
    %v1556 = vpack.c.bf16 %v1428, %v1428
    %v1557 = vpack.c.bf16 %v1429, %v1429
    %v1558 = vpack.c.bf16 %v1430, %v1430
    %v1559 = vpack.c.bf16 %v1431, %v1431
    %v1560 = vpack.c.bf16 %v1432, %v1432
    %v1561 = vpack.c.bf16 %v1433, %v1433
    %v1562 = vpack.c.bf16 %v1434, %v1434
    %v1563 = vpack.c.bf16 %v1435, %v1435
    %v1564 = vpack.c.bf16 %v1436, %v1436
    %v1565 = vpack.c.bf16 %v1437, %v1437
    %v1566 = vpack.c.bf16 %v1438, %v1438
    %v1567 = vpack.c.bf16 %v1439, %v1439
    %v1568 = vpack.c.bf16 %v1440, %v1440
    %v1569 = vpack.c.bf16 %v1441, %v1441
    %v1570 = vpack.c.bf16 %v1442, %v1442
    %v1571 = vpack.c.bf16 %v1443, %v1443
    %v1572 = vpack.c.bf16 %v1444, %v1444
    %v1573 = vpack.c.bf16 %v1445, %v1445
    %v1574 = vpack.c.bf16 %v1446, %v1446
    %v1575 = vpack.c.bf16 %v1447, %v1447
    %v1576 = vpack.c.bf16 %v1448, %v1448
    %v1577 = vpack.c.bf16 %v1449, %v1449
    %v1578 = vpack.c.bf16 %v1450, %v1450
    %v1579 = vpack.c.bf16 %v1451, %v1451
    %v1580 = vpack.c.bf16 %v1452, %v1452
    %v1581 = vpack.c.bf16 %v1453, %v1453
    %v1582 = vpack.c.bf16 %v1454, %v1454
    %v1583 = vpack.c.bf16 %v1455, %v1455
    %v1584 = vpack.c.bf16 %v1456, %v1456
    %v1585 = vpack.c.bf16 %v1457, %v1457
    %v1586 = vpack.c.bf16 %v1458, %v1458
    %v1587 = vpack.c.bf16 %v1459, %v1459
    %v1588 = vpack.c.bf16 %v1460, %v1460
    %v1589 = vpack.c.bf16 %v1461, %v1461
    %v1590 = vpack.c.bf16 %v1462, %v1462
    %v1591 = vpack.c.bf16 %v1463, %v1463
    %v1592 = vpack.c.bf16 %v1464, %v1464
    %v1593 = vpack.c.bf16 %v1465, %v1465
    %v1594 = vpack.c.bf16 %v1466, %v1466
    %v1595 = vpack.c.bf16 %v1467, %v1467
    %v1596 = vpack.c.bf16 %v1468, %v1468
    %v1597 = vpack.c.bf16 %v1469, %v1469
    %v1598 = vpack.c.bf16 %v1470, %v1470
    %v1599 = vpack.c.bf16 %v1471, %v1471
    %v1600 = vpack.c.bf16 %v1472, %v1472
    %v1601 = vpack.c.bf16 %v1473, %v1473
    %v1602 = vpack.c.bf16 %v1474, %v1474
    %v1603 = vpack.c.bf16 %v1475, %v1475
    %v1604 = vpack.c.bf16 %v1476, %v1476
    %v1605 = vpack.c.bf16 %v1477, %v1477
    %v1606 = vpack.c.bf16 %v1478, %v1478
    %v1607 = vpack.c.bf16 %v1479, %v1479
    %v1608 = vpack.c.bf16 %v1480, %v1480
    %v1609 = vpack.c.bf16 %v1481, %v1481
    %v1610 = vpack.c.bf16 %v1482, %v1482
    %v1611 = vpack.c.bf16 %v1483, %v1483
    %v1612 = vpack.c.bf16 %v1484, %v1484
    %v1613 = vpack.c.bf16 %v1485, %v1485
    %v1614 = vpack.c.bf16 %v1486, %v1486
    %v1615 = vpack.c.bf16 %v1487, %v1487
    %v1616 = vpack.c.bf16 %v1488, %v1488
    %v1617 = vpack.c.bf16 %v1489, %v1489
    %v1618 = vpack.c.bf16 %v1490, %v1490
    %v1619 = vpack.c.bf16 %v1491, %v1491
    %v1620 = vpack.c.bf16 %v1492, %v1492
    %v1621 = vpack.c.bf16 %v1493, %v1493
    %v1622 = vpack.c.bf16 %v1494, %v1494
    %v1623 = vpack.c.bf16 %v1495, %v1495
    %v1624 = vpack.c.bf16 %v1496, %v1496
    %v1625 = vpack.c.bf16 %v1497, %v1497
    %v1626 = vpack.c.bf16 %v1498, %v1498
    %v1627 = vpack.c.bf16 %v1499, %v1499
    %v1628 = vpack.c.bf16 %v1500, %v1500
    %v1629 = vpack.c.bf16 %v1501, %v1501
    %v1630 = vpack.c.bf16 %v1502, %v1502
    %v1631 = vpack.c.bf16 %v1503, %v1503
    %v1632 = vpack.c.bf16 %v1504, %v1504
    %v1633 = vpack.c.bf16 %v1505, %v1505
    %v1634 = vpack.c.bf16 %v1506, %v1506
    %v1635 = vpack.c.bf16 %v1507, %v1507
    %v1636 = vpack.c.bf16 %v1508, %v1508
    %v1637 = vpack.c.bf16 %v1509, %v1509
    %v1638 = vpack.c.bf16 %v1510, %v1510
    %v1639 = vpack.c.bf16 %v1511, %v1511
    %v1640 = vpack.c.bf16 %v1512, %v1512
    %v1641 = vpack.c.bf16 %v1513, %v1513
    %v1642 = vpack.c.bf16 %v1514, %v1514
    %v1643 = vpack.c.bf16 %v1515, %v1515
    %v1644 = vpack.c.bf16 %v1516, %v1516
    %v1645 = vpack.c.bf16 %v1517, %v1517
    %v1646 = vpack.c.bf16 %v1518, %v1518
    %v1647 = vpack.c.bf16 %v1519, %v1519
    %v1648 = vpack.c.bf16 %v1520, %v1520
    %v1649 = vpack.c.bf16 %v1521, %v1521
    %v1650 = vpack.c.bf16 %v1522, %v1522
    %v1651 = vpack.c.bf16 %v1523, %v1523
    %v1652 = vpack.c.bf16 %v1524, %v1524
    %v1653 = vpack.c.bf16 %v1525, %v1525
    %v1654 = vpack.c.bf16 %v1526, %v1526
    %v1655 = vpack.c.bf16 %v1527, %v1527
    %v1656 = vpack.c.bf16 %v1528, %v1528
    %v1657 = vpack.c.bf16 %v1529, %v1529
    %v1658 = vpack.c.bf16 %v1530, %v1530
    %v1659 = vpack.c.bf16 %v1531, %v1531
    %v1660 = vpack.c.bf16 %v1532, %v1532
    %v1661 = vpack.c.bf16 %v1533, %v1533
    %v1662 = vpack.c.bf16 %v1534, %v1534
    %v1663 = vpack.c.bf16 %v1535, %v1535
    %v1664 = vpack.c.bf16 %v1536, %v1536
    %v1665 = vpack.c.bf16 %v1537, %v1537
    %v1666 = vpack.c.bf16 %v1538, %v1538
    %v1667 = vpack.c.bf16 %v1539, %v1539
    %v1668 = vpack.c.bf16 %v1540, %v1540
    %v1669 = vpack.c.bf16 %v1541, %v1541
    %v1670 = vpack.c.bf16 %v1542, %v1542
    %v1671 = vpack.c.bf16 %v1543, %v1543
    %v1672 = vpack.c.bf16 %v1544, %v1544
    %v1673 = vpack.c.bf16 %v1545, %v1545
    %v1674 = vpack.c.bf16 %v1546, %v1546
    %v1675 = vpack.c.bf16 %v1547, %v1547
    %v1676 = vpack.c.bf16 %v1548, %v1548
    %v1677 = vpack.c.bf16 %v1549, %v1549
    %v1678 = vld [vmem:[%s1] sm:$0x3]
    %v1807 = vunpack.c.l.b16 %v1550
    %v1808 = vunpack.c.l.b16 %v1551
    %v1809 = vunpack.c.l.b16 %v1552
    %v1810 = vunpack.c.l.b16 %v1553
    %v1811 = vunpack.c.l.b16 %v1554
    %v1812 = vunpack.c.l.b16 %v1555
    %v1813 = vunpack.c.l.b16 %v1556
    %v1814 = vunpack.c.l.b16 %v1557
    %v1815 = vunpack.c.l.b16 %v1558
    %v1816 = vunpack.c.l.b16 %v1559
    %v1817 = vunpack.c.l.b16 %v1560
    %v1818 = vunpack.c.l.b16 %v1561
    %v1819 = vunpack.c.l.b16 %v1562
    %v1820 = vunpack.c.l.b16 %v1563
    %v1821 = vunpack.c.l.b16 %v1564
    %v1822 = vunpack.c.l.b16 %v1565
    %v1823 = vunpack.c.l.b16 %v1566
    %v1824 = vunpack.c.l.b16 %v1567
    %v1825 = vunpack.c.l.b16 %v1568
    %v1826 = vunpack.c.l.b16 %v1569
    %v1827 = vunpack.c.l.b16 %v1570
    %v1828 = vunpack.c.l.b16 %v1571
    %v1829 = vunpack.c.l.b16 %v1572
    %v1830 = vunpack.c.l.b16 %v1573
    %v1831 = vunpack.c.l.b16 %v1574
    %v1832 = vunpack.c.l.b16 %v1575
    %v1833 = vunpack.c.l.b16 %v1576
    %v1834 = vunpack.c.l.b16 %v1577
    %v1835 = vunpack.c.l.b16 %v1578
    %v1836 = vunpack.c.l.b16 %v1579
    %v1837 = vunpack.c.l.b16 %v1580
    %v1838 = vunpack.c.l.b16 %v1581
    %v1839 = vunpack.c.l.b16 %v1582
    %v1840 = vunpack.c.l.b16 %v1583
    %v1841 = vunpack.c.l.b16 %v1584
    %v1842 = vunpack.c.l.b16 %v1585
    %v1843 = vunpack.c.l.b16 %v1586
    %v1844 = vunpack.c.l.b16 %v1587
    %v1845 = vunpack.c.l.b16 %v1588
    %v1846 = vunpack.c.l.b16 %v1589
    %v1847 = vunpack.c.l.b16 %v1590
    %v1848 = vunpack.c.l.b16 %v1591
    %v1849 = vunpack.c.l.b16 %v1592
    %v1850 = vunpack.c.l.b16 %v1593
    %v1851 = vunpack.c.l.b16 %v1594
    %v1852 = vunpack.c.l.b16 %v1595
    %v1853 = vunpack.c.l.b16 %v1596
    %v1854 = vunpack.c.l.b16 %v1597
    %v1855 = vunpack.c.l.b16 %v1598
    %v1856 = vunpack.c.l.b16 %v1599
    %v1857 = vunpack.c.l.b16 %v1600
    %v1858 = vunpack.c.l.b16 %v1601
    %v1859 = vunpack.c.l.b16 %v1602
    %v1860 = vunpack.c.l.b16 %v1603
    %v1861 = vunpack.c.l.b16 %v1604
    %v1862 = vunpack.c.l.b16 %v1605
    %v1863 = vunpack.c.l.b16 %v1606
    %v1864 = vunpack.c.l.b16 %v1607
    %v1865 = vunpack.c.l.b16 %v1608
    %v1866 = vunpack.c.l.b16 %v1609
    %v1867 = vunpack.c.l.b16 %v1610
    %v1868 = vunpack.c.l.b16 %v1611
    %v1869 = vunpack.c.l.b16 %v1612
    %v1870 = vunpack.c.l.b16 %v1613
    %v1871 = vunpack.c.l.b16 %v1614
    %v1872 = vunpack.c.l.b16 %v1615
    %v1873 = vunpack.c.l.b16 %v1616
    %v1874 = vunpack.c.l.b16 %v1617
    %v1875 = vunpack.c.l.b16 %v1618
    %v1876 = vunpack.c.l.b16 %v1619
    %v1877 = vunpack.c.l.b16 %v1620
    %v1878 = vunpack.c.l.b16 %v1621
    %v1879 = vunpack.c.l.b16 %v1622
    %v1880 = vunpack.c.l.b16 %v1623
    %v1881 = vunpack.c.l.b16 %v1624
    %v1882 = vunpack.c.l.b16 %v1625
    %v1883 = vunpack.c.l.b16 %v1626
    %v1884 = vunpack.c.l.b16 %v1627
    %v1885 = vunpack.c.l.b16 %v1628
    %v1886 = vunpack.c.l.b16 %v1629
    %v1887 = vunpack.c.l.b16 %v1630
    %v1888 = vunpack.c.l.b16 %v1631
    %v1889 = vunpack.c.l.b16 %v1632
    %v1890 = vunpack.c.l.b16 %v1633
    %v1891 = vunpack.c.l.b16 %v1634
    %v1892 = vunpack.c.l.b16 %v1635
    %v1893 = vunpack.c.l.b16 %v1636
    %v1894 = vunpack.c.l.b16 %v1637
    %v1895 = vunpack.c.l.b16 %v1638
    %v1896 = vunpack.c.l.b16 %v1639
    %v1897 = vunpack.c.l.b16 %v1640
    %v1898 = vunpack.c.l.b16 %v1641
    %v1899 = vunpack.c.l.b16 %v1642
    %v1900 = vunpack.c.l.b16 %v1643
    %v1901 = vunpack.c.l.b16 %v1644
    %v1902 = vunpack.c.l.b16 %v1645
    %v1903 = vunpack.c.l.b16 %v1646
    %v1904 = vunpack.c.l.b16 %v1647
    %v1905 = vunpack.c.l.b16 %v1648
    %v1906 = vunpack.c.l.b16 %v1649
    %v1907 = vunpack.c.l.b16 %v1650
    %v1908 = vunpack.c.l.b16 %v1651
    %v1909 = vunpack.c.l.b16 %v1652
    %v1910 = vunpack.c.l.b16 %v1653
    %v1911 = vunpack.c.l.b16 %v1654
    %v1912 = vunpack.c.l.b16 %v1655
    %v1913 = vunpack.c.l.b16 %v1656
    %v1914 = vunpack.c.l.b16 %v1657
    %v1915 = vunpack.c.l.b16 %v1658
    %v1916 = vunpack.c.l.b16 %v1659
    %v1917 = vunpack.c.l.b16 %v1660
    %v1918 = vunpack.c.l.b16 %v1661
    %v1919 = vunpack.c.l.b16 %v1662
    %v1920 = vunpack.c.l.b16 %v1663
    %v1921 = vunpack.c.l.b16 %v1664
    %v1922 = vunpack.c.l.b16 %v1665
    %v1923 = vunpack.c.l.b16 %v1666
    %v1924 = vunpack.c.l.b16 %v1667
    %v1925 = vunpack.c.l.b16 %v1668
    %v1926 = vunpack.c.l.b16 %v1669
    %v1927 = vunpack.c.l.b16 %v1670
    %v1928 = vunpack.c.l.b16 %v1671
    %v1929 = vunpack.c.l.b16 %v1672
    %v1930 = vunpack.c.l.b16 %v1673
    %v1931 = vunpack.c.l.b16 %v1674
    %v1932 = vunpack.c.l.b16 %v1675
    %v1933 = vunpack.c.l.b16 %v1676
    %v1934 = vunpack.c.l.b16 %v1677
    %v1935 = vrot.slane %v1808, 7
    %vm1936 = vcmask 1041409
    %v1937 = vsel %vm1936, %v1935, %v1807
    %v1938 = vrot.slane %v1809, 6
    %vm1939 = vcmask 1042434
    %v1940 = vsel %vm1939, %v1938, %v1937
    %v1941 = vrot.slane %v1810, 5
    %vm1942 = vcmask 1043459
    %v1943 = vsel %vm1942, %v1941, %v1940
    %v1944 = vrot.slane %v1811, 4
    %vm1945 = vcmask 1044484
    %v1946 = vsel %vm1945, %v1944, %v1943
    %v1947 = vrot.slane %v1812, 3
    %vm1948 = vcmask 1045509
    %v1949 = vsel %vm1948, %v1947, %v1946
    %v1950 = vrot.slane %v1813, 2
    %vm1951 = vcmask 1046534
    %v1952 = vsel %vm1951, %v1950, %v1949
    %v1953 = vrot.slane %v1814, 1
    %vm1954 = vcmask 1047559
    %v1955 = vsel %vm1954, %v1953, %v1952
    %v1956 = vrot.slane %v1816, 7
    %v1957 = vsel %vm1936, %v1956, %v1815
    %v1958 = vrot.slane %v1817, 6
    %v1959 = vsel %vm1939, %v1958, %v1957
    %v1960 = vrot.slane %v1818, 5
    %v1961 = vsel %vm1942, %v1960, %v1959
    %v1962 = vrot.slane %v1819, 4
    %v1963 = vsel %vm1945, %v1962, %v1961
    %v1964 = vrot.slane %v1820, 3
    %v1965 = vsel %vm1948, %v1964, %v1963
    %v1966 = vrot.slane %v1821, 2
    %v1967 = vsel %vm1951, %v1966, %v1965
    %v1968 = vrot.slane %v1822, 1
    %v1969 = vsel %vm1954, %v1968, %v1967
    %v1970 = vrot.slane %v1824, 7
    %v1971 = vsel %vm1936, %v1970, %v1823
    %v1972 = vrot.slane %v1825, 6
    %v1973 = vsel %vm1939, %v1972, %v1971
    %v1974 = vrot.slane %v1826, 5
    %v1975 = vsel %vm1942, %v1974, %v1973
    %v1976 = vrot.slane %v1827, 4
    %v1977 = vsel %vm1945, %v1976, %v1975
    %v1978 = vrot.slane %v1828, 3
    %v1979 = vsel %vm1948, %v1978, %v1977
    %v1980 = vrot.slane %v1829, 2
    %v1981 = vsel %vm1951, %v1980, %v1979
    %v1982 = vrot.slane %v1830, 1
    %v1983 = vsel %vm1954, %v1982, %v1981
    %v1984 = vrot.slane %v1832, 7
    %v1985 = vsel %vm1936, %v1984, %v1831
    %v1986 = vrot.slane %v1833, 6
    %v1987 = vsel %vm1939, %v1986, %v1985
    %v1988 = vrot.slane %v1834, 5
    %v1989 = vsel %vm1942, %v1988, %v1987
    %v1990 = vrot.slane %v1835, 4
    %v1991 = vsel %vm1945, %v1990, %v1989
    %v1992 = vrot.slane %v1836, 3
    %v1993 = vsel %vm1948, %v1992, %v1991
    %v1994 = vrot.slane %v1837, 2
    %v1995 = vsel %vm1951, %v1994, %v1993
    %v1996 = vrot.slane %v1838, 1
    %v1997 = vsel %vm1954, %v1996, %v1995
    %v1998 = vrot.slane %v1840, 7
    %v1999 = vsel %vm1936, %v1998, %v1839
    %v2000 = vrot.slane %v1841, 6
    %v2001 = vsel %vm1939, %v2000, %v1999
    %v2002 = vrot.slane %v1842, 5
    %v2003 = vsel %vm1942, %v2002, %v2001
    %v2004 = vrot.slane %v1843, 4
    %v2005 = vsel %vm1945, %v2004, %v2003
    %v2006 = vrot.slane %v1844, 3
    %v2007 = vsel %vm1948, %v2006, %v2005
    %v2008 = vrot.slane %v1845, 2
    %v2009 = vsel %vm1951, %v2008, %v2007
    %v2010 = vrot.slane %v1846, 1
    %v2011 = vsel %vm1954, %v2010, %v2009
    %v2012 = vrot.slane %v1848, 7
    %v2013 = vsel %vm1936, %v2012, %v1847
    %v2014 = vrot.slane %v1849, 6
    %v2015 = vsel %vm1939, %v2014, %v2013
    %v2016 = vrot.slane %v1850, 5
    %v2017 = vsel %vm1942, %v2016, %v2015
    %v2018 = vrot.slane %v1851, 4
    %v2019 = vsel %vm1945, %v2018, %v2017
    %v2020 = vrot.slane %v1852, 3
    %v2021 = vsel %vm1948, %v2020, %v2019
    %v2022 = vrot.slane %v1853, 2
    %v2023 = vsel %vm1951, %v2022, %v2021
    %v2024 = vrot.slane %v1854, 1
    %v2025 = vsel %vm1954, %v2024, %v2023
    %v2026 = vrot.slane %v1856, 7
    %v2027 = vsel %vm1936, %v2026, %v1855
    %v2028 = vrot.slane %v1857, 6
    %v2029 = vsel %vm1939, %v2028, %v2027
    %v2030 = vrot.slane %v1858, 5
    %v2031 = vsel %vm1942, %v2030, %v2029
    %v2032 = vrot.slane %v1859, 4
    %v2033 = vsel %vm1945, %v2032, %v2031
    %v2034 = vrot.slane %v1860, 3
    %v2035 = vsel %vm1948, %v2034, %v2033
    %v2036 = vrot.slane %v1861, 2
    %v2037 = vsel %vm1951, %v2036, %v2035
    %v2038 = vrot.slane %v1862, 1
    %v2039 = vsel %vm1954, %v2038, %v2037
    %v2040 = vrot.slane %v1864, 7
    %v2041 = vsel %vm1936, %v2040, %v1863
    %v2042 = vrot.slane %v1865, 6
    %v2043 = vsel %vm1939, %v2042, %v2041
    %v2044 = vrot.slane %v1866, 5
    %v2045 = vsel %vm1942, %v2044, %v2043
    %v2046 = vrot.slane %v1867, 4
    %v2047 = vsel %vm1945, %v2046, %v2045
    %v2048 = vrot.slane %v1868, 3
    %v2049 = vsel %vm1948, %v2048, %v2047
    %v2050 = vrot.slane %v1869, 2
    %v2051 = vsel %vm1951, %v2050, %v2049
    %v2052 = vrot.slane %v1870, 1
    %v2053 = vsel %vm1954, %v2052, %v2051
    %v2054 = vrot.slane %v1872, 7
    %v2055 = vsel %vm1936, %v2054, %v1871
    %v2056 = vrot.slane %v1873, 6
    %v2057 = vsel %vm1939, %v2056, %v2055
    %v2058 = vrot.slane %v1874, 5
    %v2059 = vsel %vm1942, %v2058, %v2057
    %v2060 = vrot.slane %v1875, 4
    %v2061 = vsel %vm1945, %v2060, %v2059
    %v2062 = vrot.slane %v1876, 3
    %v2063 = vsel %vm1948, %v2062, %v2061
    %v2064 = vrot.slane %v1877, 2
    %v2065 = vsel %vm1951, %v2064, %v2063
    %v2066 = vrot.slane %v1878, 1
    %v2067 = vsel %vm1954, %v2066, %v2065
    %v2068 = vrot.slane %v1880, 7
    %v2069 = vsel %vm1936, %v2068, %v1879
    %v2070 = vrot.slane %v1881, 6
    %v2071 = vsel %vm1939, %v2070, %v2069
    %v2072 = vrot.slane %v1882, 5
    %v2073 = vsel %vm1942, %v2072, %v2071
    %v2074 = vrot.slane %v1883, 4
    %v2075 = vsel %vm1945, %v2074, %v2073
    %v2076 = vrot.slane %v1884, 3
    %v2077 = vsel %vm1948, %v2076, %v2075
    %v2078 = vrot.slane %v1885, 2
    %v2079 = vsel %vm1951, %v2078, %v2077
    %v2080 = vrot.slane %v1886, 1
    %v2081 = vsel %vm1954, %v2080, %v2079
    %v2082 = vrot.slane %v1888, 7
    %v2083 = vsel %vm1936, %v2082, %v1887
    %v2084 = vrot.slane %v1889, 6
    %v2085 = vsel %vm1939, %v2084, %v2083
    %v2086 = vrot.slane %v1890, 5
    %v2087 = vsel %vm1942, %v2086, %v2085
    %v2088 = vrot.slane %v1891, 4
    %v2089 = vsel %vm1945, %v2088, %v2087
    %v2090 = vrot.slane %v1892, 3
    %v2091 = vsel %vm1948, %v2090, %v2089
    %v2092 = vrot.slane %v1893, 2
    %v2093 = vsel %vm1951, %v2092, %v2091
    %v2094 = vrot.slane %v1894, 1
    %v2095 = vsel %vm1954, %v2094, %v2093
    %v2096 = vrot.slane %v1896, 7
    %v2097 = vsel %vm1936, %v2096, %v1895
    %v2098 = vrot.slane %v1897, 6
    %v2099 = vsel %vm1939, %v2098, %v2097
    %v2100 = vrot.slane %v1898, 5
    %v2101 = vsel %vm1942, %v2100, %v2099
    %v2102 = vrot.slane %v1899, 4
    %v2103 = vsel %vm1945, %v2102, %v2101
    %v2104 = vrot.slane %v1900, 3
    %v2105 = vsel %vm1948, %v2104, %v2103
    %v2106 = vrot.slane %v1901, 2
    %v2107 = vsel %vm1951, %v2106, %v2105
    %v2108 = vrot.slane %v1902, 1
    %v2109 = vsel %vm1954, %v2108, %v2107
    %v2110 = vrot.slane %v1904, 7
    %v2111 = vsel %vm1936, %v2110, %v1903
    %v2112 = vrot.slane %v1905, 6
    %v2113 = vsel %vm1939, %v2112, %v2111
    %v2114 = vrot.slane %v1906, 5
    %v2115 = vsel %vm1942, %v2114, %v2113
    %v2116 = vrot.slane %v1907, 4
    %v2117 = vsel %vm1945, %v2116, %v2115
    %v2118 = vrot.slane %v1908, 3
    %v2119 = vsel %vm1948, %v2118, %v2117
    %v2120 = vrot.slane %v1909, 2
    %v2121 = vsel %vm1951, %v2120, %v2119
    %v2122 = vrot.slane %v1910, 1
    %v2123 = vsel %vm1954, %v2122, %v2121
    %v2124 = vrot.slane %v1912, 7
    %v2125 = vsel %vm1936, %v2124, %v1911
    %v2126 = vrot.slane %v1913, 6
    %v2127 = vsel %vm1939, %v2126, %v2125
    %v2128 = vrot.slane %v1914, 5
    %v2129 = vsel %vm1942, %v2128, %v2127
    %v2130 = vrot.slane %v1915, 4
    %v2131 = vsel %vm1945, %v2130, %v2129
    %v2132 = vrot.slane %v1916, 3
    %v2133 = vsel %vm1948, %v2132, %v2131
    %v2134 = vrot.slane %v1917, 2
    %v2135 = vsel %vm1951, %v2134, %v2133
    %v2136 = vrot.slane %v1918, 1
    %v2137 = vsel %vm1954, %v2136, %v2135
    %v2138 = vrot.slane %v1920, 7
    %v2139 = vsel %vm1936, %v2138, %v1919
    %v2140 = vrot.slane %v1921, 6
    %v2141 = vsel %vm1939, %v2140, %v2139
    %v2142 = vrot.slane %v1922, 5
    %v2143 = vsel %vm1942, %v2142, %v2141
    %v2144 = vrot.slane %v1923, 4
    %v2145 = vsel %vm1945, %v2144, %v2143
    %v2146 = vrot.slane %v1924, 3
    %v2147 = vsel %vm1948, %v2146, %v2145
    %v2148 = vrot.slane %v1925, 2
    %v2149 = vsel %vm1951, %v2148, %v2147
    %v2150 = vrot.slane %v1926, 1
    %v2151 = vsel %vm1954, %v2150, %v2149
    %v2152 = vrot.slane %v1928, 7
    %v2153 = vsel %vm1936, %v2152, %v1927
    %v2154 = vrot.slane %v1929, 6
    %v2155 = vsel %vm1939, %v2154, %v2153
    %v2156 = vrot.slane %v1930, 5
    %v2157 = vsel %vm1942, %v2156, %v2155
    %v2158 = vrot.slane %v1931, 4
    %v2159 = vsel %vm1945, %v2158, %v2157
    %v2160 = vrot.slane %v1932, 3
    %v2161 = vsel %vm1948, %v2160, %v2159
    %v2162 = vrot.slane %v1933, 2
    %v2163 = vsel %vm1951, %v2162, %v2161
    %v2164 = vrot.slane %v1934, 1
    %v2165 = vsel %vm1954, %v2164, %v2163
    %v2166 = vpack.c.b16 %v1969, %v1955
    %v2167 = vpack.c.b16 %v1997, %v1983
    %v2168 = vpack.c.b16 %v2025, %v2011
    %v2169 = vpack.c.b16 %v2053, %v2039
    %v2170 = vpack.c.b16 %v2081, %v2067
    %v2171 = vpack.c.b16 %v2109, %v2095
    %v2172 = vpack.c.b16 %v2137, %v2123
    %v2173 = vpack.c.b16 %v2165, %v2151
    %vm2174 = vcmask 31744
    %v2176 = vsel %vm2174, %v2166, 0
    %v2179 = vsel %vm2174, %v2167, 0
    %v2182 = vsel %vm2174, %v2168, 0
    %v2185 = vsel %vm2174, %v2169, 0
    %v2188 = vsel %vm2174, %v2170, 0
    %v2191 = vsel %vm2174, %v2171, 0
    %v2194 = vsel %vm2174, %v2172, 0
    %v2197 = vsel %vm2174, %v2173, 0
    %vm2199 = vcmask 1041408
    %v2201 = vsel %vm2199, %v1678, 0
    %2203 = vmatprep.subr.bf16.mxu0 0
    %2204 = vmatpush1.bf16.msra.mxu0 %v2201
    %2205 = vmatprep.subr.bf16.mxu0 0
    %2206 = vmatpush1.bf16.msra.mxu0 0
    %2207 = vmatprep.subr.bf16.mxu0 0
    %2208 = vmatpush1.bf16.msra.mxu0 0
    %2209 = vmatprep.subr.bf16.mxu0 0
    %2210 = vmatpush1.bf16.msra.mxu0 0
    %2211 = vmatprep.subr.bf16.mxu0 0
    %2212 = vmatpush1.bf16.msra.mxu0 0
    %2213 = vmatprep.subr.bf16.mxu0 0
    %2214 = vmatpush1.bf16.msra.mxu0 0
    %2215 = vmatprep.subr.bf16.mxu0 0
    %2216 = vmatpush1.bf16.msra.mxu0 0
    %2217 = vmatprep.subr.bf16.mxu0 0
    %2218 = vmatpush1.bf16.msra.mxu0 0
    %2219 = vmatprep.subr.bf16.mxu0 0
    %2220 = vmatpush1.bf16.msra.mxu0 0
    %2221 = vmatprep.subr.bf16.mxu0 0
    %2222 = vmatpush1.bf16.msra.mxu0 0
    %2223 = vmatprep.subr.bf16.mxu0 0
    %2224 = vmatpush1.bf16.msra.mxu0 0
    %2225 = vmatprep.subr.bf16.mxu0 0
    %2226 = vmatpush1.bf16.msra.mxu0 0
    %2227 = vmatprep.subr.bf16.mxu0 0
    %2228 = vmatpush1.bf16.msra.mxu0 0
    %2229 = vmatprep.subr.bf16.mxu0 0
    %2230 = vmatpush1.bf16.msra.mxu0 0
    %2231 = vmatprep.subr.bf16.mxu0 0
    %2232 = vmatpush1.bf16.msra.mxu0 0
    %2233 = vmatprep.subr.bf16.mxu0 0
    %2234 = vmatpush1.bf16.msra.mxu0 0
    %2235 = vmatprep.mubr.bf16.mxu0 0
    %2236 = vmatmul.mubr.bf16.gmra.mrb[0].mxu0 %v2176
    %v2237 = vpop.f32.mrb[0].mxu0
    %v2238 = vadd.f32 0.0, %v2237
    %v2239 = vpop.f32.mrb[0].mxu0
    %v2240 = vpop.f32.mrb[0].mxu0
    %v2241 = vadd.f32 0.0, %v2240
    %v2242 = vpop.f32.mrb[0].mxu0
    %2243 = vmatprep.mubr.bf16.mxu0 0
    %2244 = vmatmul.mubr.bf16.gmra.mrb[0].mxu0 %v2179
    %v2245 = vpop.f32.mrb[0].mxu0
    %v2246 = vadd.f32 0.0, %v2245
    %v2247 = vpop.f32.mrb[0].mxu0
    %v2248 = vpop.f32.mrb[0].mxu0
    %v2249 = vadd.f32 0.0, %v2248
    %v2250 = vpop.f32.mrb[0].mxu0
    %2251 = vmatprep.mubr.bf16.mxu0 0
    %2252 = vmatmul.mubr.bf16.gmra.mrb[0].mxu0 %v2182
    %v2253 = vpop.f32.mrb[0].mxu0
    %v2254 = vadd.f32 0.0, %v2253
    %v2255 = vpop.f32.mrb[0].mxu0
    %v2256 = vpop.f32.mrb[0].mxu0
    %v2257 = vadd.f32 0.0, %v2256
    %v2258 = vpop.f32.mrb[0].mxu0
    %2259 = vmatprep.mubr.bf16.mxu0 0
    %2260 = vmatmul.mubr.bf16.gmra.mrb[0].mxu0 %v2185
    %v2261 = vpop.f32.mrb[0].mxu0
    %v2262 = vadd.f32 0.0, %v2261
    %v2263 = vpop.f32.mrb[0].mxu0
    %v2264 = vpop.f32.mrb[0].mxu0
    %v2265 = vadd.f32 0.0, %v2264
    %v2266 = vpop.f32.mrb[0].mxu0
    %2267 = vmatprep.mubr.bf16.mxu0 0
    %2268 = vmatmul.mubr.bf16.gmra.mrb[0].mxu0 %v2188
    %v2269 = vpop.f32.mrb[0].mxu0
    %v2270 = vadd.f32 0.0, %v2269
    %v2271 = vpop.f32.mrb[0].mxu0
    %v2272 = vpop.f32.mrb[0].mxu0
    %v2273 = vadd.f32 0.0, %v2272
    %v2274 = vpop.f32.mrb[0].mxu0
    %2275 = vmatprep.mubr.bf16.mxu0 0
    %2276 = vmatmul.mubr.bf16.gmra.mrb[0].mxu0 %v2191
    %v2277 = vpop.f32.mrb[0].mxu0
    %v2278 = vadd.f32 0.0, %v2277
    %v2279 = vpop.f32.mrb[0].mxu0
    %v2280 = vpop.f32.mrb[0].mxu0
    %v2281 = vadd.f32 0.0, %v2280
    %v2282 = vpop.f32.mrb[0].mxu0
    %2283 = vmatprep.mubr.bf16.mxu0 0
    %2284 = vmatmul.mubr.bf16.gmra.mrb[0].mxu0 %v2194
    %v2285 = vpop.f32.mrb[0].mxu0
    %v2286 = vadd.f32 0.0, %v2285
    %v2287 = vpop.f32.mrb[0].mxu0
    %v2288 = vpop.f32.mrb[0].mxu0
    %v2289 = vadd.f32 0.0, %v2288
    %v2290 = vpop.f32.mrb[0].mxu0
    %2291 = vmatprep.mubr.bf16.mxu0 0
    %2292 = vmatmul.mubr.bf16.gmra.mrb[0].mxu0 %v2197
    %v2293 = vpop.f32.mrb[0].mxu0
    %v2294 = vadd.f32 0.0, %v2293
    %v2295 = vpop.f32.mrb[0].mxu0
    %v2296 = vpop.f32.mrb[0].mxu0
    %v2297 = vadd.f32 0.0, %v2296
    %v2298 = vpop.f32.mrb[0].mxu0
    %2299 = vdwg.mxu0
    %v2300 = vld [vmem:[%s2] sm:$0x1]
    %v2302 = vlaneseq
    %v2303 = vshrl.u32 %v2302, 7
    %v2304 = vsub.s32 0, %v2303
    %v2305 = vrot.slane %v2300, %v2304
    %v2307 = vmul.f32 %v2238, %v2305
    %v2308 = vmul.f32 %v2241, %v2305
    %v2309 = vmul.f32 %v2246, %v2305
    %v2310 = vmul.f32 %v2249, %v2305
    %v2311 = vmul.f32 %v2254, %v2305
    %v2312 = vmul.f32 %v2257, %v2305
    %v2313 = vmul.f32 %v2262, %v2305
    %v2314 = vmul.f32 %v2265, %v2305
    %v2315 = vmul.f32 %v2270, %v2305
    %v2316 = vmul.f32 %v2273, %v2305
    %v2317 = vmul.f32 %v2278, %v2305
    %v2318 = vmul.f32 %v2281, %v2305
    %v2319 = vmul.f32 %v2286, %v2305
    %v2320 = vmul.f32 %v2289, %v2305
    %v2321 = vmul.f32 %v2294, %v2305
    %v2322 = vmul.f32 %v2297, %v2305
    %v2323 = vld [vmem:[%s3] sm:$0x1]
    %v2325 = vlaneseq
    %v2326 = vshrl.u32 %v2325, 7
    %v2327 = vsub.s32 0, %v2326
    %v2328 = vrot.slane %v2323, %v2327
    %v2330 = vadd.f32 %v2307, %v2328
    %v2331 = vadd.f32 %v2308, %v2328
    %v2332 = vadd.f32 %v2309, %v2328
    %v2333 = vadd.f32 %v2310, %v2328
    %v2334 = vadd.f32 %v2311, %v2328
    %v2335 = vadd.f32 %v2312, %v2328
    %v2336 = vadd.f32 %v2313, %v2328
    %v2337 = vadd.f32 %v2314, %v2328
    %v2338 = vadd.f32 %v2315, %v2328
    %v2339 = vadd.f32 %v2316, %v2328
    %v2340 = vadd.f32 %v2317, %v2328
    %v2341 = vadd.f32 %v2318, %v2328
    %v2342 = vadd.f32 %v2319, %v2328
    %v2343 = vadd.f32 %v2320, %v2328
    %v2344 = vadd.f32 %v2321, %v2328
    %v2345 = vadd.f32 %v2322, %v2328
    %v2346 = vmax.f32 %v2330, 0.0
    %v2347 = vmax.f32 %v2331, 0.0
    %v2348 = vmax.f32 %v2332, 0.0
    %v2349 = vmax.f32 %v2333, 0.0
    %v2350 = vmax.f32 %v2334, 0.0
    %v2351 = vmax.f32 %v2335, 0.0
    %v2352 = vmax.f32 %v2336, 0.0
    %v2353 = vmax.f32 %v2337, 0.0
    %v2354 = vmax.f32 %v2338, 0.0
    %v2355 = vmax.f32 %v2339, 0.0
    %v2356 = vmax.f32 %v2340, 0.0
    %v2357 = vmax.f32 %v2341, 0.0
    %v2358 = vmax.f32 %v2342, 0.0
    %v2359 = vmax.f32 %v2343, 0.0
    %v2360 = vmax.f32 %v2344, 0.0
    %v2361 = vmax.f32 %v2345, 0.0
    %v2377 = vrot.slane 0.0, 7
    %v2378 = vrot.slane %v2346, 7
    %v2379 = vrot.slane %v2347, 7
    %v2380 = vrot.slane %v2348, 7
    %v2381 = vrot.slane %v2349, 7
    %v2382 = vrot.slane %v2350, 7
    %v2383 = vrot.slane %v2351, 7
    %v2384 = vrot.slane %v2352, 7
    %v2385 = vrot.slane %v2354, 7
    %v2386 = vrot.slane %v2355, 7
    %v2387 = vrot.slane %v2356, 7
    %v2388 = vrot.slane %v2357, 7
    %v2389 = vrot.slane %v2358, 7
    %v2390 = vrot.slane %v2359, 7
    %v2391 = vrot.slane %v2360, 7
    %vm2407 = vcmask 1040384
    %v2408 = vsel %vm2407, 0.0, %v2377
    %v2409 = vsel %vm2407, 0.0, %v2378
    %v2410 = vsel %vm2407, 0.0, %v2379
    %v2411 = vsel %vm2407, 0.0, %v2380
    %v2412 = vsel %vm2407, 0.0, %v2381
    %v2413 = vsel %vm2407, 0.0, %v2382
    %v2414 = vsel %vm2407, 0.0, %v2383
    %v2415 = vsel %vm2407, 0.0, %v2384
    %v2416 = vsel %vm2407, 0.0, %v2385
    %v2417 = vsel %vm2407, 0.0, %v2386
    %v2418 = vsel %vm2407, 0.0, %v2387
    %v2419 = vsel %vm2407, 0.0, %v2388
    %v2420 = vsel %vm2407, 0.0, %v2389
    %v2421 = vsel %vm2407, 0.0, %v2390
    %v2422 = vsel %vm2407, 0.0, %v2391
    %v2423 = vrot.slane 0.0, 1
    %v2424 = vrot.slane %v2346, 1
    %v2425 = vrot.slane %v2347, 1
    %v2426 = vrot.slane %v2348, 1
    %v2427 = vrot.slane %v2349, 1
    %v2428 = vrot.slane %v2350, 1
    %v2429 = vrot.slane %v2351, 1
    %v2430 = vrot.slane %v2352, 1
    %v2431 = vrot.slane %v2354, 1
    %v2432 = vrot.slane %v2355, 1
    %v2433 = vrot.slane %v2356, 1
    %v2434 = vrot.slane %v2357, 1
    %v2435 = vrot.slane %v2358, 1
    %v2436 = vrot.slane %v2359, 1
    %v2437 = vrot.slane %v2360, 1
    %vm2453 = vcmask 1046528
    %v2454 = vsel %vm2453, %v2423, 0.0
    %v2455 = vsel %vm2453, %v2424, 0.0
    %v2456 = vsel %vm2453, %v2425, 0.0
    %v2457 = vsel %vm2453, %v2426, 0.0
    %v2458 = vsel %vm2453, %v2427, 0.0
    %v2459 = vsel %vm2453, %v2428, 0.0
    %v2460 = vsel %vm2453, %v2429, 0.0
    %v2461 = vsel %vm2453, %v2430, 0.0
    %v2462 = vsel %vm2453, %v2431, 0.0
    %v2463 = vsel %vm2453, %v2432, 0.0
    %v2464 = vsel %vm2453, %v2433, 0.0
    %v2465 = vsel %vm2453, %v2434, 0.0
    %v2466 = vsel %vm2453, %v2435, 0.0
    %v2467 = vsel %vm2453, %v2436, 0.0
    %v2468 = vsel %vm2453, %v2437, 0.0
    %v2471 = vrot.slane %v2353, 7
    %v2472 = vrot.slane %v2361, 7
    %v2475 = vsel %vm2407, 0.0, %v2471
    %v2476 = vsel %vm2407, 0.0, %v2472
    %v2477 = vrot.slane %v2353, 1
    %v2478 = vrot.slane %v2361, 1
    %v2481 = vsel %vm2453, %v2477, 0.0
    %v2482 = vsel %vm2453, %v2478, 0.0
    %2483 = vrot.lane.b32.xlu0 0.0, 8
    %v2484 = vpop.permute.xlu0 %2483
    %2485 = vrot.lane.b32.xlu0 %v2346, 8
    %v2486 = vpop.permute.xlu0 %2485
    %2487 = vrot.lane.b32.xlu0 %v2347, 8
    %v2488 = vpop.permute.xlu0 %2487
    %2489 = vrot.lane.b32.xlu0 %v2348, 8
    %v2490 = vpop.permute.xlu0 %2489
    %2491 = vrot.lane.b32.xlu0 %v2349, 8
    %v2492 = vpop.permute.xlu0 %2491
    %2493 = vrot.lane.b32.xlu0 %v2350, 8
    %v2494 = vpop.permute.xlu0 %2493
    %2495 = vrot.lane.b32.xlu0 %v2351, 8
    %v2496 = vpop.permute.xlu0 %2495
    %2497 = vrot.lane.b32.xlu0 %v2352, 8
    %v2498 = vpop.permute.xlu0 %2497
    %2499 = vrot.lane.b32.xlu0 %v2354, 8
    %v2500 = vpop.permute.xlu0 %2499
    %2501 = vrot.lane.b32.xlu0 %v2355, 8
    %v2502 = vpop.permute.xlu0 %2501
    %2503 = vrot.lane.b32.xlu0 %v2356, 8
    %v2504 = vpop.permute.xlu0 %2503
    %2505 = vrot.lane.b32.xlu0 %v2357, 8
    %v2506 = vpop.permute.xlu0 %2505
    %2507 = vrot.lane.b32.xlu0 %v2358, 8
    %v2508 = vpop.permute.xlu0 %2507
    %2509 = vrot.lane.b32.xlu0 %v2359, 8
    %v2510 = vpop.permute.xlu0 %2509
    %2511 = vrot.lane.b32.xlu0 %v2360, 8
    %v2512 = vpop.permute.xlu0 %2511
    %2543 = vrot.lane.b32.xlu0 %v2454, 16
    %v2544 = vpop.permute.xlu0 %2543
    %2545 = vrot.lane.b32.xlu0 %v2455, 16
    %v2546 = vpop.permute.xlu0 %2545
    %2547 = vrot.lane.b32.xlu0 %v2456, 16
    %v2548 = vpop.permute.xlu0 %2547
    %2549 = vrot.lane.b32.xlu0 %v2457, 16
    %v2550 = vpop.permute.xlu0 %2549
    %2551 = vrot.lane.b32.xlu0 %v2458, 16
    %v2552 = vpop.permute.xlu0 %2551
    %2553 = vrot.lane.b32.xlu0 %v2459, 16
    %v2554 = vpop.permute.xlu0 %2553
    %2555 = vrot.lane.b32.xlu0 %v2460, 16
    %v2556 = vpop.permute.xlu0 %2555
    %2557 = vrot.lane.b32.xlu0 %v2461, 16
    %v2558 = vpop.permute.xlu0 %2557
    %2559 = vrot.lane.b32.xlu0 %v2462, 16
    %v2560 = vpop.permute.xlu0 %2559
    %2561 = vrot.lane.b32.xlu0 %v2463, 16
    %v2562 = vpop.permute.xlu0 %2561
    %2563 = vrot.lane.b32.xlu0 %v2464, 16
    %v2564 = vpop.permute.xlu0 %2563
    %2565 = vrot.lane.b32.xlu0 %v2465, 16
    %v2566 = vpop.permute.xlu0 %2565
    %2567 = vrot.lane.b32.xlu0 %v2466, 16
    %v2568 = vpop.permute.xlu0 %2567
    %2569 = vrot.lane.b32.xlu0 %v2467, 16
    %v2570 = vpop.permute.xlu0 %2569
    %2571 = vrot.lane.b32.xlu0 %v2468, 16
    %v2572 = vpop.permute.xlu0 %2571
    %2604 = vrot.lane.b32.xlu0 %v2409, 24
    %v2605 = vpop.permute.xlu0 %2604
    %2606 = vrot.lane.b32.xlu0 %v2410, 24
    %v2607 = vpop.permute.xlu0 %2606
    %2608 = vrot.lane.b32.xlu0 %v2411, 24
    %v2609 = vpop.permute.xlu0 %2608
    %2610 = vrot.lane.b32.xlu0 %v2412, 24
    %v2611 = vpop.permute.xlu0 %2610
    %2612 = vrot.lane.b32.xlu0 %v2413, 24
    %v2613 = vpop.permute.xlu0 %2612
    %2614 = vrot.lane.b32.xlu0 %v2414, 24
    %v2615 = vpop.permute.xlu0 %2614
    %2616 = vrot.lane.b32.xlu0 %v2415, 24
    %v2617 = vpop.permute.xlu0 %2616
    %2618 = vrot.lane.b32.xlu0 %v2475, 24
    %v2619 = vpop.permute.xlu0 %2618
    %2620 = vrot.lane.b32.xlu0 %v2416, 24
    %v2621 = vpop.permute.xlu0 %2620
    %2622 = vrot.lane.b32.xlu0 %v2417, 24
    %v2623 = vpop.permute.xlu0 %2622
    %2624 = vrot.lane.b32.xlu0 %v2418, 24
    %v2625 = vpop.permute.xlu0 %2624
    %2626 = vrot.lane.b32.xlu0 %v2419, 24
    %v2627 = vpop.permute.xlu0 %2626
    %2628 = vrot.lane.b32.xlu0 %v2420, 24
    %v2629 = vpop.permute.xlu0 %2628
    %2630 = vrot.lane.b32.xlu0 %v2421, 24
    %v2631 = vpop.permute.xlu0 %2630
    %2632 = vrot.lane.b32.xlu0 %v2422, 24
    %v2633 = vpop.permute.xlu0 %2632
    %2634 = vrot.lane.b32.xlu0 %v2476, 24
    %v2635 = vpop.permute.xlu0 %2634
    %2652 = vrot.lane.b32.xlu0 %v2346, 32
    %v2653 = vpop.permute.xlu0 %2652
    %2654 = vrot.lane.b32.xlu0 %v2347, 32
    %v2655 = vpop.permute.xlu0 %2654
    %2656 = vrot.lane.b32.xlu0 %v2348, 32
    %v2657 = vpop.permute.xlu0 %2656
    %2658 = vrot.lane.b32.xlu0 %v2349, 32
    %v2659 = vpop.permute.xlu0 %2658
    %2660 = vrot.lane.b32.xlu0 %v2350, 32
    %v2661 = vpop.permute.xlu0 %2660
    %2662 = vrot.lane.b32.xlu0 %v2351, 32
    %v2663 = vpop.permute.xlu0 %2662
    %2664 = vrot.lane.b32.xlu0 %v2352, 32
    %v2665 = vpop.permute.xlu0 %2664
    %2666 = vrot.lane.b32.xlu0 %v2353, 32
    %v2667 = vpop.permute.xlu0 %2666
    %2668 = vrot.lane.b32.xlu0 %v2354, 32
    %v2669 = vpop.permute.xlu0 %2668
    %2670 = vrot.lane.b32.xlu0 %v2355, 32
    %v2671 = vpop.permute.xlu0 %2670
    %2672 = vrot.lane.b32.xlu0 %v2356, 32
    %v2673 = vpop.permute.xlu0 %2672
    %2674 = vrot.lane.b32.xlu0 %v2357, 32
    %v2675 = vpop.permute.xlu0 %2674
    %2676 = vrot.lane.b32.xlu0 %v2358, 32
    %v2677 = vpop.permute.xlu0 %2676
    %2678 = vrot.lane.b32.xlu0 %v2359, 32
    %v2679 = vpop.permute.xlu0 %2678
    %2680 = vrot.lane.b32.xlu0 %v2360, 32
    %v2681 = vpop.permute.xlu0 %2680
    %2682 = vrot.lane.b32.xlu0 %v2361, 32
    %v2683 = vpop.permute.xlu0 %2682
    %2702 = vrot.lane.b32.xlu0 %v2455, 40
    %v2703 = vpop.permute.xlu0 %2702
    %2704 = vrot.lane.b32.xlu0 %v2456, 40
    %v2705 = vpop.permute.xlu0 %2704
    %2706 = vrot.lane.b32.xlu0 %v2457, 40
    %v2707 = vpop.permute.xlu0 %2706
    %2708 = vrot.lane.b32.xlu0 %v2458, 40
    %v2709 = vpop.permute.xlu0 %2708
    %2710 = vrot.lane.b32.xlu0 %v2459, 40
    %v2711 = vpop.permute.xlu0 %2710
    %2712 = vrot.lane.b32.xlu0 %v2460, 40
    %v2713 = vpop.permute.xlu0 %2712
    %2714 = vrot.lane.b32.xlu0 %v2461, 40
    %v2715 = vpop.permute.xlu0 %2714
    %2716 = vrot.lane.b32.xlu0 %v2481, 40
    %v2717 = vpop.permute.xlu0 %2716
    %2718 = vrot.lane.b32.xlu0 %v2462, 40
    %v2719 = vpop.permute.xlu0 %2718
    %2720 = vrot.lane.b32.xlu0 %v2463, 40
    %v2721 = vpop.permute.xlu0 %2720
    %2722 = vrot.lane.b32.xlu0 %v2464, 40
    %v2723 = vpop.permute.xlu0 %2722
    %2724 = vrot.lane.b32.xlu0 %v2465, 40
    %v2725 = vpop.permute.xlu0 %2724
    %2726 = vrot.lane.b32.xlu0 %v2466, 40
    %v2727 = vpop.permute.xlu0 %2726
    %2728 = vrot.lane.b32.xlu0 %v2467, 40
    %v2729 = vpop.permute.xlu0 %2728
    %2730 = vrot.lane.b32.xlu0 %v2468, 40
    %v2731 = vpop.permute.xlu0 %2730
    %2732 = vrot.lane.b32.xlu0 %v2482, 40
    %v2733 = vpop.permute.xlu0 %2732
    %2751 = vrot.lane.b32.xlu0 %v2410, 48
    %v2752 = vpop.permute.xlu0 %2751
    %2753 = vrot.lane.b32.xlu0 %v2411, 48
    %v2754 = vpop.permute.xlu0 %2753
    %2755 = vrot.lane.b32.xlu0 %v2412, 48
    %v2756 = vpop.permute.xlu0 %2755
    %2757 = vrot.lane.b32.xlu0 %v2413, 48
    %v2758 = vpop.permute.xlu0 %2757
    %2759 = vrot.lane.b32.xlu0 %v2414, 48
    %v2760 = vpop.permute.xlu0 %2759
    %2761 = vrot.lane.b32.xlu0 %v2415, 48
    %v2762 = vpop.permute.xlu0 %2761
    %2763 = vrot.lane.b32.xlu0 %v2475, 48
    %v2764 = vpop.permute.xlu0 %2763
    %2765 = vrot.lane.b32.xlu0 %v2408, 48
    %v2766 = vpop.permute.xlu0 %2765
    %2767 = vrot.lane.b32.xlu0 %v2417, 48
    %v2768 = vpop.permute.xlu0 %2767
    %2769 = vrot.lane.b32.xlu0 %v2418, 48
    %v2770 = vpop.permute.xlu0 %2769
    %2771 = vrot.lane.b32.xlu0 %v2419, 48
    %v2772 = vpop.permute.xlu0 %2771
    %2773 = vrot.lane.b32.xlu0 %v2420, 48
    %v2774 = vpop.permute.xlu0 %2773
    %2775 = vrot.lane.b32.xlu0 %v2421, 48
    %v2776 = vpop.permute.xlu0 %2775
    %2777 = vrot.lane.b32.xlu0 %v2422, 48
    %v2778 = vpop.permute.xlu0 %2777
    %2779 = vrot.lane.b32.xlu0 %v2476, 48
    %v2780 = vpop.permute.xlu0 %2779
    %2796 = vrot.lane.b32.xlu0 %v2347, 56
    %v2797 = vpop.permute.xlu0 %2796
    %2798 = vrot.lane.b32.xlu0 %v2348, 56
    %v2799 = vpop.permute.xlu0 %2798
    %2800 = vrot.lane.b32.xlu0 %v2349, 56
    %v2801 = vpop.permute.xlu0 %2800
    %2802 = vrot.lane.b32.xlu0 %v2350, 56
    %v2803 = vpop.permute.xlu0 %2802
    %2804 = vrot.lane.b32.xlu0 %v2351, 56
    %v2805 = vpop.permute.xlu0 %2804
    %2806 = vrot.lane.b32.xlu0 %v2352, 56
    %v2807 = vpop.permute.xlu0 %2806
    %2808 = vrot.lane.b32.xlu0 %v2353, 56
    %v2809 = vpop.permute.xlu0 %2808
    %2810 = vrot.lane.b32.xlu0 0.0, 56
    %v2811 = vpop.permute.xlu0 %2810
    %2812 = vrot.lane.b32.xlu0 %v2355, 56
    %v2813 = vpop.permute.xlu0 %2812
    %2814 = vrot.lane.b32.xlu0 %v2356, 56
    %v2815 = vpop.permute.xlu0 %2814
    %2816 = vrot.lane.b32.xlu0 %v2357, 56
    %v2817 = vpop.permute.xlu0 %2816
    %2818 = vrot.lane.b32.xlu0 %v2358, 56
    %v2819 = vpop.permute.xlu0 %2818
    %2820 = vrot.lane.b32.xlu0 %v2359, 56
    %v2821 = vpop.permute.xlu0 %2820
    %2822 = vrot.lane.b32.xlu0 %v2360, 56
    %v2823 = vpop.permute.xlu0 %2822
    %2824 = vrot.lane.b32.xlu0 %v2361, 56
    %v2825 = vpop.permute.xlu0 %2824
    %2841 = vrot.lane.b32.xlu0 %v2456, 64
    %v2842 = vpop.permute.xlu0 %2841
    %2843 = vrot.lane.b32.xlu0 %v2457, 64
    %v2844 = vpop.permute.xlu0 %2843
    %2845 = vrot.lane.b32.xlu0 %v2458, 64
    %v2846 = vpop.permute.xlu0 %2845
    %2847 = vrot.lane.b32.xlu0 %v2459, 64
    %v2848 = vpop.permute.xlu0 %2847
    %2849 = vrot.lane.b32.xlu0 %v2460, 64
    %v2850 = vpop.permute.xlu0 %2849
    %2851 = vrot.lane.b32.xlu0 %v2461, 64
    %v2852 = vpop.permute.xlu0 %2851
    %2853 = vrot.lane.b32.xlu0 %v2481, 64
    %v2854 = vpop.permute.xlu0 %2853
    %2855 = vrot.lane.b32.xlu0 %v2454, 64
    %v2856 = vpop.permute.xlu0 %2855
    %2857 = vrot.lane.b32.xlu0 %v2463, 64
    %v2858 = vpop.permute.xlu0 %2857
    %2859 = vrot.lane.b32.xlu0 %v2464, 64
    %v2860 = vpop.permute.xlu0 %2859
    %2861 = vrot.lane.b32.xlu0 %v2465, 64
    %v2862 = vpop.permute.xlu0 %2861
    %2863 = vrot.lane.b32.xlu0 %v2466, 64
    %v2864 = vpop.permute.xlu0 %2863
    %2865 = vrot.lane.b32.xlu0 %v2467, 64
    %v2866 = vpop.permute.xlu0 %2865
    %2867 = vrot.lane.b32.xlu0 %v2468, 64
    %v2868 = vpop.permute.xlu0 %2867
    %2869 = vrot.lane.b32.xlu0 %v2482, 64
    %v2870 = vpop.permute.xlu0 %2869
    %vm2886 = vcmask 64512
    %v2887 = vsel %vm2886, %v2408, %v2484
    %v2888 = vsel %vm2886, %v2409, %v2486
    %v2889 = vsel %vm2886, %v2410, %v2488
    %v2890 = vsel %vm2886, %v2411, %v2490
    %v2891 = vsel %vm2886, %v2412, %v2492
    %v2892 = vsel %vm2886, %v2413, %v2494
    %v2893 = vsel %vm2886, %v2414, %v2496
    %v2894 = vsel %vm2886, %v2415, %v2498
    %v2895 = vsel %vm2886, %v2416, %v2500
    %v2896 = vsel %vm2886, %v2417, %v2502
    %v2897 = vsel %vm2886, %v2418, %v2504
    %v2898 = vsel %vm2886, %v2419, %v2506
    %v2899 = vsel %vm2886, %v2420, %v2508
    %v2900 = vsel %vm2886, %v2421, %v2510
    %v2901 = vsel %vm2886, %v2422, %v2512
    %vm2902 = vcmask 130048
    %v2903 = vsel %vm2902, %v2887, %v2544
    %v2904 = vsel %vm2902, %v2888, %v2546
    %v2905 = vsel %vm2902, %v2889, %v2548
    %v2906 = vsel %vm2902, %v2890, %v2550
    %v2907 = vsel %vm2902, %v2891, %v2552
    %v2908 = vsel %vm2902, %v2892, %v2554
    %v2909 = vsel %vm2902, %v2893, %v2556
    %v2910 = vsel %vm2902, %v2894, %v2558
    %v2911 = vsel %vm2902, %v2895, %v2560
    %v2912 = vsel %vm2902, %v2896, %v2562
    %v2913 = vsel %vm2902, %v2897, %v2564
    %v2914 = vsel %vm2902, %v2898, %v2566
    %v2915 = vsel %vm2902, %v2899, %v2568
    %v2916 = vsel %vm2902, %v2900, %v2570
    %v2917 = vsel %vm2902, %v2901, %v2572
    %vm2918 = vcmask 195584
    %v2919 = vsel %vm2918, %v2903, %v2605
    %v2920 = vsel %vm2918, %v2904, %v2607
    %v2921 = vsel %vm2918, %v2905, %v2609
    %v2922 = vsel %vm2918, %v2906, %v2611
    %v2923 = vsel %vm2918, %v2907, %v2613
    %v2924 = vsel %vm2918, %v2908, %v2615
    %v2925 = vsel %vm2918, %v2909, %v2617
    %v2926 = vsel %vm2918, %v2910, %v2619
    %v2927 = vsel %vm2918, %v2903, %v2621
    %v2928 = vsel %vm2918, %v2911, %v2623
    %v2929 = vsel %vm2918, %v2912, %v2625
    %v2930 = vsel %vm2918, %v2913, %v2627
    %v2931 = vsel %vm2918, %v2914, %v2629
    %v2932 = vsel %vm2918, %v2915, %v2631
    %v2933 = vsel %vm2918, %v2916, %v2633
    %v2934 = vsel %vm2918, %v2917, %v2635
    %vm2935 = vcmask 261120
    %v2936 = vsel %vm2935, %v2919, %v2653
    %v2937 = vsel %vm2935, %v2920, %v2655
    %v2938 = vsel %vm2935, %v2921, %v2657
    %v2939 = vsel %vm2935, %v2922, %v2659
    %v2940 = vsel %vm2935, %v2923, %v2661
    %v2941 = vsel %vm2935, %v2924, %v2663
    %v2942 = vsel %vm2935, %v2925, %v2665
    %v2943 = vsel %vm2935, %v2926, %v2667
    %v2944 = vsel %vm2935, %v2927, %v2669
    %v2945 = vsel %vm2935, %v2928, %v2671
    %v2946 = vsel %vm2935, %v2929, %v2673
    %v2947 = vsel %vm2935, %v2930, %v2675
    %v2948 = vsel %vm2935, %v2931, %v2677
    %v2949 = vsel %vm2935, %v2932, %v2679
    %v2950 = vsel %vm2935, %v2933, %v2681
    %v2951 = vsel %vm2935, %v2934, %v2683
    %vm2952 = vcmask 326656
    %v2953 = vsel %vm2952, %v2936, %v2703
    %v2954 = vsel %vm2952, %v2937, %v2705
    %v2955 = vsel %vm2952, %v2938, %v2707
    %v2956 = vsel %vm2952, %v2939, %v2709
    %v2957 = vsel %vm2952, %v2940, %v2711
    %v2958 = vsel %vm2952, %v2941, %v2713
    %v2959 = vsel %vm2952, %v2942, %v2715
    %v2960 = vsel %vm2952, %v2943, %v2717
    %v2961 = vsel %vm2952, %v2944, %v2719
    %v2962 = vsel %vm2952, %v2945, %v2721
    %v2963 = vsel %vm2952, %v2946, %v2723
    %v2964 = vsel %vm2952, %v2947, %v2725
    %v2965 = vsel %vm2952, %v2948, %v2727
    %v2966 = vsel %vm2952, %v2949, %v2729
    %v2967 = vsel %vm2952, %v2950, %v2731
    %v2968 = vsel %vm2952, %v2951, %v2733
    %vm2969 = vcmask 392192
    %v2970 = vsel %vm2969, %v2953, %v2752
    %v2971 = vsel %vm2969, %v2954, %v2754
    %v2972 = vsel %vm2969, %v2955, %v2756
    %v2973 = vsel %vm2969, %v2956, %v2758
    %v2974 = vsel %vm2969, %v2957, %v2760
    %v2975 = vsel %vm2969, %v2958, %v2762
    %v2976 = vsel %vm2969, %v2959, %v2764
    %v2977 = vsel %vm2969, %v2960, %v2766
    %v2978 = vsel %vm2969, %v2961, %v2768
    %v2979 = vsel %vm2969, %v2962, %v2770
    %v2980 = vsel %vm2969, %v2963, %v2772
    %v2981 = vsel %vm2969, %v2964, %v2774
    %v2982 = vsel %vm2969, %v2965, %v2776
    %v2983 = vsel %vm2969, %v2966, %v2778
    %v2984 = vsel %vm2969, %v2967, %v2780
    %v2985 = vsel %vm2969, %v2968, %v2766
    %vm2986 = vcmask 457728
    %v2987 = vsel %vm2986, %v2970, %v2797
    %v2988 = vsel %vm2986, %v2971, %v2799
    %v2989 = vsel %vm2986, %v2972, %v2801
    %v2990 = vsel %vm2986, %v2973, %v2803
    %v2991 = vsel %vm2986, %v2974, %v2805
    %v2992 = vsel %vm2986, %v2975, %v2807
    %v2993 = vsel %vm2986, %v2976, %v2809
    %v2994 = vsel %vm2986, %v2977, %v2811
    %v2995 = vsel %vm2986, %v2978, %v2813
    %v2996 = vsel %vm2986, %v2979, %v2815
    %v2997 = vsel %vm2986, %v2980, %v2817
    %v2998 = vsel %vm2986, %v2981, %v2819
    %v2999 = vsel %vm2986, %v2982, %v2821
    %v3000 = vsel %vm2986, %v2983, %v2823
    %v3001 = vsel %vm2986, %v2984, %v2825
    %v3002 = vsel %vm2986, %v2985, %v2811
    %vm3003 = vcmask 523264
    %v3004 = vsel %vm3003, %v2987, %v2842
    %v3005 = vsel %vm3003, %v2988, %v2844
    %v3006 = vsel %vm3003, %v2989, %v2846
    %v3007 = vsel %vm3003, %v2990, %v2848
    %v3008 = vsel %vm3003, %v2991, %v2850
    %v3009 = vsel %vm3003, %v2992, %v2852
    %v3010 = vsel %vm3003, %v2993, %v2854
    %v3011 = vsel %vm3003, %v2994, %v2856
    %v3012 = vsel %vm3003, %v2995, %v2858
    %v3013 = vsel %vm3003, %v2996, %v2860
    %v3014 = vsel %vm3003, %v2997, %v2862
    %v3015 = vsel %vm3003, %v2998, %v2864
    %v3016 = vsel %vm3003, %v2999, %v2866
    %v3017 = vsel %vm3003, %v3000, %v2868
    %v3018 = vsel %vm3003, %v3001, %v2870
    %v3019 = vsel %vm3003, %v3002, %v2856
    %v3020 = vpack.c.bf16 %v3005, %v3004
    %v3021 = vpack.c.bf16 %v3007, %v3006
    %v3022 = vpack.c.bf16 %v3009, %v3008
    %v3023 = vpack.c.bf16 %v3011, %v3010
    %v3024 = vpack.c.bf16 %v3013, %v3012
    %v3025 = vpack.c.bf16 %v3015, %v3014
    %v3026 = vpack.c.bf16 %v3017, %v3016
    %v3027 = vpack.c.bf16 %v3019, %v3018
    %v3028 = vld [vmem:[%s4] sm:$0xf]
    %v3029 = vld [vmem:[%s4 + $0x4] sm:$0xf]
    %v3030 = vld [vmem:[%s4 + $0x8] sm:$0xf]
    %v3031 = vld [vmem:[%s4 + $0xc] sm:$0xf]
    %v3032 = vld [vmem:[%s4 + $0x10] sm:$0xf]
    %v3033 = vld [vmem:[%s4 + $0x14] sm:$0xf]
    %v3034 = vld [vmem:[%s4 + $0x18] sm:$0xf]
    %v3035 = vld [vmem:[%s4 + $0x1c] sm:$0xf]
    %v3036 = vld [vmem:[%s4 + $0x20] sm:$0xf]
    %v3046 = vunpack.c.l.b16 %v3028
    %v3047 = vunpack.c.l.b16 %v3029
    %v3048 = vunpack.c.l.b16 %v3030
    %v3049 = vunpack.c.l.b16 %v3031
    %v3050 = vunpack.c.l.b16 %v3032
    %v3051 = vunpack.c.l.b16 %v3033
    %v3052 = vunpack.c.l.b16 %v3034
    %v3053 = vunpack.c.l.b16 %v3035
    %v3054 = vunpack.c.l.b16 %v3036
    %v3055 = vpack.c.b16 %v3047, %v3046
    %v3056 = vpack.c.b16 %v3049, %v3048
    %v3057 = vpack.c.b16 %v3051, %v3050
    %v3058 = vpack.c.b16 %v3053, %v3052
    %v3059 = vpack.c.b16 %v3054, %v3054
    %vm3064 = vcmask 588800
    %v3066 = vsel %vm3064, %v3020, 0
    %v3069 = vsel %vm3064, %v3021, 0
    %v3072 = vsel %vm3064, %v3022, 0
    %v3075 = vsel %vm3064, %v3023, 0
    %v3078 = vsel %vm3064, %v3024, 0
    %v3081 = vsel %vm3064, %v3025, 0
    %v3084 = vsel %vm3064, %v3026, 0
    %v3087 = vsel %vm3064, %v3027, 0
    %vm3089 = vcmask 1043456
    %v3091 = vsel %vm3089, %v3059, 0
    %3093 = vmatprep.subr.bf16.mxu0 0
    %3094 = vmatpush1.bf16.msra.mxu0 %v3055
    %3095 = vmatprep.subr.bf16.mxu0 0
    %3096 = vmatpush1.bf16.msra.mxu0 %v3056
    %3097 = vmatprep.subr.bf16.mxu0 0
    %3098 = vmatpush1.bf16.msra.mxu0 %v3057
    %3099 = vmatprep.subr.bf16.mxu0 0
    %3100 = vmatpush1.bf16.msra.mxu0 %v3058
    %3101 = vmatprep.subr.bf16.mxu0 0
    %3102 = vmatpush1.bf16.msra.mxu0 %v3091
    %3103 = vmatprep.subr.bf16.mxu0 0
    %3104 = vmatpush1.bf16.msra.mxu0 0
    %3105 = vmatprep.subr.bf16.mxu0 0
    %3106 = vmatpush1.bf16.msra.mxu0 0
    %3107 = vmatprep.subr.bf16.mxu0 0
    %3108 = vmatpush1.bf16.msra.mxu0 0
    %3109 = vmatprep.subr.bf16.mxu0 0
    %3110 = vmatpush1.bf16.msra.mxu0 0
    %3111 = vmatprep.subr.bf16.mxu0 0
    %3112 = vmatpush1.bf16.msra.mxu0 0
    %3113 = vmatprep.subr.bf16.mxu0 0
    %3114 = vmatpush1.bf16.msra.mxu0 0
    %3115 = vmatprep.subr.bf16.mxu0 0
    %3116 = vmatpush1.bf16.msra.mxu0 0
    %3117 = vmatprep.subr.bf16.mxu0 0
    %3118 = vmatpush1.bf16.msra.mxu0 0
    %3119 = vmatprep.subr.bf16.mxu0 0
    %3120 = vmatpush1.bf16.msra.mxu0 0
    %3121 = vmatprep.subr.bf16.mxu0 0
    %3122 = vmatpush1.bf16.msra.mxu0 0
    %3123 = vmatprep.subr.bf16.mxu0 0
    %3124 = vmatpush1.bf16.msra.mxu0 0
    %3125 = vmatprep.mubr.bf16.mxu0 0
    %3126 = vmatmul.mubr.bf16.gmra.mrb[0].mxu0 %v3066
    %v3127 = vpop.f32.mrb[0].mxu0
    %v3128 = vadd.f32 0.0, %v3127
    %v3129 = vpop.f32.mrb[0].mxu0
    %v3130 = vpop.f32.mrb[0].mxu0
    %v3131 = vadd.f32 0.0, %v3130
    %v3132 = vpop.f32.mrb[0].mxu0
    %3133 = vmatprep.mubr.bf16.mxu0 0
    %3134 = vmatmul.mubr.bf16.gmra.mrb[0].mxu0 %v3069
    %v3135 = vpop.f32.mrb[0].mxu0
    %v3136 = vadd.f32 0.0, %v3135
    %v3137 = vpop.f32.mrb[0].mxu0
    %v3138 = vpop.f32.mrb[0].mxu0
    %v3139 = vadd.f32 0.0, %v3138
    %v3140 = vpop.f32.mrb[0].mxu0
    %3141 = vmatprep.mubr.bf16.mxu0 0
    %3142 = vmatmul.mubr.bf16.gmra.mrb[0].mxu0 %v3072
    %v3143 = vpop.f32.mrb[0].mxu0
    %v3144 = vadd.f32 0.0, %v3143
    %v3145 = vpop.f32.mrb[0].mxu0
    %v3146 = vpop.f32.mrb[0].mxu0
    %v3147 = vadd.f32 0.0, %v3146
    %v3148 = vpop.f32.mrb[0].mxu0
    %3149 = vmatprep.mubr.bf16.mxu0 0
    %3150 = vmatmul.mubr.bf16.gmra.mrb[0].mxu0 %v3075
    %v3151 = vpop.f32.mrb[0].mxu0
    %v3152 = vadd.f32 0.0, %v3151
    %v3153 = vpop.f32.mrb[0].mxu0
    %v3154 = vpop.f32.mrb[0].mxu0
    %v3155 = vadd.f32 0.0, %v3154
    %v3156 = vpop.f32.mrb[0].mxu0
    %3157 = vmatprep.mubr.bf16.mxu0 0
    %3158 = vmatmul.mubr.bf16.gmra.mrb[0].mxu0 %v3078
    %v3159 = vpop.f32.mrb[0].mxu0
    %v3160 = vadd.f32 0.0, %v3159
    %v3161 = vpop.f32.mrb[0].mxu0
    %v3162 = vpop.f32.mrb[0].mxu0
    %v3163 = vadd.f32 0.0, %v3162
    %v3164 = vpop.f32.mrb[0].mxu0
    %3165 = vmatprep.mubr.bf16.mxu0 0
    %3166 = vmatmul.mubr.bf16.gmra.mrb[0].mxu0 %v3081
    %v3167 = vpop.f32.mrb[0].mxu0
    %v3168 = vadd.f32 0.0, %v3167
    %v3169 = vpop.f32.mrb[0].mxu0
    %v3170 = vpop.f32.mrb[0].mxu0
    %v3171 = vadd.f32 0.0, %v3170
    %v3172 = vpop.f32.mrb[0].mxu0
    %3173 = vmatprep.mubr.bf16.mxu0 0
    %3174 = vmatmul.mubr.bf16.gmra.mrb[0].mxu0 %v3084
    %v3175 = vpop.f32.mrb[0].mxu0
    %v3176 = vadd.f32 0.0, %v3175
    %v3177 = vpop.f32.mrb[0].mxu0
    %v3178 = vpop.f32.mrb[0].mxu0
    %v3179 = vadd.f32 0.0, %v3178
    %v3180 = vpop.f32.mrb[0].mxu0
    %3181 = vmatprep.mubr.bf16.mxu0 0
    %3182 = vmatmul.mubr.bf16.gmra.mrb[0].mxu0 %v3087
    %v3183 = vpop.f32.mrb[0].mxu0
    %v3184 = vadd.f32 0.0, %v3183
    %v3185 = vpop.f32.mrb[0].mxu0
    %v3186 = vpop.f32.mrb[0].mxu0
    %v3187 = vadd.f32 0.0, %v3186
    %v3188 = vpop.f32.mrb[0].mxu0
    %3189 = vdwg.mxu0
    %v3190 = vld [vmem:[%s5] sm:$0x1]
    %v3192 = vlaneseq
    %v3193 = vshrl.u32 %v3192, 7
    %v3194 = vsub.s32 0, %v3193
    %v3195 = vrot.slane %v3190, %v3194
    %v3197 = vmul.f32 %v3128, %v3195
    %v3198 = vmul.f32 %v3131, %v3195
    %v3199 = vmul.f32 %v3136, %v3195
    %v3200 = vmul.f32 %v3139, %v3195
    %v3201 = vmul.f32 %v3144, %v3195
    %v3202 = vmul.f32 %v3147, %v3195
    %v3203 = vmul.f32 %v3152, %v3195
    %v3204 = vmul.f32 %v3155, %v3195
    %v3205 = vmul.f32 %v3160, %v3195
    %v3206 = vmul.f32 %v3163, %v3195
    %v3207 = vmul.f32 %v3168, %v3195
    %v3208 = vmul.f32 %v3171, %v3195
    %v3209 = vmul.f32 %v3176, %v3195
    %v3210 = vmul.f32 %v3179, %v3195
    %v3211 = vmul.f32 %v3184, %v3195
    %v3212 = vmul.f32 %v3187, %v3195
    %v3213 = vld [vmem:[%s6] sm:$0x1]
    %v3215 = vlaneseq
    %v3216 = vshrl.u32 %v3215, 7
    %v3217 = vsub.s32 0, %v3216
    %v3218 = vrot.slane %v3213, %v3217
    %v3220 = vadd.f32 %v3197, %v3218
    %v3221 = vadd.f32 %v3198, %v3218
    %v3222 = vadd.f32 %v3199, %v3218
    %v3223 = vadd.f32 %v3200, %v3218
    %v3224 = vadd.f32 %v3201, %v3218
    %v3225 = vadd.f32 %v3202, %v3218
    %v3226 = vadd.f32 %v3203, %v3218
    %v3227 = vadd.f32 %v3204, %v3218
    %v3228 = vadd.f32 %v3205, %v3218
    %v3229 = vadd.f32 %v3206, %v3218
    %v3230 = vadd.f32 %v3207, %v3218
    %v3231 = vadd.f32 %v3208, %v3218
    %v3232 = vadd.f32 %v3209, %v3218
    %v3233 = vadd.f32 %v3210, %v3218
    %v3234 = vadd.f32 %v3211, %v3218
    %v3235 = vadd.f32 %v3212, %v3218
    %v3236 = vmax.f32 %v3220, 0.0
    %v3237 = vmax.f32 %v3221, 0.0
    %v3238 = vmax.f32 %v3222, 0.0
    %v3239 = vmax.f32 %v3223, 0.0
    %v3240 = vmax.f32 %v3224, 0.0
    %v3241 = vmax.f32 %v3225, 0.0
    %v3242 = vmax.f32 %v3226, 0.0
    %v3243 = vmax.f32 %v3227, 0.0
    %v3244 = vmax.f32 %v3228, 0.0
    %v3245 = vmax.f32 %v3229, 0.0
    %v3246 = vmax.f32 %v3230, 0.0
    %v3247 = vmax.f32 %v3231, 0.0
    %v3248 = vmax.f32 %v3232, 0.0
    %v3249 = vmax.f32 %v3233, 0.0
    %v3250 = vmax.f32 %v3234, 0.0
    %v3251 = vmax.f32 %v3235, 0.0
    %v3252 = vpack.c.bf16 %v3237, %v3236
    %v3253 = vpack.c.bf16 %v3239, %v3238
    %v3254 = vpack.c.bf16 %v3241, %v3240
    %v3255 = vpack.c.bf16 %v3243, %v3242
    %v3256 = vpack.c.bf16 %v3245, %v3244
    %v3257 = vpack.c.bf16 %v3247, %v3246
    %v3258 = vpack.c.bf16 %v3249, %v3248
    %v3259 = vpack.c.bf16 %v3251, %v3250
    %v3260 = vld [vmem:[%s7] sm:$0xf]
    %v3262 = vsel %vm2886, %v3252, 0
    %v3265 = vsel %vm2886, %v3253, 0
    %v3268 = vsel %vm2886, %v3254, 0
    %v3271 = vsel %vm2886, %v3255, 0
    %v3274 = vsel %vm2886, %v3256, 0
    %v3277 = vsel %vm2886, %v3257, 0
    %v3280 = vsel %vm2886, %v3258, 0
    %v3283 = vsel %vm2886, %v3259, 0
    %v3286 = vsel %vm3089, %v3260, 0
    %3288 = vmatprep.subr.bf16.mxu0 0
    %3289 = vmatpush1.bf16.msra.mxu0 %v3286
    %3290 = vmatprep.subr.bf16.mxu0 0
    %3291 = vmatpush1.bf16.msra.mxu0 0
    %3292 = vmatprep.subr.bf16.mxu0 0
    %3293 = vmatpush1.bf16.msra.mxu0 0
    %3294 = vmatprep.subr.bf16.mxu0 0
    %3295 = vmatpush1.bf16.msra.mxu0 0
    %3296 = vmatprep.subr.bf16.mxu0 0
    %3297 = vmatpush1.bf16.msra.mxu0 0
    %3298 = vmatprep.subr.bf16.mxu0 0
    %3299 = vmatpush1.bf16.msra.mxu0 0
    %3300 = vmatprep.subr.bf16.mxu0 0
    %3301 = vmatpush1.bf16.msra.mxu0 0
    %3302 = vmatprep.subr.bf16.mxu0 0
    %3303 = vmatpush1.bf16.msra.mxu0 0
    %3304 = vmatprep.subr.bf16.mxu0 0
    %3305 = vmatpush1.bf16.msra.mxu0 0
    %3306 = vmatprep.subr.bf16.mxu0 0
    %3307 = vmatpush1.bf16.msra.mxu0 0
    %3308 = vmatprep.subr.bf16.mxu0 0
    %3309 = vmatpush1.bf16.msra.mxu0 0
    %3310 = vmatprep.subr.bf16.mxu0 0
    %3311 = vmatpush1.bf16.msra.mxu0 0
    %3312 = vmatprep.subr.bf16.mxu0 0
    %3313 = vmatpush1.bf16.msra.mxu0 0
    %3314 = vmatprep.subr.bf16.mxu0 0
    %3315 = vmatpush1.bf16.msra.mxu0 0
    %3316 = vmatprep.subr.bf16.mxu0 0
    %3317 = vmatpush1.bf16.msra.mxu0 0
    %3318 = vmatprep.subr.bf16.mxu0 0
    %3319 = vmatpush1.bf16.msra.mxu0 0
    %3320 = vmatprep.mubr.bf16.mxu0 0
    %3321 = vmatmul.mubr.bf16.gmra.mrb[0].mxu0 %v3262
    %v3322 = vpop.f32.mrb[0].mxu0
    %v3323 = vadd.f32 0.0, %v3322
    %v3324 = vpop.f32.mrb[0].mxu0
    %v3325 = vpop.f32.mrb[0].mxu0
    %v3326 = vadd.f32 0.0, %v3325
    %v3327 = vpop.f32.mrb[0].mxu0
    %3328 = vmatprep.mubr.bf16.mxu0 0
    %3329 = vmatmul.mubr.bf16.gmra.mrb[0].mxu0 %v3265
    %v3330 = vpop.f32.mrb[0].mxu0
    %v3331 = vadd.f32 0.0, %v3330
    %v3332 = vpop.f32.mrb[0].mxu0
    %v3333 = vpop.f32.mrb[0].mxu0
    %v3334 = vadd.f32 0.0, %v3333
    %v3335 = vpop.f32.mrb[0].mxu0
    %3336 = vmatprep.mubr.bf16.mxu0 0
    %3337 = vmatmul.mubr.bf16.gmra.mrb[0].mxu0 %v3268
    %v3338 = vpop.f32.mrb[0].mxu0
    %v3339 = vadd.f32 0.0, %v3338
    %v3340 = vpop.f32.mrb[0].mxu0
    %v3341 = vpop.f32.mrb[0].mxu0
    %v3342 = vadd.f32 0.0, %v3341
    %v3343 = vpop.f32.mrb[0].mxu0
    %3344 = vmatprep.mubr.bf16.mxu0 0
    %3345 = vmatmul.mubr.bf16.gmra.mrb[0].mxu0 %v3271
    %v3346 = vpop.f32.mrb[0].mxu0
    %v3347 = vadd.f32 0.0, %v3346
    %v3348 = vpop.f32.mrb[0].mxu0
    %v3349 = vpop.f32.mrb[0].mxu0
    %v3350 = vadd.f32 0.0, %v3349
    %v3351 = vpop.f32.mrb[0].mxu0
    %3352 = vmatprep.mubr.bf16.mxu0 0
    %3353 = vmatmul.mubr.bf16.gmra.mrb[0].mxu0 %v3274
    %v3354 = vpop.f32.mrb[0].mxu0
    %v3355 = vadd.f32 0.0, %v3354
    %v3356 = vpop.f32.mrb[0].mxu0
    %v3357 = vpop.f32.mrb[0].mxu0
    %v3358 = vadd.f32 0.0, %v3357
    %v3359 = vpop.f32.mrb[0].mxu0
    %3360 = vmatprep.mubr.bf16.mxu0 0
    %3361 = vmatmul.mubr.bf16.gmra.mrb[0].mxu0 %v3277
    %v3362 = vpop.f32.mrb[0].mxu0
    %v3363 = vadd.f32 0.0, %v3362
    %v3364 = vpop.f32.mrb[0].mxu0
    %v3365 = vpop.f32.mrb[0].mxu0
    %v3366 = vadd.f32 0.0, %v3365
    %v3367 = vpop.f32.mrb[0].mxu0
    %3368 = vmatprep.mubr.bf16.mxu0 0
    %3369 = vmatmul.mubr.bf16.gmra.mrb[0].mxu0 %v3280
    %v3370 = vpop.f32.mrb[0].mxu0
    %v3371 = vadd.f32 0.0, %v3370
    %v3372 = vpop.f32.mrb[0].mxu0
    %v3373 = vpop.f32.mrb[0].mxu0
    %v3374 = vadd.f32 0.0, %v3373
    %v3375 = vpop.f32.mrb[0].mxu0
    %3376 = vmatprep.mubr.bf16.mxu0 0
    %3377 = vmatmul.mubr.bf16.gmra.mrb[0].mxu0 %v3283
    %v3378 = vpop.f32.mrb[0].mxu0
    %v3379 = vadd.f32 0.0, %v3378
    %v3380 = vpop.f32.mrb[0].mxu0
    %v3381 = vpop.f32.mrb[0].mxu0
    %v3382 = vadd.f32 0.0, %v3381
    %v3383 = vpop.f32.mrb[0].mxu0
    %3384 = vdwg.mxu0
    %v3385 = vld [vmem:[%s8] sm:$0x1]
    %v3387 = vlaneseq
    %v3388 = vshrl.u32 %v3387, 7
    %v3389 = vsub.s32 0, %v3388
    %v3390 = vrot.slane %v3385, %v3389
    %v3392 = vmul.f32 %v3323, %v3390
    %v3393 = vmul.f32 %v3326, %v3390
    %v3394 = vmul.f32 %v3331, %v3390
    %v3395 = vmul.f32 %v3334, %v3390
    %v3396 = vmul.f32 %v3339, %v3390
    %v3397 = vmul.f32 %v3342, %v3390
    %v3398 = vmul.f32 %v3347, %v3390
    %v3399 = vmul.f32 %v3350, %v3390
    %v3400 = vmul.f32 %v3355, %v3390
    %v3401 = vmul.f32 %v3358, %v3390
    %v3402 = vmul.f32 %v3363, %v3390
    %v3403 = vmul.f32 %v3366, %v3390
    %v3404 = vmul.f32 %v3371, %v3390
    %v3405 = vmul.f32 %v3374, %v3390
    %v3406 = vmul.f32 %v3379, %v3390
    %v3407 = vmul.f32 %v3382, %v3390
    %v3408 = vld [vmem:[%s9] sm:$0x1]
    %v3410 = vlaneseq
    %v3411 = vshrl.u32 %v3410, 7
    %v3412 = vsub.s32 0, %v3411
    %v3413 = vrot.slane %v3408, %v3412
    %v3415 = vadd.f32 %v3392, %v3413
    %v3416 = vadd.f32 %v3393, %v3413
    %v3417 = vadd.f32 %v3394, %v3413
    %v3418 = vadd.f32 %v3395, %v3413
    %v3419 = vadd.f32 %v3396, %v3413
    %v3420 = vadd.f32 %v3397, %v3413
    %v3421 = vadd.f32 %v3398, %v3413
    %v3422 = vadd.f32 %v3399, %v3413
    %v3423 = vadd.f32 %v3400, %v3413
    %v3424 = vadd.f32 %v3401, %v3413
    %v3425 = vadd.f32 %v3402, %v3413
    %v3426 = vadd.f32 %v3403, %v3413
    %v3427 = vadd.f32 %v3404, %v3413
    %v3428 = vadd.f32 %v3405, %v3413
    %v3429 = vadd.f32 %v3406, %v3413
    %v3430 = vadd.f32 %v3407, %v3413
    %v3431 = vld [vmem:[%s10] sm:$0x3]
    %v3433 = vsel %vm2199, %v3431, 0
    %3435 = vmatprep.subr.bf16.mxu0 0
    %3436 = vmatpush1.bf16.msra.mxu0 %v3433
    %3437 = vmatprep.subr.bf16.mxu0 0
    %3438 = vmatpush1.bf16.msra.mxu0 0
    %3439 = vmatprep.subr.bf16.mxu0 0
    %3440 = vmatpush1.bf16.msra.mxu0 0
    %3441 = vmatprep.subr.bf16.mxu0 0
    %3442 = vmatpush1.bf16.msra.mxu0 0
    %3443 = vmatprep.subr.bf16.mxu0 0
    %3444 = vmatpush1.bf16.msra.mxu0 0
    %3445 = vmatprep.subr.bf16.mxu0 0
    %3446 = vmatpush1.bf16.msra.mxu0 0
    %3447 = vmatprep.subr.bf16.mxu0 0
    %3448 = vmatpush1.bf16.msra.mxu0 0
    %3449 = vmatprep.subr.bf16.mxu0 0
    %3450 = vmatpush1.bf16.msra.mxu0 0
    %3451 = vmatprep.subr.bf16.mxu0 0
    %3452 = vmatpush1.bf16.msra.mxu0 0
    %3453 = vmatprep.subr.bf16.mxu0 0
    %3454 = vmatpush1.bf16.msra.mxu0 0
    %3455 = vmatprep.subr.bf16.mxu0 0
    %3456 = vmatpush1.bf16.msra.mxu0 0
    %3457 = vmatprep.subr.bf16.mxu0 0
    %3458 = vmatpush1.bf16.msra.mxu0 0
    %3459 = vmatprep.subr.bf16.mxu0 0
    %3460 = vmatpush1.bf16.msra.mxu0 0
    %3461 = vmatprep.subr.bf16.mxu0 0
    %3462 = vmatpush1.bf16.msra.mxu0 0
    %3463 = vmatprep.subr.bf16.mxu0 0
    %3464 = vmatpush1.bf16.msra.mxu0 0
    %3465 = vmatprep.subr.bf16.mxu0 0
    %3466 = vmatpush1.bf16.msra.mxu0 0
    %3467 = vmatprep.mubr.bf16.mxu0 0
    %3468 = vmatmul.mubr.bf16.gmra.mrb[0].mxu0 %v2176
    %v3469 = vpop.f32.mrb[0].mxu0
    %v3470 = vadd.f32 0.0, %v3469
    %v3471 = vpop.f32.mrb[0].mxu0
    %v3472 = vpop.f32.mrb[0].mxu0
    %v3473 = vadd.f32 0.0, %v3472
    %v3474 = vpop.f32.mrb[0].mxu0
    %3475 = vmatprep.mubr.bf16.mxu0 0
    %3476 = vmatmul.mubr.bf16.gmra.mrb[0].mxu0 %v2179
    %v3477 = vpop.f32.mrb[0].mxu0
    %v3478 = vadd.f32 0.0, %v3477
    %v3479 = vpop.f32.mrb[0].mxu0
    %v3480 = vpop.f32.mrb[0].mxu0
    %v3481 = vadd.f32 0.0, %v3480
    %v3482 = vpop.f32.mrb[0].mxu0
    %3483 = vmatprep.mubr.bf16.mxu0 0
    %3484 = vmatmul.mubr.bf16.gmra.mrb[0].mxu0 %v2182
    %v3485 = vpop.f32.mrb[0].mxu0
    %v3486 = vadd.f32 0.0, %v3485
    %v3487 = vpop.f32.mrb[0].mxu0
    %v3488 = vpop.f32.mrb[0].mxu0
    %v3489 = vadd.f32 0.0, %v3488
    %v3490 = vpop.f32.mrb[0].mxu0
    %3491 = vmatprep.mubr.bf16.mxu0 0
    %3492 = vmatmul.mubr.bf16.gmra.mrb[0].mxu0 %v2185
    %v3493 = vpop.f32.mrb[0].mxu0
    %v3494 = vadd.f32 0.0, %v3493
    %v3495 = vpop.f32.mrb[0].mxu0
    %v3496 = vpop.f32.mrb[0].mxu0
    %v3497 = vadd.f32 0.0, %v3496
    %v3498 = vpop.f32.mrb[0].mxu0
    %3499 = vmatprep.mubr.bf16.mxu0 0
    %3500 = vmatmul.mubr.bf16.gmra.mrb[0].mxu0 %v2188
    %v3501 = vpop.f32.mrb[0].mxu0
    %v3502 = vadd.f32 0.0, %v3501
    %v3503 = vpop.f32.mrb[0].mxu0
    %v3504 = vpop.f32.mrb[0].mxu0
    %v3505 = vadd.f32 0.0, %v3504
    %v3506 = vpop.f32.mrb[0].mxu0
    %3507 = vmatprep.mubr.bf16.mxu0 0
    %3508 = vmatmul.mubr.bf16.gmra.mrb[0].mxu0 %v2191
    %v3509 = vpop.f32.mrb[0].mxu0
    %v3510 = vadd.f32 0.0, %v3509
    %v3511 = vpop.f32.mrb[0].mxu0
    %v3512 = vpop.f32.mrb[0].mxu0
    %v3513 = vadd.f32 0.0, %v3512
    %v3514 = vpop.f32.mrb[0].mxu0
    %3515 = vmatprep.mubr.bf16.mxu0 0
    %3516 = vmatmul.mubr.bf16.gmra.mrb[0].mxu0 %v2194
    %v3517 = vpop.f32.mrb[0].mxu0
    %v3518 = vadd.f32 0.0, %v3517
    %v3519 = vpop.f32.mrb[0].mxu0
    %v3520 = vpop.f32.mrb[0].mxu0
    %v3521 = vadd.f32 0.0, %v3520
    %v3522 = vpop.f32.mrb[0].mxu0
    %3523 = vmatprep.mubr.bf16.mxu0 0
    %3524 = vmatmul.mubr.bf16.gmra.mrb[0].mxu0 %v2197
    %v3525 = vpop.f32.mrb[0].mxu0
    %v3526 = vadd.f32 0.0, %v3525
    %v3527 = vpop.f32.mrb[0].mxu0
    %v3528 = vpop.f32.mrb[0].mxu0
    %v3529 = vadd.f32 0.0, %v3528
    %v3530 = vpop.f32.mrb[0].mxu0
    %3531 = vdwg.mxu0
    %v3532 = vld [vmem:[%s11] sm:$0x1]
    %v3534 = vlaneseq
    %v3535 = vshrl.u32 %v3534, 7
    %v3536 = vsub.s32 0, %v3535
    %v3537 = vrot.slane %v3532, %v3536
    %v3539 = vmul.f32 %v3470, %v3537
    %v3540 = vmul.f32 %v3473, %v3537
    %v3541 = vmul.f32 %v3478, %v3537
    %v3542 = vmul.f32 %v3481, %v3537
    %v3543 = vmul.f32 %v3486, %v3537
    %v3544 = vmul.f32 %v3489, %v3537
    %v3545 = vmul.f32 %v3494, %v3537
    %v3546 = vmul.f32 %v3497, %v3537
    %v3547 = vmul.f32 %v3502, %v3537
    %v3548 = vmul.f32 %v3505, %v3537
    %v3549 = vmul.f32 %v3510, %v3537
    %v3550 = vmul.f32 %v3513, %v3537
    %v3551 = vmul.f32 %v3518, %v3537
    %v3552 = vmul.f32 %v3521, %v3537
    %v3553 = vmul.f32 %v3526, %v3537
    %v3554 = vmul.f32 %v3529, %v3537
    %v3555 = vld [vmem:[%s12] sm:$0x1]
    %v3557 = vlaneseq
    %v3558 = vshrl.u32 %v3557, 7
    %v3559 = vsub.s32 0, %v3558
    %v3560 = vrot.slane %v3555, %v3559
    %v3562 = vadd.f32 %v3539, %v3560
    %v3563 = vadd.f32 %v3540, %v3560
    %v3564 = vadd.f32 %v3541, %v3560
    %v3565 = vadd.f32 %v3542, %v3560
    %v3566 = vadd.f32 %v3543, %v3560
    %v3567 = vadd.f32 %v3544, %v3560
    %v3568 = vadd.f32 %v3545, %v3560
    %v3569 = vadd.f32 %v3546, %v3560
    %v3570 = vadd.f32 %v3547, %v3560
    %v3571 = vadd.f32 %v3548, %v3560
    %v3572 = vadd.f32 %v3549, %v3560
    %v3573 = vadd.f32 %v3550, %v3560
    %v3574 = vadd.f32 %v3551, %v3560
    %v3575 = vadd.f32 %v3552, %v3560
    %v3576 = vadd.f32 %v3553, %v3560
    %v3577 = vadd.f32 %v3554, %v3560
    %v3578 = vadd.f32 %v3415, %v3562
    %v3579 = vadd.f32 %v3416, %v3563
    %v3580 = vadd.f32 %v3417, %v3564
    %v3581 = vadd.f32 %v3418, %v3565
    %v3582 = vadd.f32 %v3419, %v3566
    %v3583 = vadd.f32 %v3420, %v3567
    %v3584 = vadd.f32 %v3421, %v3568
    %v3585 = vadd.f32 %v3422, %v3569
    %v3586 = vadd.f32 %v3423, %v3570
    %v3587 = vadd.f32 %v3424, %v3571
    %v3588 = vadd.f32 %v3425, %v3572
    %v3589 = vadd.f32 %v3426, %v3573
    %v3590 = vadd.f32 %v3427, %v3574
    %v3591 = vadd.f32 %v3428, %v3575
    %v3592 = vadd.f32 %v3429, %v3576
    %v3593 = vadd.f32 %v3430, %v3577
    %v3594 = vmax.f32 %v3578, 0.0
    %v3595 = vmax.f32 %v3579, 0.0
    %v3596 = vmax.f32 %v3580, 0.0
    %v3597 = vmax.f32 %v3581, 0.0
    %v3598 = vmax.f32 %v3582, 0.0
    %v3599 = vmax.f32 %v3583, 0.0
    %v3600 = vmax.f32 %v3584, 0.0
    %v3601 = vmax.f32 %v3585, 0.0
    %v3602 = vmax.f32 %v3586, 0.0
    %v3603 = vmax.f32 %v3587, 0.0
    %v3604 = vmax.f32 %v3588, 0.0
    %v3605 = vmax.f32 %v3589, 0.0
    %v3606 = vmax.f32 %v3590, 0.0
    %v3607 = vmax.f32 %v3591, 0.0
    %v3608 = vmax.f32 %v3592, 0.0
    %v3609 = vmax.f32 %v3593, 0.0
    %3610 = vst.msk [vmem:[#allocation2] sm:$0xff] %vm2902, %v3594
    %3611 = vst.msk [vmem:[#allocation2 + $0x8] sm:$0xff] %vm2902, %v3595
    %3612 = vst.msk [vmem:[#allocation2 + $0x10] sm:$0xff] %vm2902, %v3596
    %3613 = vst.msk [vmem:[#allocation2 + $0x18] sm:$0xff] %vm2902, %v3597
    %3614 = vst.msk [vmem:[#allocation2 + $0x20] sm:$0xff] %vm2902, %v3598
    %3615 = vst.msk [vmem:[#allocation2 + $0x28] sm:$0xff] %vm2902, %v3599
    %3616 = vst.msk [vmem:[#allocation2 + $0x30] sm:$0xff] %vm2902, %v3600
    %3617 = vst.msk [vmem:[#allocation2 + $0x38] sm:$0xff] %vm2902, %v3601
    %3618 = vst.msk [vmem:[#allocation2 + $0x40] sm:$0xff] %vm2902, %v3602
    %3619 = vst.msk [vmem:[#allocation2 + $0x48] sm:$0xff] %vm2902, %v3603
    %3620 = vst.msk [vmem:[#allocation2 + $0x50] sm:$0xff] %vm2902, %v3604
    %3621 = vst.msk [vmem:[#allocation2 + $0x58] sm:$0xff] %vm2902, %v3605
    %3622 = vst.msk [vmem:[#allocation2 + $0x60] sm:$0xff] %vm2902, %v3606
    %3623 = vst.msk [vmem:[#allocation2 + $0x68] sm:$0xff] %vm2902, %v3607
    %3624 = vst.msk [vmem:[#allocation2 + $0x70] sm:$0xff] %vm2902, %v3608
    %3625 = vst.msk [vmem:[#allocation2 + $0x78] sm:$0xff] %vm2902, %v3609
    // Predicated region
    $region54: #{tpu_custom_call.1} parent=1 // pred_check
      _
    $region55: #{tpu_custom_call.1} parent=1 // pred_check_branch
      %3627 = sbr.rel (0) target = $region57
    $region56: #{tpu_custom_call.1} parent=1 // pred_region
      %s3629 = ssub.s32 2048, 2048
      %3630 = vsyncadd [#allocation3], %s3629
      %s3631 = sshll.u32 [#allocation2], 4
      %s3632 = int_to_ptr.vmem [resolvable:$true] %s3631
      %3637 = dma.vmem_to_hbm [thread:$0]  %s3632, 2048, %s13, [#allocation3], 128, 128, 8
    $region57: #{tpu_custom_call.1} parent=1 // pred_fallthru
      _
    // Predicated region
    $region58: #{tpu_custom_call.1} parent=1 // pred_check
      _
    $region59: #{tpu_custom_call.1} parent=1 // pred_check_branch
      %3639 = sbr.rel (0) target = $region61
    $region60: #{tpu_custom_call.1} parent=1 // pred_region
      %3640 = dma.done [#allocation3], 2048
    $region61: #{tpu_custom_call.1} parent=1 // pred_fallthru
      _
    %3641 = vsyncpa [#allocation3], 1

</llo_original>
